<compile_context>
chip_gen: v7x
topology: tpu7x:2x2x1
jax: 0.10.0
libtpu: 0.0.40
codegen_flags: <defaults>
</compile_context>

<pallas_src>
import functools

import jax
import jax.numpy as jnp
from jax.experimental import pallas as pl


OUT_PAD = 128  # per-group lane-dense packed slab: [base(D_enc) | rec(D_enc) | kld(1) | 0]


# ----------------------------------------------------------------------------------
# Single fused kernel: no grid, everything resident in VMEM, groups unrolled.
# ----------------------------------------------------------------------------------
def _fused_kernel(x_ref, eps_ref, wb_ref, bb_ref, enc_w0_ref, dec_w0_ref,
                  mlp_w_ref, mlp_b_ref, eo_wh_ref, eo_wl_ref, eo_b_ref,
                  do_wh_ref, do_wz_ref, do_b_ref, out_ref,
                  *, groups, layers, d_enc, d_lat, out_pad):
    f32 = jnp.float32
    bf16 = jnp.bfloat16
    B = x_ref.shape[0]

    # Shared base projection: x is identical across groups, so stream K=Din through the
    # MXU once against the group-concatenated weight (Din, G*D_enc); slice per group.
    l_all = jnp.dot(x_ref[...], wb_ref[...], preferred_element_type=f32) + bb_ref[...]

    def mlp(h, g, branch, w0_ref):
        # Linear + ReLU stack, statically unrolled. bf16 MXU operands / f32 accumulate;
        # bias add + ReLU stay f32 (no bf16 VPU needed on v5e).
        for j in range(layers):
            w = w0_ref[g] if j == 0 else \
                mlp_w_ref[(g * 2 + branch) * (layers - 1) + (j - 1)]
            b = mlp_b_ref[(g * 2 + branch) * layers + j]
            h = jnp.maximum(
                jnp.dot(h.astype(bf16), w, preferred_element_type=f32) + b, 0.0)
        return h

    pad = jnp.zeros((B, out_pad - 2 * d_enc - 1), f32)
    pieces = []
    for g in range(groups):            # static unroll: groups' chains interleave in LLO
        l = l_all[:, g * d_enc:(g + 1) * d_enc]

        # encoder MLP
        h = mlp(l, g, 0, enc_w0_ref)
        h16, l16 = h.astype(bf16), l.astype(bf16)

        # enc_out Linear(concat(h, l)) split into (a) h/l row-blocks (no concat) and
        # (b) mu / log_sigma column halves (no lane-slice of a 2*d_lat result).
        mu = (jnp.dot(h16, eo_wh_ref[2 * g + 0], preferred_element_type=f32)
              + jnp.dot(l16, eo_wl_ref[2 * g + 0], preferred_element_type=f32)
              + eo_b_ref[2 * g + 0])
        ls_raw = (jnp.dot(h16, eo_wh_ref[2 * g + 1], preferred_element_type=f32)
                  + jnp.dot(l16, eo_wl_ref[2 * g + 1], preferred_element_type=f32)
                  + eo_b_ref[2 * g + 1])

        # reparameterize + KLD (single EUP exp, reused)
        log_sigma = 5.0 * jnp.tanh(ls_raw)
        sigma = jnp.exp(log_sigma)
        z = mu + sigma * eps_ref[g]
        kld = 0.5 * jnp.sum(mu * mu + sigma * sigma - 2.0 * log_sigma - 1.0,
                            axis=-1, keepdims=True)            # (B, 1)

        # decoder MLP + dec_out Linear(concat(h, z)) as split-weight matmuls
        hd = mlp(z, g, 1, dec_w0_ref)
        rec = (jnp.dot(hd.astype(bf16), do_wh_ref[g], preferred_element_type=f32)
               + jnp.dot(z.astype(bf16), do_wz_ref[g], preferred_element_type=f32)
               + do_b_ref[g])

        pieces += [l, rec, kld, pad]

    # One full-width lane-dense store (no zero-fill + masked sub-store chain).
    out_ref[...] = jnp.concatenate(pieces, axis=-1)


# ----------------------------------------------------------------------------------
# Host-side packing of the logical per-group parameters into a few coalesced tensors.
# ----------------------------------------------------------------------------------
def pack_params(params, weight_dtype=jnp.bfloat16):
    G, _, d_enc = params["base_w"].shape
    two_lat = params["enc_out_b"].shape[-1]
    lat = two_lat // 2
    layers = len(params["enc_mlp_w"])
    interm = params["enc_mlp_w"][-1].shape[-1]

    p = {}
    # shared base matmul: group-concatenated columns
    p["w_base"] = jnp.concatenate([params["base_w"][g] for g in range(G)],
                                  axis=1).astype(weight_dtype)         # (Din, G*d_enc)
    p["b_base"] = jnp.concatenate([params["base_b"][g] for g in range(G)], axis=1)

    p["enc_w0"] = params["enc_mlp_w"][0].astype(weight_dtype)          # (G, d_enc, interm)
    p["dec_w0"] = params["dec_mlp_w"][0].astype(weight_dtype)          # (G, lat,   interm)

    # remaining MLP weights, enc (branch 0) / dec (branch 1), flattened leading index:
    # idx = (g*2 + branch)*(layers-1) + (j-1)
    mats, biases = [], []
    for g in range(G):
        for branch, wlist, blist in ((0, params["enc_mlp_w"], params["enc_mlp_b"]),
                                     (1, params["dec_mlp_w"], params["dec_mlp_b"])):
            for j in range(1, layers):
                mats.append(wlist[j][g])
            for j in range(layers):
                biases.append(blist[j][g])
    p["mlp_w"] = (jnp.stack(mats, axis=0).astype(weight_dtype) if layers > 1
                  else jnp.zeros((1, interm, interm), weight_dtype))
    p["mlp_b"] = jnp.stack(biases, axis=0)                             # (2G*layers, 1, interm)

    # enc_out split into mu / log_sigma column halves; idx = 2*g + half
    wh, wl, bb = [], [], []
    for g in range(G):
        for s in (slice(0, lat), slice(lat, two_lat)):
            wh.append(params["enc_out_we"][g][:, s])
            wl.append(params["enc_out_wl"][g][:, s])
            bb.append(params["enc_out_b"][g][:, s])
    p["enc_out_wh"] = jnp.stack(wh, axis=0).astype(weight_dtype)       # (2G, interm, lat)
    p["enc_out_wl"] = jnp.stack(wl, axis=0).astype(weight_dtype)       # (2G, d_enc,  lat)
    p["enc_out_b"] = jnp.stack(bb, axis=0)                             # (2G, 1, lat)

    p["dec_out_wh"] = params["dec_out_we"].astype(weight_dtype)        # (G, interm, d_enc)
    p["dec_out_wz"] = params["dec_out_wz"].astype(weight_dtype)        # (G, lat,    d_enc)
    p["dec_out_b"] = params["dec_out_b"]                               # (G, 1, d_enc)
    return p


# ----------------------------------------------------------------------------------
# Wrapper: one pallas_call for the whole forward.
# ----------------------------------------------------------------------------------
def two_stage_vae_forward(params, x, eps):
    """x: (B, C, H, W); eps: (G, B, latent_dim) gaussian noise.
    Returns (base_latents list, rec_latents list, kld_loss (B,))."""
    B = x.shape[0]
    G, Din, D_enc = params["base_w"].shape
    L = params["dec_out_wz"].shape[1]
    layers = len(params["enc_mlp_w"])
    assert 2 * D_enc + 1 <= OUT_PAD, "packing scheme requires encoding_depth < 64"
    assert eps.shape == (G, B, L)

    x_flat = x.reshape(B, -1).astype(jnp.bfloat16)     # NCHW -> (B, C*H*W), bf16 MXU feed
    pk = pack_params(params)

    kernel = functools.partial(_fused_kernel, groups=G, layers=layers,
                               d_enc=D_enc, d_lat=L, out_pad=OUT_PAD)

    packed = pl.pallas_call(
        kernel,
        out_shape=jax.ShapeDtypeStruct((B, G * OUT_PAD), jnp.float32),
    )(x_flat, eps.astype(jnp.float32),
      pk["w_base"], pk["b_base"], pk["enc_w0"], pk["dec_w0"],
      pk["mlp_w"], pk["mlp_b"],
      pk["enc_out_wh"], pk["enc_out_wl"], pk["enc_out_b"],
      pk["dec_out_wh"], pk["dec_out_wz"], pk["dec_out_b"])

    base_latents = [jax.lax.stop_gradient(packed[:, g * OUT_PAD:g * OUT_PAD + D_enc])
                    for g in range(G)]
    rec_latents = [packed[:, g * OUT_PAD + D_enc:g * OUT_PAD + 2 * D_enc]
                   for g in range(G)]
    kld_loss = sum(packed[:, g * OUT_PAD + 2 * D_enc] for g in range(G))   # (B,)
    return base_latents, rec_latents, kld_loss


# ----------------------------------------------------------------------------------
# Deterministic parameter construction (logical layout, weights stacked over groups).
# ----------------------------------------------------------------------------------
def _init_linear(key, groups, din, dout, scale=0.05):
    kw, kb = jax.random.split(key)
    w = scale * jax.random.normal(kw, (groups, din, dout), dtype=jnp.float32)
    b = scale * jax.random.normal(kb, (groups, 1, dout), dtype=jnp.float32)
    return w, b


def make_params(key, *, groups, in_features, encoding_depth, layers, latent_dim, interm_dim):
    keys = iter(jax.random.split(key, 2 * layers + 6))
    params = {}
    params["base_w"], params["base_b"] = _init_linear(
        next(keys), groups, in_features, encoding_depth)

    enc_dims = (encoding_depth,) + (interm_dim,) * layers
    params["enc_mlp_w"], params["enc_mlp_b"] = [], []
    for i in range(layers):
        w, b = _init_linear(next(keys), groups, enc_dims[i], enc_dims[i + 1])
        params["enc_mlp_w"].append(w); params["enc_mlp_b"].append(b)

    # enc_out Linear(encoding_depth + interm_dim -> 2*latent) stored as split row-blocks
    params["enc_out_we"], params["enc_out_b"] = _init_linear(
        next(keys), groups, interm_dim, 2 * latent_dim)
    params["enc_out_wl"], _ = _init_linear(
        next(keys), groups, encoding_depth, 2 * latent_dim)

    dec_dims = (latent_dim,) + (interm_dim,) * layers
    params["dec_mlp_w"], params["dec_mlp_b"] = [], []
    for i in range(layers):
        w, b = _init_linear(next(keys), groups, dec_dims[i], dec_dims[i + 1])
        params["dec_mlp_w"].append(w); params["dec_mlp_b"].append(b)

    # dec_out Linear(latent_dim + interm_dim -> encoding_depth) as split row-blocks
    params["dec_out_we"], params["dec_out_b"] = _init_linear(
        next(keys), groups, interm_dim, encoding_depth)
    params["dec_out_wz"], _ = _init_linear(
        next(keys), groups, latent_dim, encoding_depth)
    return params


# ----------------------------------------------------------------------------------
# Pure-JAX reference (same bf16-operand / f32-accumulate recipe) for correctness check.
# ----------------------------------------------------------------------------------
def _mm(a, w):
    return jnp.dot(a.astype(jnp.bfloat16), w.astype(jnp.bfloat16),
                   preferred_element_type=jnp.float32)


def reference_forward(params, x, eps):
    B = x.shape[0]
    x_flat = x.reshape(B, -1)
    G = params["base_w"].shape[0]
    base_latents, rec_latents = [], []
    kld = jnp.zeros((B,), jnp.float32)
    for g in range(G):
        l = _mm(x_flat, params["base_w"][g]) + params["base_b"][g]
        h = l
        for w, b in zip(params["enc_mlp_w"], params["enc_mlp_b"]):
            h = jnp.maximum(_mm(h, w[g]) + b[g], 0.0)
        dist = (_mm(h, params["enc_out_we"][g]) + _mm(l, params["enc_out_wl"][g])
                + params["enc_out_b"][g])
        Ld = dist.shape[1] // 2
        mu, s_raw = dist[:, :Ld], dist[:, Ld:]
        log_sigma = 5.0 * jnp.tanh(s_raw)
        sigma = jnp.exp(log_sigma)
        z = mu + sigma * eps[g]
        kld = kld + 0.5 * jnp.sum(mu * mu + sigma * sigma - 2.0 * log_sigma - 1.0, axis=-1)
        h = z
        for w, b in zip(params["dec_mlp_w"], params["dec_mlp_b"]):
            h = jnp.maximum(_mm(h, w[g]) + b[g], 0.0)
        rec = (_mm(h, params["dec_out_we"][g]) + _mm(z, params["dec_out_wz"][g])
               + params["dec_out_b"][g])
        base_latents.append(l)
        rec_latents.append(rec)
    return base_latents, rec_latents, kld


# ----------------------------------------------------------------------------------
if __name__ == "__main__":
    B, C, H, W = 2, 4, 16, 16
    GROUPS = 2
    ENCODING_DEPTH = 32
    LAYERS = 3
    LATENT_DIM = 32
    INTERM_DIM = 128

    root = jax.random.PRNGKey(0)
    kx, kparams, knoise = jax.random.split(root, 3)

    x = jax.random.normal(kx, (B, C, H, W), dtype=jnp.float32)
    params = make_params(
        kparams,
        groups=GROUPS,
        in_features=C * H * W,
        encoding_depth=ENCODING_DEPTH,
        layers=LAYERS,
        latent_dim=LATENT_DIM,
        interm_dim=INTERM_DIM,
    )
    # single RNG call for all groups' reparameterization noise
    eps = jax.random.normal(knoise, (GROUPS, B, LATENT_DIM), dtype=jnp.float32)

    base_latents, rec_latents, kld_loss = two_stage_vae_forward(params, x, eps)
    jax.block_until_ready((base_latents, rec_latents, kld_loss))

    assert len(base_latents) == GROUPS and len(rec_latents) == GROUPS
    assert base_latents[0].shape == (B, ENCODING_DEPTH)
    assert rec_latents[0].shape == (B, ENCODING_DEPTH)
    assert kld_loss.shape == (B,)

    # gross-correctness check against plain JAX using the same bf16/f32-accum recipe
    ref_base, ref_rec, ref_kld = reference_forward(params, x, eps)
    for g in range(GROUPS):
        assert jnp.allclose(base_latents[g], ref_base[g], atol=5e-2, rtol=5e-2)
        assert jnp.allclose(rec_latents[g], ref_rec[g], atol=5e-2, rtol=5e-2)
    assert jnp.allclose(kld_loss, ref_kld, atol=5e-2, rtol=5e-2)

    print("KERNEL_OK")
</pallas_src>

<mosaic_0001>
module attributes {stable_mosaic.version = 11 : i64} {
  func.func @_fused_kernel(%arg0: memref<2x1024xbf16, #tpu.memory_space<vmem>>, %arg1: memref<2x2x32xf32, #tpu.memory_space<vmem>>, %arg2: memref<1024x64xbf16, #tpu.memory_space<vmem>>, %arg3: memref<1x64xf32, #tpu.memory_space<vmem>>, %arg4: memref<2x32x128xbf16, #tpu.memory_space<vmem>>, %arg5: memref<2x32x128xbf16, #tpu.memory_space<vmem>>, %arg6: memref<8x128x128xbf16, #tpu.memory_space<vmem>>, %arg7: memref<12x1x128xf32, #tpu.memory_space<vmem>>, %arg8: memref<4x128x32xbf16, #tpu.memory_space<vmem>>, %arg9: memref<4x32x32xbf16, #tpu.memory_space<vmem>>, %arg10: memref<4x1x32xf32, #tpu.memory_space<vmem>>, %arg11: memref<2x128x32xbf16, #tpu.memory_space<vmem>>, %arg12: memref<2x32x32xbf16, #tpu.memory_space<vmem>>, %arg13: memref<2x1x32xf32, #tpu.memory_space<vmem>>, %arg14: memref<2x256xf32, #tpu.memory_space<vmem>>) attributes {dimension_semantics = [], scalar_prefetch = 0 : i64, scratch_operands = 0 : i64, tpu.core_type = #tpu.core_type<tc>} {
    %c0 = arith.constant 0 : index
    %c0_0 = arith.constant 0 : index
    %0 = vector.load %arg0[%c0, %c0_0] : memref<2x1024xbf16, #tpu.memory_space<vmem>>, vector<2x1024xbf16>
    %c0_1 = arith.constant 0 : index
    %c0_2 = arith.constant 0 : index
    %1 = vector.load %arg2[%c0_1, %c0_2] : memref<1024x64xbf16, #tpu.memory_space<vmem>>, vector<1024x64xbf16>
    %cst = arith.constant dense<0.000000e+00> : vector<2x64xf32>
    %2 = tpu.matmul %0, %1, %cst {dimension_numbers = #tpu.dot_dimension_numbers<[1], [0], [0], [1], [0, 0, 1, 1], [], []>} : vector<2x1024xbf16>, vector<1024x64xbf16>, vector<2x64xf32> -> vector<2x64xf32>
    %c0_3 = arith.constant 0 : index
    %c0_4 = arith.constant 0 : index
    %3 = vector.load %arg3[%c0_3, %c0_4] : memref<1x64xf32, #tpu.memory_space<vmem>>, vector<1x64xf32>
    %4 = vector.broadcast %3 : vector<1x64xf32> to vector<2x64xf32>
    %5 = arith.addf %2, %4 : vector<2x64xf32>
    %cst_5 = arith.constant 0.000000e+00 : f32
    %6 = vector.broadcast %cst_5 : f32 to vector<2x63xf32>
    %7 = vector.extract_strided_slice %5 {offsets = [0, 0], sizes = [2, 32], strides = [1, 1]} : vector<2x64xf32> to vector<2x32xf32>
    %c0_6 = arith.constant 0 : index
    %c0_7 = arith.constant 0 : index
    %c0_8 = arith.constant 0 : index
    %8 = vector.load %arg4[%c0_6, %c0_7, %c0_8] : memref<2x32x128xbf16, #tpu.memory_space<vmem>>, vector<1x32x128xbf16>
    %9 = vector.shape_cast %8 : vector<1x32x128xbf16> to vector<32x128xbf16>
    %c0_9 = arith.constant 0 : index
    %c0_10 = arith.constant 0 : index
    %c0_11 = arith.constant 0 : index
    %10 = vector.load %arg7[%c0_9, %c0_10, %c0_11] : memref<12x1x128xf32, #tpu.memory_space<vmem>>, vector<1x1x128xf32>
    %11 = vector.shape_cast %10 : vector<1x1x128xf32> to vector<1x128xf32>
    %12 = arith.truncf %7 : vector<2x32xf32> to vector<2x32xbf16>
    %cst_12 = arith.constant dense<0.000000e+00> : vector<2x128xf32>
    %13 = tpu.matmul %12, %9, %cst_12 {dimension_numbers = #tpu.dot_dimension_numbers<[1], [0], [0], [1], [0, 0, 1, 1], [], []>} : vector<2x32xbf16>, vector<32x128xbf16>, vector<2x128xf32> -> vector<2x128xf32>
    %14 = vector.broadcast %11 : vector<1x128xf32> to vector<2x128xf32>
    %15 = arith.addf %13, %14 : vector<2x128xf32>
    %cst_13 = arith.constant 0.000000e+00 : f32
    %16 = vector.broadcast %cst_13 : f32 to vector<2x128xf32>
    %17 = arith.maximumf %15, %16 : vector<2x128xf32>
    %c0_14 = arith.constant 0 : index
    %c0_15 = arith.constant 0 : index
    %c0_16 = arith.constant 0 : index
    %18 = vector.load %arg6[%c0_14, %c0_15, %c0_16] : memref<8x128x128xbf16, #tpu.memory_space<vmem>>, vector<1x128x128xbf16>
    %19 = vector.shape_cast %18 : vector<1x128x128xbf16> to vector<128x128xbf16>
    %c1 = arith.constant 1 : index
    %c0_17 = arith.constant 0 : index
    %c0_18 = arith.constant 0 : index
    %20 = vector.load %arg7[%c1, %c0_17, %c0_18] : memref<12x1x128xf32, #tpu.memory_space<vmem>>, vector<1x1x128xf32>
    %21 = vector.shape_cast %20 : vector<1x1x128xf32> to vector<1x128xf32>
    %22 = arith.truncf %17 : vector<2x128xf32> to vector<2x128xbf16>
    %cst_19 = arith.constant dense<0.000000e+00> : vector<2x128xf32>
    %23 = tpu.matmul %22, %19, %cst_19 {dimension_numbers = #tpu.dot_dimension_numbers<[1], [0], [0], [1], [0, 0, 1, 1], [], []>} : vector<2x128xbf16>, vector<128x128xbf16>, vector<2x128xf32> -> vector<2x128xf32>
    %24 = vector.broadcast %21 : vector<1x128xf32> to vector<2x128xf32>
    %25 = arith.addf %23, %24 : vector<2x128xf32>
    %cst_20 = arith.constant 0.000000e+00 : f32
    %26 = vector.broadcast %cst_20 : f32 to vector<2x128xf32>
    %27 = arith.maximumf %25, %26 : vector<2x128xf32>
    %c1_21 = arith.constant 1 : index
    %c0_22 = arith.constant 0 : index
    %c0_23 = arith.constant 0 : index
    %28 = vector.load %arg6[%c1_21, %c0_22, %c0_23] : memref<8x128x128xbf16, #tpu.memory_space<vmem>>, vector<1x128x128xbf16>
    %29 = vector.shape_cast %28 : vector<1x128x128xbf16> to vector<128x128xbf16>
    %c2 = arith.constant 2 : index
    %c0_24 = arith.constant 0 : index
    %c0_25 = arith.constant 0 : index
    %30 = vector.load %arg7[%c2, %c0_24, %c0_25] : memref<12x1x128xf32, #tpu.memory_space<vmem>>, vector<1x1x128xf32>
    %31 = vector.shape_cast %30 : vector<1x1x128xf32> to vector<1x128xf32>
    %32 = arith.truncf %27 : vector<2x128xf32> to vector<2x128xbf16>
    %cst_26 = arith.constant dense<0.000000e+00> : vector<2x128xf32>
    %33 = tpu.matmul %32, %29, %cst_26 {dimension_numbers = #tpu.dot_dimension_numbers<[1], [0], [0], [1], [0, 0, 1, 1], [], []>} : vector<2x128xbf16>, vector<128x128xbf16>, vector<2x128xf32> -> vector<2x128xf32>
    %34 = vector.broadcast %31 : vector<1x128xf32> to vector<2x128xf32>
    %35 = arith.addf %33, %34 : vector<2x128xf32>
    %cst_27 = arith.constant 0.000000e+00 : f32
    %36 = vector.broadcast %cst_27 : f32 to vector<2x128xf32>
    %37 = arith.maximumf %35, %36 : vector<2x128xf32>
    %38 = arith.truncf %37 : vector<2x128xf32> to vector<2x128xbf16>
    %39 = arith.truncf %7 : vector<2x32xf32> to vector<2x32xbf16>
    %c0_28 = arith.constant 0 : index
    %c0_29 = arith.constant 0 : index
    %c0_30 = arith.constant 0 : index
    %40 = vector.load %arg8[%c0_28, %c0_29, %c0_30] : memref<4x128x32xbf16, #tpu.memory_space<vmem>>, vector<1x128x32xbf16>
    %41 = vector.shape_cast %40 : vector<1x128x32xbf16> to vector<128x32xbf16>
    %cst_31 = arith.constant dense<0.000000e+00> : vector<2x32xf32>
    %42 = tpu.matmul %38, %41, %cst_31 {dimension_numbers = #tpu.dot_dimension_numbers<[1], [0], [0], [1], [0, 0, 1, 1], [], []>} : vector<2x128xbf16>, vector<128x32xbf16>, vector<2x32xf32> -> vector<2x32xf32>
    %c0_32 = arith.constant 0 : index
    %c0_33 = arith.constant 0 : index
    %c0_34 = arith.constant 0 : index
    %43 = vector.load %arg9[%c0_32, %c0_33, %c0_34] : memref<4x32x32xbf16, #tpu.memory_space<vmem>>, vector<1x32x32xbf16>
    %44 = vector.shape_cast %43 : vector<1x32x32xbf16> to vector<32x32xbf16>
    %cst_35 = arith.constant dense<0.000000e+00> : vector<2x32xf32>
    %45 = tpu.matmul %39, %44, %cst_35 {dimension_numbers = #tpu.dot_dimension_numbers<[1], [0], [0], [1], [0, 0, 1, 1], [], []>} : vector<2x32xbf16>, vector<32x32xbf16>, vector<2x32xf32> -> vector<2x32xf32>
    %46 = arith.addf %42, %45 : vector<2x32xf32>
    %c0_36 = arith.constant 0 : index
    %c0_37 = arith.constant 0 : index
    %c0_38 = arith.constant 0 : index
    %47 = vector.load %arg10[%c0_36, %c0_37, %c0_38] : memref<4x1x32xf32, #tpu.memory_space<vmem>>, vector<1x1x32xf32>
    %48 = vector.shape_cast %47 : vector<1x1x32xf32> to vector<1x32xf32>
    %49 = vector.broadcast %48 : vector<1x32xf32> to vector<2x32xf32>
    %50 = arith.addf %46, %49 : vector<2x32xf32>
    %c1_39 = arith.constant 1 : index
    %c0_40 = arith.constant 0 : index
    %c0_41 = arith.constant 0 : index
    %51 = vector.load %arg8[%c1_39, %c0_40, %c0_41] : memref<4x128x32xbf16, #tpu.memory_space<vmem>>, vector<1x128x32xbf16>
    %52 = vector.shape_cast %51 : vector<1x128x32xbf16> to vector<128x32xbf16>
    %cst_42 = arith.constant dense<0.000000e+00> : vector<2x32xf32>
    %53 = tpu.matmul %38, %52, %cst_42 {dimension_numbers = #tpu.dot_dimension_numbers<[1], [0], [0], [1], [0, 0, 1, 1], [], []>} : vector<2x128xbf16>, vector<128x32xbf16>, vector<2x32xf32> -> vector<2x32xf32>
    %c1_43 = arith.constant 1 : index
    %c0_44 = arith.constant 0 : index
    %c0_45 = arith.constant 0 : index
    %54 = vector.load %arg9[%c1_43, %c0_44, %c0_45] : memref<4x32x32xbf16, #tpu.memory_space<vmem>>, vector<1x32x32xbf16>
    %55 = vector.shape_cast %54 : vector<1x32x32xbf16> to vector<32x32xbf16>
    %cst_46 = arith.constant dense<0.000000e+00> : vector<2x32xf32>
    %56 = tpu.matmul %39, %55, %cst_46 {dimension_numbers = #tpu.dot_dimension_numbers<[1], [0], [0], [1], [0, 0, 1, 1], [], []>} : vector<2x32xbf16>, vector<32x32xbf16>, vector<2x32xf32> -> vector<2x32xf32>
    %57 = arith.addf %53, %56 : vector<2x32xf32>
    %c1_47 = arith.constant 1 : index
    %c0_48 = arith.constant 0 : index
    %c0_49 = arith.constant 0 : index
    %58 = vector.load %arg10[%c1_47, %c0_48, %c0_49] : memref<4x1x32xf32, #tpu.memory_space<vmem>>, vector<1x1x32xf32>
    %59 = vector.shape_cast %58 : vector<1x1x32xf32> to vector<1x32xf32>
    %60 = vector.broadcast %59 : vector<1x32xf32> to vector<2x32xf32>
    %61 = arith.addf %57, %60 : vector<2x32xf32>
    %62 = math.tanh %61 : vector<2x32xf32>
    %cst_50 = arith.constant 5.000000e+00 : f32
    %63 = vector.broadcast %cst_50 : f32 to vector<2x32xf32>
    %64 = arith.mulf %63, %62 : vector<2x32xf32>
    %65 = math.exp %64 : vector<2x32xf32>
    %c0_51 = arith.constant 0 : index
    %c0_52 = arith.constant 0 : index
    %c0_53 = arith.constant 0 : index
    %66 = vector.load %arg1[%c0_51, %c0_52, %c0_53] : memref<2x2x32xf32, #tpu.memory_space<vmem>>, vector<1x2x32xf32>
    %67 = vector.shape_cast %66 : vector<1x2x32xf32> to vector<2x32xf32>
    %68 = arith.mulf %65, %67 : vector<2x32xf32>
    %69 = arith.addf %50, %68 : vector<2x32xf32>
    %70 = arith.mulf %50, %50 : vector<2x32xf32>
    %71 = arith.mulf %65, %65 : vector<2x32xf32>
    %72 = arith.addf %70, %71 : vector<2x32xf32>
    %cst_54 = arith.constant 2.000000e+00 : f32
    %73 = vector.broadcast %cst_54 : f32 to vector<2x32xf32>
    %74 = arith.mulf %73, %64 : vector<2x32xf32>
    %75 = arith.subf %72, %74 : vector<2x32xf32>
    %cst_55 = arith.constant 1.000000e+00 : f32
    %76 = vector.broadcast %cst_55 : f32 to vector<2x32xf32>
    %77 = arith.subf %75, %76 : vector<2x32xf32>
    %cst_56 = arith.constant dense<0.000000e+00> : vector<2xf32>
    %78 = vector.multi_reduction <add>, %77, %cst_56 [1] : vector<2x32xf32> to vector<2xf32>
    %79 = vector.shape_cast %78 : vector<2xf32> to vector<2x1xf32>
    %cst_57 = arith.constant 5.000000e-01 : f32
    %80 = vector.broadcast %cst_57 : f32 to vector<2x1xf32>
    %81 = arith.mulf %80, %79 : vector<2x1xf32>
    %c0_58 = arith.constant 0 : index
    %c0_59 = arith.constant 0 : index
    %c0_60 = arith.constant 0 : index
    %82 = vector.load %arg5[%c0_58, %c0_59, %c0_60] : memref<2x32x128xbf16, #tpu.memory_space<vmem>>, vector<1x32x128xbf16>
    %83 = vector.shape_cast %82 : vector<1x32x128xbf16> to vector<32x128xbf16>
    %c3 = arith.constant 3 : index
    %c0_61 = arith.constant 0 : index
    %c0_62 = arith.constant 0 : index
    %84 = vector.load %arg7[%c3, %c0_61, %c0_62] : memref<12x1x128xf32, #tpu.memory_space<vmem>>, vector<1x1x128xf32>
    %85 = vector.shape_cast %84 : vector<1x1x128xf32> to vector<1x128xf32>
    %86 = arith.truncf %69 : vector<2x32xf32> to vector<2x32xbf16>
    %cst_63 = arith.constant dense<0.000000e+00> : vector<2x128xf32>
    %87 = tpu.matmul %86, %83, %cst_63 {dimension_numbers = #tpu.dot_dimension_numbers<[1], [0], [0], [1], [0, 0, 1, 1], [], []>} : vector<2x32xbf16>, vector<32x128xbf16>, vector<2x128xf32> -> vector<2x128xf32>
    %88 = vector.broadcast %85 : vector<1x128xf32> to vector<2x128xf32>
    %89 = arith.addf %87, %88 : vector<2x128xf32>
    %cst_64 = arith.constant 0.000000e+00 : f32
    %90 = vector.broadcast %cst_64 : f32 to vector<2x128xf32>
    %91 = arith.maximumf %89, %90 : vector<2x128xf32>
    %c2_65 = arith.constant 2 : index
    %c0_66 = arith.constant 0 : index
    %c0_67 = arith.constant 0 : index
    %92 = vector.load %arg6[%c2_65, %c0_66, %c0_67] : memref<8x128x128xbf16, #tpu.memory_space<vmem>>, vector<1x128x128xbf16>
    %93 = vector.shape_cast %92 : vector<1x128x128xbf16> to vector<128x128xbf16>
    %c4 = arith.constant 4 : index
    %c0_68 = arith.constant 0 : index
    %c0_69 = arith.constant 0 : index
    %94 = vector.load %arg7[%c4, %c0_68, %c0_69] : memref<12x1x128xf32, #tpu.memory_space<vmem>>, vector<1x1x128xf32>
    %95 = vector.shape_cast %94 : vector<1x1x128xf32> to vector<1x128xf32>
    %96 = arith.truncf %91 : vector<2x128xf32> to vector<2x128xbf16>
    %cst_70 = arith.constant dense<0.000000e+00> : vector<2x128xf32>
    %97 = tpu.matmul %96, %93, %cst_70 {dimension_numbers = #tpu.dot_dimension_numbers<[1], [0], [0], [1], [0, 0, 1, 1], [], []>} : vector<2x128xbf16>, vector<128x128xbf16>, vector<2x128xf32> -> vector<2x128xf32>
    %98 = vector.broadcast %95 : vector<1x128xf32> to vector<2x128xf32>
    %99 = arith.addf %97, %98 : vector<2x128xf32>
    %cst_71 = arith.constant 0.000000e+00 : f32
    %100 = vector.broadcast %cst_71 : f32 to vector<2x128xf32>
    %101 = arith.maximumf %99, %100 : vector<2x128xf32>
    %c3_72 = arith.constant 3 : index
    %c0_73 = arith.constant 0 : index
    %c0_74 = arith.constant 0 : index
    %102 = vector.load %arg6[%c3_72, %c0_73, %c0_74] : memref<8x128x128xbf16, #tpu.memory_space<vmem>>, vector<1x128x128xbf16>
    %103 = vector.shape_cast %102 : vector<1x128x128xbf16> to vector<128x128xbf16>
    %c5 = arith.constant 5 : index
    %c0_75 = arith.constant 0 : index
    %c0_76 = arith.constant 0 : index
    %104 = vector.load %arg7[%c5, %c0_75, %c0_76] : memref<12x1x128xf32, #tpu.memory_space<vmem>>, vector<1x1x128xf32>
    %105 = vector.shape_cast %104 : vector<1x1x128xf32> to vector<1x128xf32>
    %106 = arith.truncf %101 : vector<2x128xf32> to vector<2x128xbf16>
    %cst_77 = arith.constant dense<0.000000e+00> : vector<2x128xf32>
    %107 = tpu.matmul %106, %103, %cst_77 {dimension_numbers = #tpu.dot_dimension_numbers<[1], [0], [0], [1], [0, 0, 1, 1], [], []>} : vector<2x128xbf16>, vector<128x128xbf16>, vector<2x128xf32> -> vector<2x128xf32>
    %108 = vector.broadcast %105 : vector<1x128xf32> to vector<2x128xf32>
    %109 = arith.addf %107, %108 : vector<2x128xf32>
    %cst_78 = arith.constant 0.000000e+00 : f32
    %110 = vector.broadcast %cst_78 : f32 to vector<2x128xf32>
    %111 = arith.maximumf %109, %110 : vector<2x128xf32>
    %112 = arith.truncf %111 : vector<2x128xf32> to vector<2x128xbf16>
    %c0_79 = arith.constant 0 : index
    %c0_80 = arith.constant 0 : index
    %c0_81 = arith.constant 0 : index
    %113 = vector.load %arg11[%c0_79, %c0_80, %c0_81] : memref<2x128x32xbf16, #tpu.memory_space<vmem>>, vector<1x128x32xbf16>
    %114 = vector.shape_cast %113 : vector<1x128x32xbf16> to vector<128x32xbf16>
    %cst_82 = arith.constant dense<0.000000e+00> : vector<2x32xf32>
    %115 = tpu.matmul %112, %114, %cst_82 {dimension_numbers = #tpu.dot_dimension_numbers<[1], [0], [0], [1], [0, 0, 1, 1], [], []>} : vector<2x128xbf16>, vector<128x32xbf16>, vector<2x32xf32> -> vector<2x32xf32>
    %116 = arith.truncf %69 : vector<2x32xf32> to vector<2x32xbf16>
    %c0_83 = arith.constant 0 : index
    %c0_84 = arith.constant 0 : index
    %c0_85 = arith.constant 0 : index
    %117 = vector.load %arg12[%c0_83, %c0_84, %c0_85] : memref<2x32x32xbf16, #tpu.memory_space<vmem>>, vector<1x32x32xbf16>
    %118 = vector.shape_cast %117 : vector<1x32x32xbf16> to vector<32x32xbf16>
    %cst_86 = arith.constant dense<0.000000e+00> : vector<2x32xf32>
    %119 = tpu.matmul %116, %118, %cst_86 {dimension_numbers = #tpu.dot_dimension_numbers<[1], [0], [0], [1], [0, 0, 1, 1], [], []>} : vector<2x32xbf16>, vector<32x32xbf16>, vector<2x32xf32> -> vector<2x32xf32>
    %120 = arith.addf %115, %119 : vector<2x32xf32>
    %c0_87 = arith.constant 0 : index
    %c0_88 = arith.constant 0 : index
    %c0_89 = arith.constant 0 : index
    %121 = vector.load %arg13[%c0_87, %c0_88, %c0_89] : memref<2x1x32xf32, #tpu.memory_space<vmem>>, vector<1x1x32xf32>
    %122 = vector.shape_cast %121 : vector<1x1x32xf32> to vector<1x32xf32>
    %123 = vector.broadcast %122 : vector<1x32xf32> to vector<2x32xf32>
    %124 = arith.addf %120, %123 : vector<2x32xf32>
    %125 = vector.extract_strided_slice %5 {offsets = [0, 32], sizes = [2, 32], strides = [1, 1]} : vector<2x64xf32> to vector<2x32xf32>
    %c1_90 = arith.constant 1 : index
    %c0_91 = arith.constant 0 : index
    %c0_92 = arith.constant 0 : index
    %126 = vector.load %arg4[%c1_90, %c0_91, %c0_92] : memref<2x32x128xbf16, #tpu.memory_space<vmem>>, vector<1x32x128xbf16>
    %127 = vector.shape_cast %126 : vector<1x32x128xbf16> to vector<32x128xbf16>
    %c6 = arith.constant 6 : index
    %c0_93 = arith.constant 0 : index
    %c0_94 = arith.constant 0 : index
    %128 = vector.load %arg7[%c6, %c0_93, %c0_94] : memref<12x1x128xf32, #tpu.memory_space<vmem>>, vector<1x1x128xf32>
    %129 = vector.shape_cast %128 : vector<1x1x128xf32> to vector<1x128xf32>
    %130 = arith.truncf %125 : vector<2x32xf32> to vector<2x32xbf16>
    %cst_95 = arith.constant dense<0.000000e+00> : vector<2x128xf32>
    %131 = tpu.matmul %130, %127, %cst_95 {dimension_numbers = #tpu.dot_dimension_numbers<[1], [0], [0], [1], [0, 0, 1, 1], [], []>} : vector<2x32xbf16>, vector<32x128xbf16>, vector<2x128xf32> -> vector<2x128xf32>
    %132 = vector.broadcast %129 : vector<1x128xf32> to vector<2x128xf32>
    %133 = arith.addf %131, %132 : vector<2x128xf32>
    %cst_96 = arith.constant 0.000000e+00 : f32
    %134 = vector.broadcast %cst_96 : f32 to vector<2x128xf32>
    %135 = arith.maximumf %133, %134 : vector<2x128xf32>
    %c4_97 = arith.constant 4 : index
    %c0_98 = arith.constant 0 : index
    %c0_99 = arith.constant 0 : index
    %136 = vector.load %arg6[%c4_97, %c0_98, %c0_99] : memref<8x128x128xbf16, #tpu.memory_space<vmem>>, vector<1x128x128xbf16>
    %137 = vector.shape_cast %136 : vector<1x128x128xbf16> to vector<128x128xbf16>
    %c7 = arith.constant 7 : index
    %c0_100 = arith.constant 0 : index
    %c0_101 = arith.constant 0 : index
    %138 = vector.load %arg7[%c7, %c0_100, %c0_101] : memref<12x1x128xf32, #tpu.memory_space<vmem>>, vector<1x1x128xf32>
    %139 = vector.shape_cast %138 : vector<1x1x128xf32> to vector<1x128xf32>
    %140 = arith.truncf %135 : vector<2x128xf32> to vector<2x128xbf16>
    %cst_102 = arith.constant dense<0.000000e+00> : vector<2x128xf32>
    %141 = tpu.matmul %140, %137, %cst_102 {dimension_numbers = #tpu.dot_dimension_numbers<[1], [0], [0], [1], [0, 0, 1, 1], [], []>} : vector<2x128xbf16>, vector<128x128xbf16>, vector<2x128xf32> -> vector<2x128xf32>
    %142 = vector.broadcast %139 : vector<1x128xf32> to vector<2x128xf32>
    %143 = arith.addf %141, %142 : vector<2x128xf32>
    %cst_103 = arith.constant 0.000000e+00 : f32
    %144 = vector.broadcast %cst_103 : f32 to vector<2x128xf32>
    %145 = arith.maximumf %143, %144 : vector<2x128xf32>
    %c5_104 = arith.constant 5 : index
    %c0_105 = arith.constant 0 : index
    %c0_106 = arith.constant 0 : index
    %146 = vector.load %arg6[%c5_104, %c0_105, %c0_106] : memref<8x128x128xbf16, #tpu.memory_space<vmem>>, vector<1x128x128xbf16>
    %147 = vector.shape_cast %146 : vector<1x128x128xbf16> to vector<128x128xbf16>
    %c8 = arith.constant 8 : index
    %c0_107 = arith.constant 0 : index
    %c0_108 = arith.constant 0 : index
    %148 = vector.load %arg7[%c8, %c0_107, %c0_108] : memref<12x1x128xf32, #tpu.memory_space<vmem>>, vector<1x1x128xf32>
    %149 = vector.shape_cast %148 : vector<1x1x128xf32> to vector<1x128xf32>
    %150 = arith.truncf %145 : vector<2x128xf32> to vector<2x128xbf16>
    %cst_109 = arith.constant dense<0.000000e+00> : vector<2x128xf32>
    %151 = tpu.matmul %150, %147, %cst_109 {dimension_numbers = #tpu.dot_dimension_numbers<[1], [0], [0], [1], [0, 0, 1, 1], [], []>} : vector<2x128xbf16>, vector<128x128xbf16>, vector<2x128xf32> -> vector<2x128xf32>
    %152 = vector.broadcast %149 : vector<1x128xf32> to vector<2x128xf32>
    %153 = arith.addf %151, %152 : vector<2x128xf32>
    %cst_110 = arith.constant 0.000000e+00 : f32
    %154 = vector.broadcast %cst_110 : f32 to vector<2x128xf32>
    %155 = arith.maximumf %153, %154 : vector<2x128xf32>
    %156 = arith.truncf %155 : vector<2x128xf32> to vector<2x128xbf16>
    %157 = arith.truncf %125 : vector<2x32xf32> to vector<2x32xbf16>
    %c2_111 = arith.constant 2 : index
    %c0_112 = arith.constant 0 : index
    %c0_113 = arith.constant 0 : index
    %158 = vector.load %arg8[%c2_111, %c0_112, %c0_113] : memref<4x128x32xbf16, #tpu.memory_space<vmem>>, vector<1x128x32xbf16>
    %159 = vector.shape_cast %158 : vector<1x128x32xbf16> to vector<128x32xbf16>
    %cst_114 = arith.constant dense<0.000000e+00> : vector<2x32xf32>
    %160 = tpu.matmul %156, %159, %cst_114 {dimension_numbers = #tpu.dot_dimension_numbers<[1], [0], [0], [1], [0, 0, 1, 1], [], []>} : vector<2x128xbf16>, vector<128x32xbf16>, vector<2x32xf32> -> vector<2x32xf32>
    %c2_115 = arith.constant 2 : index
    %c0_116 = arith.constant 0 : index
    %c0_117 = arith.constant 0 : index
    %161 = vector.load %arg9[%c2_115, %c0_116, %c0_117] : memref<4x32x32xbf16, #tpu.memory_space<vmem>>, vector<1x32x32xbf16>
    %162 = vector.shape_cast %161 : vector<1x32x32xbf16> to vector<32x32xbf16>
    %cst_118 = arith.constant dense<0.000000e+00> : vector<2x32xf32>
    %163 = tpu.matmul %157, %162, %cst_118 {dimension_numbers = #tpu.dot_dimension_numbers<[1], [0], [0], [1], [0, 0, 1, 1], [], []>} : vector<2x32xbf16>, vector<32x32xbf16>, vector<2x32xf32> -> vector<2x32xf32>
    %164 = arith.addf %160, %163 : vector<2x32xf32>
    %c2_119 = arith.constant 2 : index
    %c0_120 = arith.constant 0 : index
    %c0_121 = arith.constant 0 : index
    %165 = vector.load %arg10[%c2_119, %c0_120, %c0_121] : memref<4x1x32xf32, #tpu.memory_space<vmem>>, vector<1x1x32xf32>
    %166 = vector.shape_cast %165 : vector<1x1x32xf32> to vector<1x32xf32>
    %167 = vector.broadcast %166 : vector<1x32xf32> to vector<2x32xf32>
    %168 = arith.addf %164, %167 : vector<2x32xf32>
    %c3_122 = arith.constant 3 : index
    %c0_123 = arith.constant 0 : index
    %c0_124 = arith.constant 0 : index
    %169 = vector.load %arg8[%c3_122, %c0_123, %c0_124] : memref<4x128x32xbf16, #tpu.memory_space<vmem>>, vector<1x128x32xbf16>
    %170 = vector.shape_cast %169 : vector<1x128x32xbf16> to vector<128x32xbf16>
    %cst_125 = arith.constant dense<0.000000e+00> : vector<2x32xf32>
    %171 = tpu.matmul %156, %170, %cst_125 {dimension_numbers = #tpu.dot_dimension_numbers<[1], [0], [0], [1], [0, 0, 1, 1], [], []>} : vector<2x128xbf16>, vector<128x32xbf16>, vector<2x32xf32> -> vector<2x32xf32>
    %c3_126 = arith.constant 3 : index
    %c0_127 = arith.constant 0 : index
    %c0_128 = arith.constant 0 : index
    %172 = vector.load %arg9[%c3_126, %c0_127, %c0_128] : memref<4x32x32xbf16, #tpu.memory_space<vmem>>, vector<1x32x32xbf16>
    %173 = vector.shape_cast %172 : vector<1x32x32xbf16> to vector<32x32xbf16>
    %cst_129 = arith.constant dense<0.000000e+00> : vector<2x32xf32>
    %174 = tpu.matmul %157, %173, %cst_129 {dimension_numbers = #tpu.dot_dimension_numbers<[1], [0], [0], [1], [0, 0, 1, 1], [], []>} : vector<2x32xbf16>, vector<32x32xbf16>, vector<2x32xf32> -> vector<2x32xf32>
    %175 = arith.addf %171, %174 : vector<2x32xf32>
    %c3_130 = arith.constant 3 : index
    %c0_131 = arith.constant 0 : index
    %c0_132 = arith.constant 0 : index
    %176 = vector.load %arg10[%c3_130, %c0_131, %c0_132] : memref<4x1x32xf32, #tpu.memory_space<vmem>>, vector<1x1x32xf32>
    %177 = vector.shape_cast %176 : vector<1x1x32xf32> to vector<1x32xf32>
    %178 = vector.broadcast %177 : vector<1x32xf32> to vector<2x32xf32>
    %179 = arith.addf %175, %178 : vector<2x32xf32>
    %180 = math.tanh %179 : vector<2x32xf32>
    %cst_133 = arith.constant 5.000000e+00 : f32
    %181 = vector.broadcast %cst_133 : f32 to vector<2x32xf32>
    %182 = arith.mulf %181, %180 : vector<2x32xf32>
    %183 = math.exp %182 : vector<2x32xf32>
    %c1_134 = arith.constant 1 : index
    %c0_135 = arith.constant 0 : index
    %c0_136 = arith.constant 0 : index
    %184 = vector.load %arg1[%c1_134, %c0_135, %c0_136] : memref<2x2x32xf32, #tpu.memory_space<vmem>>, vector<1x2x32xf32>
    %185 = vector.shape_cast %184 : vector<1x2x32xf32> to vector<2x32xf32>
    %186 = arith.mulf %183, %185 : vector<2x32xf32>
    %187 = arith.addf %168, %186 : vector<2x32xf32>
    %188 = arith.mulf %168, %168 : vector<2x32xf32>
    %189 = arith.mulf %183, %183 : vector<2x32xf32>
    %190 = arith.addf %188, %189 : vector<2x32xf32>
    %cst_137 = arith.constant 2.000000e+00 : f32
    %191 = vector.broadcast %cst_137 : f32 to vector<2x32xf32>
    %192 = arith.mulf %191, %182 : vector<2x32xf32>
    %193 = arith.subf %190, %192 : vector<2x32xf32>
    %cst_138 = arith.constant 1.000000e+00 : f32
    %194 = vector.broadcast %cst_138 : f32 to vector<2x32xf32>
    %195 = arith.subf %193, %194 : vector<2x32xf32>
    %cst_139 = arith.constant dense<0.000000e+00> : vector<2xf32>
    %196 = vector.multi_reduction <add>, %195, %cst_139 [1] : vector<2x32xf32> to vector<2xf32>
    %197 = vector.shape_cast %196 : vector<2xf32> to vector<2x1xf32>
    %cst_140 = arith.constant 5.000000e-01 : f32
    %198 = vector.broadcast %cst_140 : f32 to vector<2x1xf32>
    %199 = arith.mulf %198, %197 : vector<2x1xf32>
    %c1_141 = arith.constant 1 : index
    %c0_142 = arith.constant 0 : index
    %c0_143 = arith.constant 0 : index
    %200 = vector.load %arg5[%c1_141, %c0_142, %c0_143] : memref<2x32x128xbf16, #tpu.memory_space<vmem>>, vector<1x32x128xbf16>
    %201 = vector.shape_cast %200 : vector<1x32x128xbf16> to vector<32x128xbf16>
    %c9 = arith.constant 9 : index
    %c0_144 = arith.constant 0 : index
    %c0_145 = arith.constant 0 : index
    %202 = vector.load %arg7[%c9, %c0_144, %c0_145] : memref<12x1x128xf32, #tpu.memory_space<vmem>>, vector<1x1x128xf32>
    %203 = vector.shape_cast %202 : vector<1x1x128xf32> to vector<1x128xf32>
    %204 = arith.truncf %187 : vector<2x32xf32> to vector<2x32xbf16>
    %cst_146 = arith.constant dense<0.000000e+00> : vector<2x128xf32>
    %205 = tpu.matmul %204, %201, %cst_146 {dimension_numbers = #tpu.dot_dimension_numbers<[1], [0], [0], [1], [0, 0, 1, 1], [], []>} : vector<2x32xbf16>, vector<32x128xbf16>, vector<2x128xf32> -> vector<2x128xf32>
    %206 = vector.broadcast %203 : vector<1x128xf32> to vector<2x128xf32>
    %207 = arith.addf %205, %206 : vector<2x128xf32>
    %cst_147 = arith.constant 0.000000e+00 : f32
    %208 = vector.broadcast %cst_147 : f32 to vector<2x128xf32>
    %209 = arith.maximumf %207, %208 : vector<2x128xf32>
    %c6_148 = arith.constant 6 : index
    %c0_149 = arith.constant 0 : index
    %c0_150 = arith.constant 0 : index
    %210 = vector.load %arg6[%c6_148, %c0_149, %c0_150] : memref<8x128x128xbf16, #tpu.memory_space<vmem>>, vector<1x128x128xbf16>
    %211 = vector.shape_cast %210 : vector<1x128x128xbf16> to vector<128x128xbf16>
    %c10 = arith.constant 10 : index
    %c0_151 = arith.constant 0 : index
    %c0_152 = arith.constant 0 : index
    %212 = vector.load %arg7[%c10, %c0_151, %c0_152] : memref<12x1x128xf32, #tpu.memory_space<vmem>>, vector<1x1x128xf32>
    %213 = vector.shape_cast %212 : vector<1x1x128xf32> to vector<1x128xf32>
    %214 = arith.truncf %209 : vector<2x128xf32> to vector<2x128xbf16>
    %cst_153 = arith.constant dense<0.000000e+00> : vector<2x128xf32>
    %215 = tpu.matmul %214, %211, %cst_153 {dimension_numbers = #tpu.dot_dimension_numbers<[1], [0], [0], [1], [0, 0, 1, 1], [], []>} : vector<2x128xbf16>, vector<128x128xbf16>, vector<2x128xf32> -> vector<2x128xf32>
    %216 = vector.broadcast %213 : vector<1x128xf32> to vector<2x128xf32>
    %217 = arith.addf %215, %216 : vector<2x128xf32>
    %cst_154 = arith.constant 0.000000e+00 : f32
    %218 = vector.broadcast %cst_154 : f32 to vector<2x128xf32>
    %219 = arith.maximumf %217, %218 : vector<2x128xf32>
    %c7_155 = arith.constant 7 : index
    %c0_156 = arith.constant 0 : index
    %c0_157 = arith.constant 0 : index
    %220 = vector.load %arg6[%c7_155, %c0_156, %c0_157] : memref<8x128x128xbf16, #tpu.memory_space<vmem>>, vector<1x128x128xbf16>
    %221 = vector.shape_cast %220 : vector<1x128x128xbf16> to vector<128x128xbf16>
    %c11 = arith.constant 11 : index
    %c0_158 = arith.constant 0 : index
    %c0_159 = arith.constant 0 : index
    %222 = vector.load %arg7[%c11, %c0_158, %c0_159] : memref<12x1x128xf32, #tpu.memory_space<vmem>>, vector<1x1x128xf32>
    %223 = vector.shape_cast %222 : vector<1x1x128xf32> to vector<1x128xf32>
    %224 = arith.truncf %219 : vector<2x128xf32> to vector<2x128xbf16>
    %cst_160 = arith.constant dense<0.000000e+00> : vector<2x128xf32>
    %225 = tpu.matmul %224, %221, %cst_160 {dimension_numbers = #tpu.dot_dimension_numbers<[1], [0], [0], [1], [0, 0, 1, 1], [], []>} : vector<2x128xbf16>, vector<128x128xbf16>, vector<2x128xf32> -> vector<2x128xf32>
    %226 = vector.broadcast %223 : vector<1x128xf32> to vector<2x128xf32>
    %227 = arith.addf %225, %226 : vector<2x128xf32>
    %cst_161 = arith.constant 0.000000e+00 : f32
    %228 = vector.broadcast %cst_161 : f32 to vector<2x128xf32>
    %229 = arith.maximumf %227, %228 : vector<2x128xf32>
    %230 = arith.truncf %229 : vector<2x128xf32> to vector<2x128xbf16>
    %c1_162 = arith.constant 1 : index
    %c0_163 = arith.constant 0 : index
    %c0_164 = arith.constant 0 : index
    %231 = vector.load %arg11[%c1_162, %c0_163, %c0_164] : memref<2x128x32xbf16, #tpu.memory_space<vmem>>, vector<1x128x32xbf16>
    %232 = vector.shape_cast %231 : vector<1x128x32xbf16> to vector<128x32xbf16>
    %cst_165 = arith.constant dense<0.000000e+00> : vector<2x32xf32>
    %233 = tpu.matmul %230, %232, %cst_165 {dimension_numbers = #tpu.dot_dimension_numbers<[1], [0], [0], [1], [0, 0, 1, 1], [], []>} : vector<2x128xbf16>, vector<128x32xbf16>, vector<2x32xf32> -> vector<2x32xf32>
    %234 = arith.truncf %187 : vector<2x32xf32> to vector<2x32xbf16>
    %c1_166 = arith.constant 1 : index
    %c0_167 = arith.constant 0 : index
    %c0_168 = arith.constant 0 : index
    %235 = vector.load %arg12[%c1_166, %c0_167, %c0_168] : memref<2x32x32xbf16, #tpu.memory_space<vmem>>, vector<1x32x32xbf16>
    %236 = vector.shape_cast %235 : vector<1x32x32xbf16> to vector<32x32xbf16>
    %cst_169 = arith.constant dense<0.000000e+00> : vector<2x32xf32>
    %237 = tpu.matmul %234, %236, %cst_169 {dimension_numbers = #tpu.dot_dimension_numbers<[1], [0], [0], [1], [0, 0, 1, 1], [], []>} : vector<2x32xbf16>, vector<32x32xbf16>, vector<2x32xf32> -> vector<2x32xf32>
    %238 = arith.addf %233, %237 : vector<2x32xf32>
    %c1_170 = arith.constant 1 : index
    %c0_171 = arith.constant 0 : index
    %c0_172 = arith.constant 0 : index
    %239 = vector.load %arg13[%c1_170, %c0_171, %c0_172] : memref<2x1x32xf32, #tpu.memory_space<vmem>>, vector<1x1x32xf32>
    %240 = vector.shape_cast %239 : vector<1x1x32xf32> to vector<1x32xf32>
    %241 = vector.broadcast %240 : vector<1x32xf32> to vector<2x32xf32>
    %242 = arith.addf %238, %241 : vector<2x32xf32>
    %243 = tpu.concatenate %7, %124, %81, %6, %125, %242, %199, %6 in 1 : vector<2x32xf32>, vector<2x32xf32>, vector<2x1xf32>, vector<2x63xf32>, vector<2x32xf32>, vector<2x32xf32>, vector<2x1xf32>, vector<2x63xf32> -> vector<2x256xf32>
    %c0_173 = arith.constant 0 : index
    %c0_174 = arith.constant 0 : index
    %244 = vector.load %arg14[%c0_173, %c0_174] : memref<2x256xf32, #tpu.memory_space<vmem>>, vector<2x256xf32>
    tpu.vector_store %arg14[%c0_173, %c0_174], %243 {strides = array<i32>} : memref<2x256xf32, #tpu.memory_space<vmem>>, vector<2x256xf32>,
    return
  }
}

</mosaic_0001>

<llo_original>
// kernel: tpu_custom_call.1
$region0: #{tpu_custom_call.1}
  #allocation0 [shape = 'u32[]', space=smem, size = 0x4, offset = 0x4, fixed_abs, tag = 'smem constant byte address 0x4 - core index']
  #allocation1 [shape = 'u32[144,128]{1,0:T(1,128)}', space=vmem, size = 0x12000, scoped, tag = 'internal scratch']
  %s0 = inlined_call_operand.vmem [shape: bf16[2,1024], index: 0, kind: input, shape index: {}]
  %s1 = inlined_call_operand.vmem [shape: f32[2,2,32], index: 1, kind: input, shape index: {}]
  %s2 = inlined_call_operand.vmem [shape: bf16[1024,64], index: 2, kind: input, shape index: {}]
  %s3 = inlined_call_operand.vmem [shape: f32[1,64], index: 3, kind: input, shape index: {}]
  %s4 = inlined_call_operand.vmem [shape: bf16[2,32,128], index: 4, kind: input, shape index: {}]
  %s5 = inlined_call_operand.vmem [shape: bf16[2,32,128], index: 5, kind: input, shape index: {}]
  %s6 = inlined_call_operand.vmem [shape: bf16[8,128,128], index: 6, kind: input, shape index: {}]
  %s7 = inlined_call_operand.vmem [shape: f32[12,1,128], index: 7, kind: input, shape index: {}]
  %s8 = inlined_call_operand.vmem [shape: bf16[4,128,32], index: 8, kind: input, shape index: {}]
  %s9 = inlined_call_operand.vmem [shape: bf16[4,32,32], index: 9, kind: input, shape index: {}]
  %s10 = inlined_call_operand.vmem [shape: f32[4,1,32], index: 10, kind: input, shape index: {}]
  %s11 = inlined_call_operand.vmem [shape: bf16[2,128,32], index: 11, kind: input, shape index: {}]
  %s12 = inlined_call_operand.vmem [shape: bf16[2,32,32], index: 12, kind: input, shape index: {}]
  %s13 = inlined_call_operand.vmem [shape: f32[2,1,32], index: 13, kind: input, shape index: {}]
  %s14 = inlined_call_operand.hbm [shape: f32[2,256], index: 14, kind: output, shape index: {}]
  %s15 = sld [smem:[#allocation0]]
  $region66: #{tpu_custom_call.1} parent=0
    _
  %s17 = ssub.s32 1, %s15
  %s18 = scalar_select 0, %s17, %s15
  $region1: #{tpu_custom_call.1} parent=0
    #allocation2 [shape = 'u8[2048]{0}', space=vmem, size = 0x800, scoped, tag = 'output window, operand 0, single buffered']
    #allocation3 [shape = 's32[1]{0}', space=sflag, size = 0x4, scoped, tag = 'scoped memory for tpu_custom_call.1']
    %19 = vsyncpa [#allocation3], 0
    // Predicated region
    $region2: #{tpu_custom_call.1} parent=1 // pred_check
      _
    $region3: #{tpu_custom_call.1} parent=1 // pred_check_branch
      %21 = sbr.rel (0) target = $region5
    $region4: #{tpu_custom_call.1} parent=1 // pred_region
      _
    $region5: #{tpu_custom_call.1} parent=1 // pred_fallthru
      _
    // Predicated region
    $region6: #{tpu_custom_call.1} parent=1 // pred_check
      _
    $region7: #{tpu_custom_call.1} parent=1 // pred_check_branch
      %23 = sbr.rel (0) target = $region9
    $region8: #{tpu_custom_call.1} parent=1 // pred_region
      _
    $region9: #{tpu_custom_call.1} parent=1 // pred_fallthru
      _
    // Predicated region
    $region10: #{tpu_custom_call.1} parent=1 // pred_check
      _
    $region11: #{tpu_custom_call.1} parent=1 // pred_check_branch
      %25 = sbr.rel (0) target = $region13
    $region12: #{tpu_custom_call.1} parent=1 // pred_region
      _
    $region13: #{tpu_custom_call.1} parent=1 // pred_fallthru
      _
    // Predicated region
    $region14: #{tpu_custom_call.1} parent=1 // pred_check
      _
    $region15: #{tpu_custom_call.1} parent=1 // pred_check_branch
      %27 = sbr.rel (0) target = $region17
    $region16: #{tpu_custom_call.1} parent=1 // pred_region
      _
    $region17: #{tpu_custom_call.1} parent=1 // pred_fallthru
      _
    // Predicated region
    $region18: #{tpu_custom_call.1} parent=1 // pred_check
      _
    $region19: #{tpu_custom_call.1} parent=1 // pred_check_branch
      %29 = sbr.rel (0) target = $region21
    $region20: #{tpu_custom_call.1} parent=1 // pred_region
      _
    $region21: #{tpu_custom_call.1} parent=1 // pred_fallthru
      _
    // Predicated region
    $region22: #{tpu_custom_call.1} parent=1 // pred_check
      _
    $region23: #{tpu_custom_call.1} parent=1 // pred_check_branch
      %31 = sbr.rel (0) target = $region25
    $region24: #{tpu_custom_call.1} parent=1 // pred_region
      _
    $region25: #{tpu_custom_call.1} parent=1 // pred_fallthru
      _
    // Predicated region
    $region26: #{tpu_custom_call.1} parent=1 // pred_check
      _
    $region27: #{tpu_custom_call.1} parent=1 // pred_check_branch
      %33 = sbr.rel (0) target = $region29
    $region28: #{tpu_custom_call.1} parent=1 // pred_region
      _
    $region29: #{tpu_custom_call.1} parent=1 // pred_fallthru
      _
    // Predicated region
    $region30: #{tpu_custom_call.1} parent=1 // pred_check
      _
    $region31: #{tpu_custom_call.1} parent=1 // pred_check_branch
      %35 = sbr.rel (0) target = $region33
    $region32: #{tpu_custom_call.1} parent=1 // pred_region
      _
    $region33: #{tpu_custom_call.1} parent=1 // pred_fallthru
      _
    // Predicated region
    $region34: #{tpu_custom_call.1} parent=1 // pred_check
      _
    $region35: #{tpu_custom_call.1} parent=1 // pred_check_branch
      %37 = sbr.rel (0) target = $region37
    $region36: #{tpu_custom_call.1} parent=1 // pred_region
      _
    $region37: #{tpu_custom_call.1} parent=1 // pred_fallthru
      _
    // Predicated region
    $region38: #{tpu_custom_call.1} parent=1 // pred_check
      _
    $region39: #{tpu_custom_call.1} parent=1 // pred_check_branch
      %39 = sbr.rel (0) target = $region41
    $region40: #{tpu_custom_call.1} parent=1 // pred_region
      _
    $region41: #{tpu_custom_call.1} parent=1 // pred_fallthru
      _
    // Predicated region
    $region42: #{tpu_custom_call.1} parent=1 // pred_check
      _
    $region43: #{tpu_custom_call.1} parent=1 // pred_check_branch
      %41 = sbr.rel (0) target = $region45
    $region44: #{tpu_custom_call.1} parent=1 // pred_region
      _
    $region45: #{tpu_custom_call.1} parent=1 // pred_fallthru
      _
    // Predicated region
    $region46: #{tpu_custom_call.1} parent=1 // pred_check
      _
    $region47: #{tpu_custom_call.1} parent=1 // pred_check_branch
      %43 = sbr.rel (0) target = $region49
    $region48: #{tpu_custom_call.1} parent=1 // pred_region
      _
    $region49: #{tpu_custom_call.1} parent=1 // pred_fallthru
      _
    // Predicated region
    $region50: #{tpu_custom_call.1} parent=1 // pred_check
      _
    $region51: #{tpu_custom_call.1} parent=1 // pred_check_branch
      %45 = sbr.rel (0) target = $region53
    $region52: #{tpu_custom_call.1} parent=1 // pred_region
      _
    $region53: #{tpu_custom_call.1} parent=1 // pred_fallthru
      _
    // Predicated region
    $region54: #{tpu_custom_call.1} parent=1 // pred_check
      _
    $region55: #{tpu_custom_call.1} parent=1 // pred_check_branch
      %47 = sbr.rel (0) target = $region57
    $region56: #{tpu_custom_call.1} parent=1 // pred_region
      _
    $region57: #{tpu_custom_call.1} parent=1 // pred_fallthru
      _
    %v49 = vld [vmem:[%s0] sm:$0xff]
    %v50 = vld [vmem:[%s2] sm:$0xf]
    %v51 = vld [vmem:[%s2 + $0x4] sm:$0xf]
    %v52 = vld [vmem:[%s2 + $0x8] sm:$0xf]
    %v53 = vld [vmem:[%s2 + $0xc] sm:$0xf]
    %v54 = vld [vmem:[%s2 + $0x10] sm:$0xf]
    %v55 = vld [vmem:[%s2 + $0x14] sm:$0xf]
    %v56 = vld [vmem:[%s2 + $0x18] sm:$0xf]
    %v57 = vld [vmem:[%s2 + $0x1c] sm:$0xf]
    %v58 = vld [vmem:[%s2 + $0x20] sm:$0xf]
    %v59 = vld [vmem:[%s2 + $0x24] sm:$0xf]
    %v60 = vld [vmem:[%s2 + $0x28] sm:$0xf]
    %v61 = vld [vmem:[%s2 + $0x2c] sm:$0xf]
    %v62 = vld [vmem:[%s2 + $0x30] sm:$0xf]
    %v63 = vld [vmem:[%s2 + $0x34] sm:$0xf]
    %v64 = vld [vmem:[%s2 + $0x38] sm:$0xf]
    %v65 = vld [vmem:[%s2 + $0x3c] sm:$0xf]
    %v66 = vld [vmem:[%s2 + $0x40] sm:$0xf]
    %v67 = vld [vmem:[%s2 + $0x44] sm:$0xf]
    %v68 = vld [vmem:[%s2 + $0x48] sm:$0xf]
    %v69 = vld [vmem:[%s2 + $0x4c] sm:$0xf]
    %v70 = vld [vmem:[%s2 + $0x50] sm:$0xf]
    %v71 = vld [vmem:[%s2 + $0x54] sm:$0xf]
    %v72 = vld [vmem:[%s2 + $0x58] sm:$0xf]
    %v73 = vld [vmem:[%s2 + $0x5c] sm:$0xf]
    %v74 = vld [vmem:[%s2 + $0x60] sm:$0xf]
    %v75 = vld [vmem:[%s2 + $0x64] sm:$0xf]
    %v76 = vld [vmem:[%s2 + $0x68] sm:$0xf]
    %v77 = vld [vmem:[%s2 + $0x6c] sm:$0xf]
    %v78 = vld [vmem:[%s2 + $0x70] sm:$0xf]
    %v79 = vld [vmem:[%s2 + $0x74] sm:$0xf]
    %v80 = vld [vmem:[%s2 + $0x78] sm:$0xf]
    %v81 = vld [vmem:[%s2 + $0x7c] sm:$0xf]
    %v82 = vld [vmem:[%s2 + $0x80] sm:$0xf]
    %v83 = vld [vmem:[%s2 + $0x84] sm:$0xf]
    %v84 = vld [vmem:[%s2 + $0x88] sm:$0xf]
    %v85 = vld [vmem:[%s2 + $0x8c] sm:$0xf]
    %v86 = vld [vmem:[%s2 + $0x90] sm:$0xf]
    %v87 = vld [vmem:[%s2 + $0x94] sm:$0xf]
    %v88 = vld [vmem:[%s2 + $0x98] sm:$0xf]
    %v89 = vld [vmem:[%s2 + $0x9c] sm:$0xf]
    %v90 = vld [vmem:[%s2 + $0xa0] sm:$0xf]
    %v91 = vld [vmem:[%s2 + $0xa4] sm:$0xf]
    %v92 = vld [vmem:[%s2 + $0xa8] sm:$0xf]
    %v93 = vld [vmem:[%s2 + $0xac] sm:$0xf]
    %v94 = vld [vmem:[%s2 + $0xb0] sm:$0xf]
    %v95 = vld [vmem:[%s2 + $0xb4] sm:$0xf]
    %v96 = vld [vmem:[%s2 + $0xb8] sm:$0xf]
    %v97 = vld [vmem:[%s2 + $0xbc] sm:$0xf]
    %v98 = vld [vmem:[%s2 + $0xc0] sm:$0xf]
    %v99 = vld [vmem:[%s2 + $0xc4] sm:$0xf]
    %v100 = vld [vmem:[%s2 + $0xc8] sm:$0xf]
    %v101 = vld [vmem:[%s2 + $0xcc] sm:$0xf]
    %v102 = vld [vmem:[%s2 + $0xd0] sm:$0xf]
    %v103 = vld [vmem:[%s2 + $0xd4] sm:$0xf]
    %v104 = vld [vmem:[%s2 + $0xd8] sm:$0xf]
    %v105 = vld [vmem:[%s2 + $0xdc] sm:$0xf]
    %v106 = vld [vmem:[%s2 + $0xe0] sm:$0xf]
    %v107 = vld [vmem:[%s2 + $0xe4] sm:$0xf]
    %v108 = vld [vmem:[%s2 + $0xe8] sm:$0xf]
    %v109 = vld [vmem:[%s2 + $0xec] sm:$0xf]
    %v110 = vld [vmem:[%s2 + $0xf0] sm:$0xf]
    %v111 = vld [vmem:[%s2 + $0xf4] sm:$0xf]
    %v112 = vld [vmem:[%s2 + $0xf8] sm:$0xf]
    %v113 = vld [vmem:[%s2 + $0xfc] sm:$0xf]
    %v114 = vld [vmem:[%s2 + $0x100] sm:$0xf]
    %v115 = vld [vmem:[%s2 + $0x104] sm:$0xf]
    %v116 = vld [vmem:[%s2 + $0x108] sm:$0xf]
    %v117 = vld [vmem:[%s2 + $0x10c] sm:$0xf]
    %v118 = vld [vmem:[%s2 + $0x110] sm:$0xf]
    %v119 = vld [vmem:[%s2 + $0x114] sm:$0xf]
    %v120 = vld [vmem:[%s2 + $0x118] sm:$0xf]
    %v121 = vld [vmem:[%s2 + $0x11c] sm:$0xf]
    %v122 = vld [vmem:[%s2 + $0x120] sm:$0xf]
    %v123 = vld [vmem:[%s2 + $0x124] sm:$0xf]
    %v124 = vld [vmem:[%s2 + $0x128] sm:$0xf]
    %v125 = vld [vmem:[%s2 + $0x12c] sm:$0xf]
    %v126 = vld [vmem:[%s2 + $0x130] sm:$0xf]
    %v127 = vld [vmem:[%s2 + $0x134] sm:$0xf]
    %v128 = vld [vmem:[%s2 + $0x138] sm:$0xf]
    %v129 = vld [vmem:[%s2 + $0x13c] sm:$0xf]
    %v130 = vld [vmem:[%s2 + $0x140] sm:$0xf]
    %v131 = vld [vmem:[%s2 + $0x144] sm:$0xf]
    %v132 = vld [vmem:[%s2 + $0x148] sm:$0xf]
    %v133 = vld [vmem:[%s2 + $0x14c] sm:$0xf]
    %v134 = vld [vmem:[%s2 + $0x150] sm:$0xf]
    %v135 = vld [vmem:[%s2 + $0x154] sm:$0xf]
    %v136 = vld [vmem:[%s2 + $0x158] sm:$0xf]
    %v137 = vld [vmem:[%s2 + $0x15c] sm:$0xf]
    %v138 = vld [vmem:[%s2 + $0x160] sm:$0xf]
    %v139 = vld [vmem:[%s2 + $0x164] sm:$0xf]
    %v140 = vld [vmem:[%s2 + $0x168] sm:$0xf]
    %v141 = vld [vmem:[%s2 + $0x16c] sm:$0xf]
    %v142 = vld [vmem:[%s2 + $0x170] sm:$0xf]
    %v143 = vld [vmem:[%s2 + $0x174] sm:$0xf]
    %v144 = vld [vmem:[%s2 + $0x178] sm:$0xf]
    %v145 = vld [vmem:[%s2 + $0x17c] sm:$0xf]
    %v146 = vld [vmem:[%s2 + $0x180] sm:$0xf]
    %v147 = vld [vmem:[%s2 + $0x184] sm:$0xf]
    %v148 = vld [vmem:[%s2 + $0x188] sm:$0xf]
    %v149 = vld [vmem:[%s2 + $0x18c] sm:$0xf]
    %v150 = vld [vmem:[%s2 + $0x190] sm:$0xf]
    %v151 = vld [vmem:[%s2 + $0x194] sm:$0xf]
    %v152 = vld [vmem:[%s2 + $0x198] sm:$0xf]
    %v153 = vld [vmem:[%s2 + $0x19c] sm:$0xf]
    %v154 = vld [vmem:[%s2 + $0x1a0] sm:$0xf]
    %v155 = vld [vmem:[%s2 + $0x1a4] sm:$0xf]
    %v156 = vld [vmem:[%s2 + $0x1a8] sm:$0xf]
    %v157 = vld [vmem:[%s2 + $0x1ac] sm:$0xf]
    %v158 = vld [vmem:[%s2 + $0x1b0] sm:$0xf]
    %v159 = vld [vmem:[%s2 + $0x1b4] sm:$0xf]
    %v160 = vld [vmem:[%s2 + $0x1b8] sm:$0xf]
    %v161 = vld [vmem:[%s2 + $0x1bc] sm:$0xf]
    %v162 = vld [vmem:[%s2 + $0x1c0] sm:$0xf]
    %v163 = vld [vmem:[%s2 + $0x1c4] sm:$0xf]
    %v164 = vld [vmem:[%s2 + $0x1c8] sm:$0xf]
    %v165 = vld [vmem:[%s2 + $0x1cc] sm:$0xf]
    %v166 = vld [vmem:[%s2 + $0x1d0] sm:$0xf]
    %v167 = vld [vmem:[%s2 + $0x1d4] sm:$0xf]
    %v168 = vld [vmem:[%s2 + $0x1d8] sm:$0xf]
    %v169 = vld [vmem:[%s2 + $0x1dc] sm:$0xf]
    %v170 = vld [vmem:[%s2 + $0x1e0] sm:$0xf]
    %v171 = vld [vmem:[%s2 + $0x1e4] sm:$0xf]
    %v172 = vld [vmem:[%s2 + $0x1e8] sm:$0xf]
    %v173 = vld [vmem:[%s2 + $0x1ec] sm:$0xf]
    %v174 = vld [vmem:[%s2 + $0x1f0] sm:$0xf]
    %v175 = vld [vmem:[%s2 + $0x1f4] sm:$0xf]
    %v176 = vld [vmem:[%s2 + $0x1f8] sm:$0xf]
    %v177 = vld [vmem:[%s2 + $0x1fc] sm:$0xf]
    %v178 = vld [vmem:[%s3] sm:$0x1]
    %v180 = vlaneseq
    %v181 = vshrl.u32 %v180, 7
    %v182 = vsub.s32 0, %v181
    %v183 = vrot.slane %v178, %v182
    %v186 = vcombine.high %v49, %v49
    %v188 = vunpack.c.l.s4 1966171168
    %v189 = vunpack.c.0.s8 %v188
    %v190 = vlaneseq
    %v191 = vshrl.u32 %v190, 7
    %v192 = vsub.s32 %v189, %v191
    %v193 = vrot.slane %v49, %v192
    %v195 = vunpack.c.l.s4 1966171168
    %v196 = vunpack.c.0.s8 %v195
    %v197 = vlaneseq
    %v198 = vshrl.u32 %v197, 7
    %v199 = vsub.s32 %v196, %v198
    %v200 = vrot.slane %v186, %v199
    %v201 = vcombine.high %v193, %v193
    %v202 = vcombine.high %v200, %v200
    %v204 = vunpack.c.l.s4 1966171168
    %v205 = vunpack.c.0.s8 %v204
    %v206 = vlaneseq
    %v207 = vshrl.u32 %v206, 7
    %v208 = vsub.s32 %v205, %v207
    %v209 = vrot.slane %v193, %v208
    %v211 = vunpack.c.l.s4 1966171168
    %v212 = vunpack.c.0.s8 %v211
    %v213 = vlaneseq
    %v214 = vshrl.u32 %v213, 7
    %v215 = vsub.s32 %v212, %v214
    %v216 = vrot.slane %v200, %v215
    %v218 = vunpack.c.l.s4 1966171168
    %v219 = vunpack.c.0.s8 %v218
    %v220 = vlaneseq
    %v221 = vshrl.u32 %v220, 7
    %v222 = vsub.s32 %v219, %v221
    %v223 = vrot.slane %v201, %v222
    %v225 = vunpack.c.l.s4 1966171168
    %v226 = vunpack.c.0.s8 %v225
    %v227 = vlaneseq
    %v228 = vshrl.u32 %v227, 7
    %v229 = vsub.s32 %v226, %v228
    %v230 = vrot.slane %v202, %v229
    %v231 = vcombine.high %v209, %v209
    %v232 = vcombine.high %v216, %v216
    %v233 = vcombine.high %v223, %v223
    %v234 = vcombine.high %v230, %v230
    %v371 = vunpack.c.l.b16 %v50
    %v372 = vunpack.c.l.b16 %v51
    %v373 = vunpack.c.l.b16 %v52
    %v374 = vunpack.c.l.b16 %v53
    %v375 = vunpack.c.l.b16 %v54
    %v376 = vunpack.c.l.b16 %v55
    %v377 = vunpack.c.l.b16 %v56
    %v378 = vunpack.c.l.b16 %v57
    %v379 = vunpack.c.l.b16 %v58
    %v380 = vunpack.c.l.b16 %v59
    %v381 = vunpack.c.l.b16 %v60
    %v382 = vunpack.c.l.b16 %v61
    %v383 = vunpack.c.l.b16 %v62
    %v384 = vunpack.c.l.b16 %v63
    %v385 = vunpack.c.l.b16 %v64
    %v386 = vunpack.c.l.b16 %v65
    %v387 = vunpack.c.l.b16 %v66
    %v388 = vunpack.c.l.b16 %v67
    %v389 = vunpack.c.l.b16 %v68
    %v390 = vunpack.c.l.b16 %v69
    %v391 = vunpack.c.l.b16 %v70
    %v392 = vunpack.c.l.b16 %v71
    %v393 = vunpack.c.l.b16 %v72
    %v394 = vunpack.c.l.b16 %v73
    %v395 = vunpack.c.l.b16 %v74
    %v396 = vunpack.c.l.b16 %v75
    %v397 = vunpack.c.l.b16 %v76
    %v398 = vunpack.c.l.b16 %v77
    %v399 = vunpack.c.l.b16 %v78
    %v400 = vunpack.c.l.b16 %v79
    %v401 = vunpack.c.l.b16 %v80
    %v402 = vunpack.c.l.b16 %v81
    %v403 = vunpack.c.l.b16 %v82
    %v404 = vunpack.c.l.b16 %v83
    %v405 = vunpack.c.l.b16 %v84
    %v406 = vunpack.c.l.b16 %v85
    %v407 = vunpack.c.l.b16 %v86
    %v408 = vunpack.c.l.b16 %v87
    %v409 = vunpack.c.l.b16 %v88
    %v410 = vunpack.c.l.b16 %v89
    %v411 = vunpack.c.l.b16 %v90
    %v412 = vunpack.c.l.b16 %v91
    %v413 = vunpack.c.l.b16 %v92
    %v414 = vunpack.c.l.b16 %v93
    %v415 = vunpack.c.l.b16 %v94
    %v416 = vunpack.c.l.b16 %v95
    %v417 = vunpack.c.l.b16 %v96
    %v418 = vunpack.c.l.b16 %v97
    %v419 = vunpack.c.l.b16 %v98
    %v420 = vunpack.c.l.b16 %v99
    %v421 = vunpack.c.l.b16 %v100
    %v422 = vunpack.c.l.b16 %v101
    %v423 = vunpack.c.l.b16 %v102
    %v424 = vunpack.c.l.b16 %v103
    %v425 = vunpack.c.l.b16 %v104
    %v426 = vunpack.c.l.b16 %v105
    %v427 = vunpack.c.l.b16 %v106
    %v428 = vunpack.c.l.b16 %v107
    %v429 = vunpack.c.l.b16 %v108
    %v430 = vunpack.c.l.b16 %v109
    %v431 = vunpack.c.l.b16 %v110
    %v432 = vunpack.c.l.b16 %v111
    %v433 = vunpack.c.l.b16 %v112
    %v434 = vunpack.c.l.b16 %v113
    %v435 = vunpack.c.l.b16 %v114
    %v436 = vunpack.c.l.b16 %v115
    %v437 = vunpack.c.l.b16 %v116
    %v438 = vunpack.c.l.b16 %v117
    %v439 = vunpack.c.l.b16 %v118
    %v440 = vunpack.c.l.b16 %v119
    %v441 = vunpack.c.l.b16 %v120
    %v442 = vunpack.c.l.b16 %v121
    %v443 = vunpack.c.l.b16 %v122
    %v444 = vunpack.c.l.b16 %v123
    %v445 = vunpack.c.l.b16 %v124
    %v446 = vunpack.c.l.b16 %v125
    %v447 = vunpack.c.l.b16 %v126
    %v448 = vunpack.c.l.b16 %v127
    %v449 = vunpack.c.l.b16 %v128
    %v450 = vunpack.c.l.b16 %v129
    %v451 = vunpack.c.l.b16 %v130
    %v452 = vunpack.c.l.b16 %v131
    %v453 = vunpack.c.l.b16 %v132
    %v454 = vunpack.c.l.b16 %v133
    %v455 = vunpack.c.l.b16 %v134
    %v456 = vunpack.c.l.b16 %v135
    %v457 = vunpack.c.l.b16 %v136
    %v458 = vunpack.c.l.b16 %v137
    %v459 = vunpack.c.l.b16 %v138
    %v460 = vunpack.c.l.b16 %v139
    %v461 = vunpack.c.l.b16 %v140
    %v462 = vunpack.c.l.b16 %v141
    %v463 = vunpack.c.l.b16 %v142
    %v464 = vunpack.c.l.b16 %v143
    %v465 = vunpack.c.l.b16 %v144
    %v466 = vunpack.c.l.b16 %v145
    %v467 = vunpack.c.l.b16 %v146
    %v468 = vunpack.c.l.b16 %v147
    %v469 = vunpack.c.l.b16 %v148
    %v470 = vunpack.c.l.b16 %v149
    %v471 = vunpack.c.l.b16 %v150
    %v472 = vunpack.c.l.b16 %v151
    %v473 = vunpack.c.l.b16 %v152
    %v474 = vunpack.c.l.b16 %v153
    %v475 = vunpack.c.l.b16 %v154
    %v476 = vunpack.c.l.b16 %v155
    %v477 = vunpack.c.l.b16 %v156
    %v478 = vunpack.c.l.b16 %v157
    %v479 = vunpack.c.l.b16 %v158
    %v480 = vunpack.c.l.b16 %v159
    %v481 = vunpack.c.l.b16 %v160
    %v482 = vunpack.c.l.b16 %v161
    %v483 = vunpack.c.l.b16 %v162
    %v484 = vunpack.c.l.b16 %v163
    %v485 = vunpack.c.l.b16 %v164
    %v486 = vunpack.c.l.b16 %v165
    %v487 = vunpack.c.l.b16 %v166
    %v488 = vunpack.c.l.b16 %v167
    %v489 = vunpack.c.l.b16 %v168
    %v490 = vunpack.c.l.b16 %v169
    %v491 = vunpack.c.l.b16 %v170
    %v492 = vunpack.c.l.b16 %v171
    %v493 = vunpack.c.l.b16 %v172
    %v494 = vunpack.c.l.b16 %v173
    %v495 = vunpack.c.l.b16 %v174
    %v496 = vunpack.c.l.b16 %v175
    %v497 = vunpack.c.l.b16 %v176
    %v498 = vunpack.c.l.b16 %v177
    %v499 = vpack.c.b16 %v372, %v371
    %v500 = vpack.c.b16 %v374, %v373
    %v501 = vpack.c.b16 %v376, %v375
    %v502 = vpack.c.b16 %v378, %v377
    %v503 = vpack.c.b16 %v380, %v379
    %v504 = vpack.c.b16 %v382, %v381
    %v505 = vpack.c.b16 %v384, %v383
    %v506 = vpack.c.b16 %v386, %v385
    %v507 = vpack.c.b16 %v388, %v387
    %v508 = vpack.c.b16 %v390, %v389
    %v509 = vpack.c.b16 %v392, %v391
    %v510 = vpack.c.b16 %v394, %v393
    %v511 = vpack.c.b16 %v396, %v395
    %v512 = vpack.c.b16 %v398, %v397
    %v513 = vpack.c.b16 %v400, %v399
    %v514 = vpack.c.b16 %v402, %v401
    %v515 = vpack.c.b16 %v404, %v403
    %v516 = vpack.c.b16 %v406, %v405
    %v517 = vpack.c.b16 %v408, %v407
    %v518 = vpack.c.b16 %v410, %v409
    %v519 = vpack.c.b16 %v412, %v411
    %v520 = vpack.c.b16 %v414, %v413
    %v521 = vpack.c.b16 %v416, %v415
    %v522 = vpack.c.b16 %v418, %v417
    %v523 = vpack.c.b16 %v420, %v419
    %v524 = vpack.c.b16 %v422, %v421
    %v525 = vpack.c.b16 %v424, %v423
    %v526 = vpack.c.b16 %v426, %v425
    %v527 = vpack.c.b16 %v428, %v427
    %v528 = vpack.c.b16 %v430, %v429
    %v529 = vpack.c.b16 %v432, %v431
    %v530 = vpack.c.b16 %v434, %v433
    %v531 = vpack.c.b16 %v436, %v435
    %v532 = vpack.c.b16 %v438, %v437
    %v533 = vpack.c.b16 %v440, %v439
    %v534 = vpack.c.b16 %v442, %v441
    %v535 = vpack.c.b16 %v444, %v443
    %v536 = vpack.c.b16 %v446, %v445
    %v537 = vpack.c.b16 %v448, %v447
    %v538 = vpack.c.b16 %v450, %v449
    %v539 = vpack.c.b16 %v452, %v451
    %v540 = vpack.c.b16 %v454, %v453
    %v541 = vpack.c.b16 %v456, %v455
    %v542 = vpack.c.b16 %v458, %v457
    %v543 = vpack.c.b16 %v460, %v459
    %v544 = vpack.c.b16 %v462, %v461
    %v545 = vpack.c.b16 %v464, %v463
    %v546 = vpack.c.b16 %v466, %v465
    %v547 = vpack.c.b16 %v468, %v467
    %v548 = vpack.c.b16 %v470, %v469
    %v549 = vpack.c.b16 %v472, %v471
    %v550 = vpack.c.b16 %v474, %v473
    %v551 = vpack.c.b16 %v476, %v475
    %v552 = vpack.c.b16 %v478, %v477
    %v553 = vpack.c.b16 %v480, %v479
    %v554 = vpack.c.b16 %v482, %v481
    %v555 = vpack.c.b16 %v484, %v483
    %v556 = vpack.c.b16 %v486, %v485
    %v557 = vpack.c.b16 %v488, %v487
    %v558 = vpack.c.b16 %v490, %v489
    %v559 = vpack.c.b16 %v492, %v491
    %v560 = vpack.c.b16 %v494, %v493
    %v561 = vpack.c.b16 %v496, %v495
    %v562 = vpack.c.b16 %v498, %v497
    %627 = vmatprep.subr.bf16.mxu0 0
    %628 = vmatpush1.bf16.msra.mxu0 %v499
    %629 = vmatprep.subr.bf16.mxu0 0
    %630 = vmatpush1.bf16.msra.mxu0 %v500
    %631 = vmatprep.subr.bf16.mxu0 0
    %632 = vmatpush1.bf16.msra.mxu0 %v501
    %633 = vmatprep.subr.bf16.mxu0 0
    %634 = vmatpush1.bf16.msra.mxu0 %v502
    %635 = vmatprep.subr.bf16.mxu0 0
    %636 = vmatpush1.bf16.msra.mxu0 %v503
    %637 = vmatprep.subr.bf16.mxu0 0
    %638 = vmatpush1.bf16.msra.mxu0 %v504
    %639 = vmatprep.subr.bf16.mxu0 0
    %640 = vmatpush1.bf16.msra.mxu0 %v505
    %641 = vmatprep.subr.bf16.mxu0 0
    %642 = vmatpush1.bf16.msra.mxu0 %v506
    %643 = vmatprep.subr.bf16.mxu0 0
    %644 = vmatpush1.bf16.msra.mxu0 %v507
    %645 = vmatprep.subr.bf16.mxu0 0
    %646 = vmatpush1.bf16.msra.mxu0 %v508
    %647 = vmatprep.subr.bf16.mxu0 0
    %648 = vmatpush1.bf16.msra.mxu0 %v509
    %649 = vmatprep.subr.bf16.mxu0 0
    %650 = vmatpush1.bf16.msra.mxu0 %v510
    %651 = vmatprep.subr.bf16.mxu0 0
    %652 = vmatpush1.bf16.msra.mxu0 %v511
    %653 = vmatprep.subr.bf16.mxu0 0
    %654 = vmatpush1.bf16.msra.mxu0 %v512
    %655 = vmatprep.subr.bf16.mxu0 0
    %656 = vmatpush1.bf16.msra.mxu0 %v513
    %657 = vmatprep.subr.bf16.mxu0 0
    %658 = vmatpush1.bf16.msra.mxu0 %v514
    %659 = vmatprep.mubr.bf16.mxu0 %v223
    %660 = vmatmul.mubr.bf16.gmra.mrb[0].mxu0 %v209
    %v661 = vpop.f32.mrb[0].mxu0
    %v662 = vadd.f32 %v183, %v661
    %v663 = vpop.f32.mrb[0].mxu0
    %v664 = vpop.f32.mrb[0].mxu0
    %v665 = vpop.f32.mrb[0].mxu0
    %666 = vdwg.mxu0
    %667 = vmatprep.subr.bf16.mxu0 0
    %668 = vmatpush1.bf16.msra.mxu0 %v515
    %669 = vmatprep.subr.bf16.mxu0 0
    %670 = vmatpush1.bf16.msra.mxu0 %v516
    %671 = vmatprep.subr.bf16.mxu0 0
    %672 = vmatpush1.bf16.msra.mxu0 %v517
    %673 = vmatprep.subr.bf16.mxu0 0
    %674 = vmatpush1.bf16.msra.mxu0 %v518
    %675 = vmatprep.subr.bf16.mxu0 0
    %676 = vmatpush1.bf16.msra.mxu0 %v519
    %677 = vmatprep.subr.bf16.mxu0 0
    %678 = vmatpush1.bf16.msra.mxu0 %v520
    %679 = vmatprep.subr.bf16.mxu0 0
    %680 = vmatpush1.bf16.msra.mxu0 %v521
    %681 = vmatprep.subr.bf16.mxu0 0
    %682 = vmatpush1.bf16.msra.mxu0 %v522
    %683 = vmatprep.subr.bf16.mxu0 0
    %684 = vmatpush1.bf16.msra.mxu0 %v523
    %685 = vmatprep.subr.bf16.mxu0 0
    %686 = vmatpush1.bf16.msra.mxu0 %v524
    %687 = vmatprep.subr.bf16.mxu0 0
    %688 = vmatpush1.bf16.msra.mxu0 %v525
    %689 = vmatprep.subr.bf16.mxu0 0
    %690 = vmatpush1.bf16.msra.mxu0 %v526
    %691 = vmatprep.subr.bf16.mxu0 0
    %692 = vmatpush1.bf16.msra.mxu0 %v527
    %693 = vmatprep.subr.bf16.mxu0 0
    %694 = vmatpush1.bf16.msra.mxu0 %v528
    %695 = vmatprep.subr.bf16.mxu0 0
    %696 = vmatpush1.bf16.msra.mxu0 %v529
    %697 = vmatprep.subr.bf16.mxu0 0
    %698 = vmatpush1.bf16.msra.mxu0 %v530
    %699 = vmatprep.mubr.bf16.mxu0 %v233
    %700 = vmatmul.mubr.bf16.gmra.mrb[0].mxu0 %v231
    %v701 = vpop.f32.mrb[0].mxu0
    %v702 = vadd.f32 %v662, %v701
    %v703 = vpop.f32.mrb[0].mxu0
    %v704 = vpop.f32.mrb[0].mxu0
    %v705 = vpop.f32.mrb[0].mxu0
    %706 = vdwg.mxu0
    %707 = vmatprep.subr.bf16.mxu0 0
    %708 = vmatpush1.bf16.msra.mxu0 %v531
    %709 = vmatprep.subr.bf16.mxu0 0
    %710 = vmatpush1.bf16.msra.mxu0 %v532
    %711 = vmatprep.subr.bf16.mxu0 0
    %712 = vmatpush1.bf16.msra.mxu0 %v533
    %713 = vmatprep.subr.bf16.mxu0 0
    %714 = vmatpush1.bf16.msra.mxu0 %v534
    %715 = vmatprep.subr.bf16.mxu0 0
    %716 = vmatpush1.bf16.msra.mxu0 %v535
    %717 = vmatprep.subr.bf16.mxu0 0
    %718 = vmatpush1.bf16.msra.mxu0 %v536
    %719 = vmatprep.subr.bf16.mxu0 0
    %720 = vmatpush1.bf16.msra.mxu0 %v537
    %721 = vmatprep.subr.bf16.mxu0 0
    %722 = vmatpush1.bf16.msra.mxu0 %v538
    %723 = vmatprep.subr.bf16.mxu0 0
    %724 = vmatpush1.bf16.msra.mxu0 %v539
    %725 = vmatprep.subr.bf16.mxu0 0
    %726 = vmatpush1.bf16.msra.mxu0 %v540
    %727 = vmatprep.subr.bf16.mxu0 0
    %728 = vmatpush1.bf16.msra.mxu0 %v541
    %729 = vmatprep.subr.bf16.mxu0 0
    %730 = vmatpush1.bf16.msra.mxu0 %v542
    %731 = vmatprep.subr.bf16.mxu0 0
    %732 = vmatpush1.bf16.msra.mxu0 %v543
    %733 = vmatprep.subr.bf16.mxu0 0
    %734 = vmatpush1.bf16.msra.mxu0 %v544
    %735 = vmatprep.subr.bf16.mxu0 0
    %736 = vmatpush1.bf16.msra.mxu0 %v545
    %737 = vmatprep.subr.bf16.mxu0 0
    %738 = vmatpush1.bf16.msra.mxu0 %v546
    %739 = vmatprep.mubr.bf16.mxu0 %v230
    %740 = vmatmul.mubr.bf16.gmra.mrb[0].mxu0 %v216
    %v741 = vpop.f32.mrb[0].mxu0
    %v742 = vadd.f32 %v702, %v741
    %v743 = vpop.f32.mrb[0].mxu0
    %v744 = vpop.f32.mrb[0].mxu0
    %v745 = vpop.f32.mrb[0].mxu0
    %746 = vdwg.mxu0
    %747 = vmatprep.subr.bf16.mxu0 0
    %748 = vmatpush1.bf16.msra.mxu0 %v547
    %749 = vmatprep.subr.bf16.mxu0 0
    %750 = vmatpush1.bf16.msra.mxu0 %v548
    %751 = vmatprep.subr.bf16.mxu0 0
    %752 = vmatpush1.bf16.msra.mxu0 %v549
    %753 = vmatprep.subr.bf16.mxu0 0
    %754 = vmatpush1.bf16.msra.mxu0 %v550
    %755 = vmatprep.subr.bf16.mxu0 0
    %756 = vmatpush1.bf16.msra.mxu0 %v551
    %757 = vmatprep.subr.bf16.mxu0 0
    %758 = vmatpush1.bf16.msra.mxu0 %v552
    %759 = vmatprep.subr.bf16.mxu0 0
    %760 = vmatpush1.bf16.msra.mxu0 %v553
    %761 = vmatprep.subr.bf16.mxu0 0
    %762 = vmatpush1.bf16.msra.mxu0 %v554
    %763 = vmatprep.subr.bf16.mxu0 0
    %764 = vmatpush1.bf16.msra.mxu0 %v555
    %765 = vmatprep.subr.bf16.mxu0 0
    %766 = vmatpush1.bf16.msra.mxu0 %v556
    %767 = vmatprep.subr.bf16.mxu0 0
    %768 = vmatpush1.bf16.msra.mxu0 %v557
    %769 = vmatprep.subr.bf16.mxu0 0
    %770 = vmatpush1.bf16.msra.mxu0 %v558
    %771 = vmatprep.subr.bf16.mxu0 0
    %772 = vmatpush1.bf16.msra.mxu0 %v559
    %773 = vmatprep.subr.bf16.mxu0 0
    %774 = vmatpush1.bf16.msra.mxu0 %v560
    %775 = vmatprep.subr.bf16.mxu0 0
    %776 = vmatpush1.bf16.msra.mxu0 %v561
    %777 = vmatprep.subr.bf16.mxu0 0
    %778 = vmatpush1.bf16.msra.mxu0 %v562
    %779 = vmatprep.mubr.bf16.mxu0 %v234
    %780 = vmatmul.mubr.bf16.gmra.mrb[0].mxu0 %v232
    %v781 = vpop.f32.mrb[0].mxu0
    %v782 = vadd.f32 %v742, %v781
    %v783 = vpop.f32.mrb[0].mxu0
    %v784 = vpop.f32.mrb[0].mxu0
    %v785 = vpop.f32.mrb[0].mxu0
    %786 = vdwg.mxu0
    %v787 = vld [vmem:[%s4] sm:$0xf]
    %v788 = vld [vmem:[%s4 + $0x4] sm:$0xf]
    %v789 = vld [vmem:[%s4 + $0x8] sm:$0xf]
    %v790 = vld [vmem:[%s4 + $0xc] sm:$0xf]
    %v791 = vld [vmem:[%s7] sm:$0x1]
    %v792 = vpack.c.bf16 %v782, %v782
    %v794 = vlaneseq
    %v795 = vshrl.u32 %v794, 7
    %v796 = vsub.s32 0, %v795
    %v797 = vrot.slane %v791, %v796
    %v803 = vunpack.c.l.b16 %v787
    %v804 = vunpack.c.l.b16 %v788
    %v805 = vunpack.c.l.b16 %v789
    %v806 = vunpack.c.l.b16 %v790
    %v807 = vpack.c.b16 %v804, %v803
    %v808 = vpack.c.b16 %v806, %v805
    %vm811 = vcmask 261120
    %v813 = vsel %vm811, %v792, 0
    %815 = vmatprep.subr.bf16.mxu0 0
    %816 = vmatpush1.bf16.msra.mxu0 %v807
    %817 = vmatprep.subr.bf16.mxu0 0
    %818 = vmatpush1.bf16.msra.mxu0 %v808
    %819 = vmatprep.subr.bf16.mxu0 0
    %820 = vmatpush1.bf16.msra.mxu0 0
    %821 = vmatprep.subr.bf16.mxu0 0
    %822 = vmatpush1.bf16.msra.mxu0 0
    %823 = vmatprep.subr.bf16.mxu0 0
    %824 = vmatpush1.bf16.msra.mxu0 0
    %825 = vmatprep.subr.bf16.mxu0 0
    %826 = vmatpush1.bf16.msra.mxu0 0
    %827 = vmatprep.subr.bf16.mxu0 0
    %828 = vmatpush1.bf16.msra.mxu0 0
    %829 = vmatprep.subr.bf16.mxu0 0
    %830 = vmatpush1.bf16.msra.mxu0 0
    %831 = vmatprep.subr.bf16.mxu0 0
    %832 = vmatpush1.bf16.msra.mxu0 0
    %833 = vmatprep.subr.bf16.mxu0 0
    %834 = vmatpush1.bf16.msra.mxu0 0
    %835 = vmatprep.subr.bf16.mxu0 0
    %836 = vmatpush1.bf16.msra.mxu0 0
    %837 = vmatprep.subr.bf16.mxu0 0
    %838 = vmatpush1.bf16.msra.mxu0 0
    %839 = vmatprep.subr.bf16.mxu0 0
    %840 = vmatpush1.bf16.msra.mxu0 0
    %841 = vmatprep.subr.bf16.mxu0 0
    %842 = vmatpush1.bf16.msra.mxu0 0
    %843 = vmatprep.subr.bf16.mxu0 0
    %844 = vmatpush1.bf16.msra.mxu0 0
    %845 = vmatprep.subr.bf16.mxu0 0
    %846 = vmatpush1.bf16.msra.mxu0 0
    %847 = vmatprep.mubr.bf16.mxu0 0
    %848 = vmatmul.mubr.bf16.gmra.mrb[0].mxu0 %v813
    %v849 = vpop.f32.mrb[0].mxu0
    %v850 = vadd.f32 %v797, %v849
    %v851 = vpop.f32.mrb[0].mxu0
    %v852 = vpop.f32.mrb[0].mxu0
    %v853 = vpop.f32.mrb[0].mxu0
    %854 = vdwg.mxu0
    %v855 = vmax.f32 %v850, 0.0
    %v856 = vld [vmem:[%s6] sm:$0xf]
    %v857 = vld [vmem:[%s6 + $0x4] sm:$0xf]
    %v858 = vld [vmem:[%s6 + $0x8] sm:$0xf]
    %v859 = vld [vmem:[%s6 + $0xc] sm:$0xf]
    %v860 = vld [vmem:[%s6 + $0x10] sm:$0xf]
    %v861 = vld [vmem:[%s6 + $0x14] sm:$0xf]
    %v862 = vld [vmem:[%s6 + $0x18] sm:$0xf]
    %v863 = vld [vmem:[%s6 + $0x1c] sm:$0xf]
    %v864 = vld [vmem:[%s6 + $0x20] sm:$0xf]
    %v865 = vld [vmem:[%s6 + $0x24] sm:$0xf]
    %v866 = vld [vmem:[%s6 + $0x28] sm:$0xf]
    %v867 = vld [vmem:[%s6 + $0x2c] sm:$0xf]
    %v868 = vld [vmem:[%s6 + $0x30] sm:$0xf]
    %v869 = vld [vmem:[%s6 + $0x34] sm:$0xf]
    %v870 = vld [vmem:[%s6 + $0x38] sm:$0xf]
    %v871 = vld [vmem:[%s6 + $0x3c] sm:$0xf]
    %s872 = scalar_lea.vmem %s7, 1
    %v873 = vld [vmem:[%s872] sm:$0x1]
    %v874 = vpack.c.bf16 %v855, %v855
    %v876 = vlaneseq
    %v877 = vshrl.u32 %v876, 7
    %v878 = vsub.s32 0, %v877
    %v879 = vrot.slane %v873, %v878
    %v897 = vunpack.c.l.b16 %v856
    %v898 = vunpack.c.l.b16 %v857
    %v899 = vunpack.c.l.b16 %v858
    %v900 = vunpack.c.l.b16 %v859
    %v901 = vunpack.c.l.b16 %v860
    %v902 = vunpack.c.l.b16 %v861
    %v903 = vunpack.c.l.b16 %v862
    %v904 = vunpack.c.l.b16 %v863
    %v905 = vunpack.c.l.b16 %v864
    %v906 = vunpack.c.l.b16 %v865
    %v907 = vunpack.c.l.b16 %v866
    %v908 = vunpack.c.l.b16 %v867
    %v909 = vunpack.c.l.b16 %v868
    %v910 = vunpack.c.l.b16 %v869
    %v911 = vunpack.c.l.b16 %v870
    %v912 = vunpack.c.l.b16 %v871
    %v913 = vpack.c.b16 %v898, %v897
    %v914 = vpack.c.b16 %v900, %v899
    %v915 = vpack.c.b16 %v902, %v901
    %v916 = vpack.c.b16 %v904, %v903
    %v917 = vpack.c.b16 %v906, %v905
    %v918 = vpack.c.b16 %v908, %v907
    %v919 = vpack.c.b16 %v910, %v909
    %v920 = vpack.c.b16 %v912, %v911
    %929 = vmatprep.subr.bf16.mxu0 0
    %930 = vmatpush1.bf16.msra.mxu0 %v913
    %931 = vmatprep.subr.bf16.mxu0 0
    %932 = vmatpush1.bf16.msra.mxu0 %v914
    %933 = vmatprep.subr.bf16.mxu0 0
    %934 = vmatpush1.bf16.msra.mxu0 %v915
    %935 = vmatprep.subr.bf16.mxu0 0
    %936 = vmatpush1.bf16.msra.mxu0 %v916
    %937 = vmatprep.subr.bf16.mxu0 0
    %938 = vmatpush1.bf16.msra.mxu0 %v917
    %939 = vmatprep.subr.bf16.mxu0 0
    %940 = vmatpush1.bf16.msra.mxu0 %v918
    %941 = vmatprep.subr.bf16.mxu0 0
    %942 = vmatpush1.bf16.msra.mxu0 %v919
    %943 = vmatprep.subr.bf16.mxu0 0
    %944 = vmatpush1.bf16.msra.mxu0 %v920
    %945 = vmatprep.subr.bf16.mxu0 0
    %946 = vmatpush1.bf16.msra.mxu0 0
    %947 = vmatprep.subr.bf16.mxu0 0
    %948 = vmatpush1.bf16.msra.mxu0 0
    %949 = vmatprep.subr.bf16.mxu0 0
    %950 = vmatpush1.bf16.msra.mxu0 0
    %951 = vmatprep.subr.bf16.mxu0 0
    %952 = vmatpush1.bf16.msra.mxu0 0
    %953 = vmatprep.subr.bf16.mxu0 0
    %954 = vmatpush1.bf16.msra.mxu0 0
    %955 = vmatprep.subr.bf16.mxu0 0
    %956 = vmatpush1.bf16.msra.mxu0 0
    %957 = vmatprep.subr.bf16.mxu0 0
    %958 = vmatpush1.bf16.msra.mxu0 0
    %959 = vmatprep.subr.bf16.mxu0 0
    %960 = vmatpush1.bf16.msra.mxu0 0
    %961 = vmatprep.mubr.bf16.mxu0 0
    %962 = vmatmul.mubr.bf16.gmra.mrb[0].mxu0 %v874
    %v963 = vpop.f32.mrb[0].mxu0
    %v964 = vadd.f32 %v879, %v963
    %v965 = vpop.f32.mrb[0].mxu0
    %v966 = vpop.f32.mrb[0].mxu0
    %v967 = vpop.f32.mrb[0].mxu0
    %968 = vdwg.mxu0
    %v969 = vmax.f32 %v964, 0.0
    %s970 = scalar_lea.vmem %s6, 64
    %v971 = vld [vmem:[%s970] sm:$0xf]
    %v972 = vld [vmem:[%s970 + $0x4] sm:$0xf]
    %v973 = vld [vmem:[%s970 + $0x8] sm:$0xf]
    %v974 = vld [vmem:[%s970 + $0xc] sm:$0xf]
    %v975 = vld [vmem:[%s970 + $0x10] sm:$0xf]
    %v976 = vld [vmem:[%s970 + $0x14] sm:$0xf]
    %v977 = vld [vmem:[%s970 + $0x18] sm:$0xf]
    %v978 = vld [vmem:[%s970 + $0x1c] sm:$0xf]
    %v979 = vld [vmem:[%s970 + $0x20] sm:$0xf]
    %v980 = vld [vmem:[%s970 + $0x24] sm:$0xf]
    %v981 = vld [vmem:[%s970 + $0x28] sm:$0xf]
    %v982 = vld [vmem:[%s970 + $0x2c] sm:$0xf]
    %v983 = vld [vmem:[%s970 + $0x30] sm:$0xf]
    %v984 = vld [vmem:[%s970 + $0x34] sm:$0xf]
    %v985 = vld [vmem:[%s970 + $0x38] sm:$0xf]
    %v986 = vld [vmem:[%s970 + $0x3c] sm:$0xf]
    %s987 = scalar_lea.vmem %s7, 2
    %v988 = vld [vmem:[%s987] sm:$0x1]
    %v989 = vpack.c.bf16 %v969, %v969
    %v991 = vlaneseq
    %v992 = vshrl.u32 %v991, 7
    %v993 = vsub.s32 0, %v992
    %v994 = vrot.slane %v988, %v993
    %v1012 = vunpack.c.l.b16 %v971
    %v1013 = vunpack.c.l.b16 %v972
    %v1014 = vunpack.c.l.b16 %v973
    %v1015 = vunpack.c.l.b16 %v974
    %v1016 = vunpack.c.l.b16 %v975
    %v1017 = vunpack.c.l.b16 %v976
    %v1018 = vunpack.c.l.b16 %v977
    %v1019 = vunpack.c.l.b16 %v978
    %v1020 = vunpack.c.l.b16 %v979
    %v1021 = vunpack.c.l.b16 %v980
    %v1022 = vunpack.c.l.b16 %v981
    %v1023 = vunpack.c.l.b16 %v982
    %v1024 = vunpack.c.l.b16 %v983
    %v1025 = vunpack.c.l.b16 %v984
    %v1026 = vunpack.c.l.b16 %v985
    %v1027 = vunpack.c.l.b16 %v986
    %v1028 = vpack.c.b16 %v1013, %v1012
    %v1029 = vpack.c.b16 %v1015, %v1014
    %v1030 = vpack.c.b16 %v1017, %v1016
    %v1031 = vpack.c.b16 %v1019, %v1018
    %v1032 = vpack.c.b16 %v1021, %v1020
    %v1033 = vpack.c.b16 %v1023, %v1022
    %v1034 = vpack.c.b16 %v1025, %v1024
    %v1035 = vpack.c.b16 %v1027, %v1026
    %1044 = vmatprep.subr.bf16.mxu0 0
    %1045 = vmatpush1.bf16.msra.mxu0 %v1028
    %1046 = vmatprep.subr.bf16.mxu0 0
    %1047 = vmatpush1.bf16.msra.mxu0 %v1029
    %1048 = vmatprep.subr.bf16.mxu0 0
    %1049 = vmatpush1.bf16.msra.mxu0 %v1030
    %1050 = vmatprep.subr.bf16.mxu0 0
    %1051 = vmatpush1.bf16.msra.mxu0 %v1031
    %1052 = vmatprep.subr.bf16.mxu0 0
    %1053 = vmatpush1.bf16.msra.mxu0 %v1032
    %1054 = vmatprep.subr.bf16.mxu0 0
    %1055 = vmatpush1.bf16.msra.mxu0 %v1033
    %1056 = vmatprep.subr.bf16.mxu0 0
    %1057 = vmatpush1.bf16.msra.mxu0 %v1034
    %1058 = vmatprep.subr.bf16.mxu0 0
    %1059 = vmatpush1.bf16.msra.mxu0 %v1035
    %1060 = vmatprep.subr.bf16.mxu0 0
    %1061 = vmatpush1.bf16.msra.mxu0 0
    %1062 = vmatprep.subr.bf16.mxu0 0
    %1063 = vmatpush1.bf16.msra.mxu0 0
    %1064 = vmatprep.subr.bf16.mxu0 0
    %1065 = vmatpush1.bf16.msra.mxu0 0
    %1066 = vmatprep.subr.bf16.mxu0 0
    %1067 = vmatpush1.bf16.msra.mxu0 0
    %1068 = vmatprep.subr.bf16.mxu0 0
    %1069 = vmatpush1.bf16.msra.mxu0 0
    %1070 = vmatprep.subr.bf16.mxu0 0
    %1071 = vmatpush1.bf16.msra.mxu0 0
    %1072 = vmatprep.subr.bf16.mxu0 0
    %1073 = vmatpush1.bf16.msra.mxu0 0
    %1074 = vmatprep.subr.bf16.mxu0 0
    %1075 = vmatpush1.bf16.msra.mxu0 0
    %1076 = vmatprep.mubr.bf16.mxu0 0
    %1077 = vmatmul.mubr.bf16.gmra.mrb[0].mxu0 %v989
    %v1078 = vpop.f32.mrb[0].mxu0
    %v1079 = vadd.f32 %v994, %v1078
    %v1080 = vpop.f32.mrb[0].mxu0
    %v1081 = vpop.f32.mrb[0].mxu0
    %v1082 = vpop.f32.mrb[0].mxu0
    %1083 = vdwg.mxu0
    %v1084 = vmax.f32 %v1079, 0.0
    %v1085 = vpack.c.bf16 %v1084, %v1084
    %v1086 = vld [vmem:[%s8] sm:$0xf]
    %v1087 = vld [vmem:[%s8 + $0x4] sm:$0xf]
    %v1088 = vld [vmem:[%s8 + $0x8] sm:$0xf]
    %v1089 = vld [vmem:[%s8 + $0xc] sm:$0xf]
    %v1090 = vld [vmem:[%s8 + $0x10] sm:$0xf]
    %v1091 = vld [vmem:[%s8 + $0x14] sm:$0xf]
    %v1092 = vld [vmem:[%s8 + $0x18] sm:$0xf]
    %v1093 = vld [vmem:[%s8 + $0x1c] sm:$0xf]
    %v1094 = vld [vmem:[%s8 + $0x20] sm:$0xf]
    %v1095 = vld [vmem:[%s8 + $0x24] sm:$0xf]
    %v1096 = vld [vmem:[%s8 + $0x28] sm:$0xf]
    %v1097 = vld [vmem:[%s8 + $0x2c] sm:$0xf]
    %v1098 = vld [vmem:[%s8 + $0x30] sm:$0xf]
    %v1099 = vld [vmem:[%s8 + $0x34] sm:$0xf]
    %v1100 = vld [vmem:[%s8 + $0x38] sm:$0xf]
    %v1101 = vld [vmem:[%s8 + $0x3c] sm:$0xf]
    %v1102 = vld [vmem:[%s9] sm:$0xf]
    %v1103 = vld [vmem:[%s9 + $0x4] sm:$0xf]
    %v1104 = vld [vmem:[%s9 + $0x8] sm:$0xf]
    %v1105 = vld [vmem:[%s9 + $0xc] sm:$0xf]
    %v1110 = vunpack.c.l.b16 %v1102
    %v1111 = vunpack.c.l.b16 %v1103
    %v1112 = vunpack.c.l.b16 %v1104
    %v1113 = vunpack.c.l.b16 %v1105
    %v1114 = vpack.c.b16 %v1111, %v1110
    %v1115 = vpack.c.b16 %v1113, %v1112
    %1118 = vmatprep.subr.bf16.mxu0 0
    %1119 = vmatpush1.bf16.msra.mxu0 %v1114
    %1120 = vmatprep.subr.bf16.mxu0 0
    %1121 = vmatpush1.bf16.msra.mxu0 %v1115
    %1122 = vmatprep.subr.bf16.mxu0 0
    %1123 = vmatpush1.bf16.msra.mxu0 0
    %1124 = vmatprep.subr.bf16.mxu0 0
    %1125 = vmatpush1.bf16.msra.mxu0 0
    %1126 = vmatprep.subr.bf16.mxu0 0
    %1127 = vmatpush1.bf16.msra.mxu0 0
    %1128 = vmatprep.subr.bf16.mxu0 0
    %1129 = vmatpush1.bf16.msra.mxu0 0
    %1130 = vmatprep.subr.bf16.mxu0 0
    %1131 = vmatpush1.bf16.msra.mxu0 0
    %1132 = vmatprep.subr.bf16.mxu0 0
    %1133 = vmatpush1.bf16.msra.mxu0 0
    %1134 = vmatprep.subr.bf16.mxu0 0
    %1135 = vmatpush1.bf16.msra.mxu0 0
    %1136 = vmatprep.subr.bf16.mxu0 0
    %1137 = vmatpush1.bf16.msra.mxu0 0
    %1138 = vmatprep.subr.bf16.mxu0 0
    %1139 = vmatpush1.bf16.msra.mxu0 0
    %1140 = vmatprep.subr.bf16.mxu0 0
    %1141 = vmatpush1.bf16.msra.mxu0 0
    %1142 = vmatprep.subr.bf16.mxu0 0
    %1143 = vmatpush1.bf16.msra.mxu0 0
    %1144 = vmatprep.subr.bf16.mxu0 0
    %1145 = vmatpush1.bf16.msra.mxu0 0
    %1146 = vmatprep.subr.bf16.mxu0 0
    %1147 = vmatpush1.bf16.msra.mxu0 0
    %1148 = vmatprep.subr.bf16.mxu0 0
    %1149 = vmatpush1.bf16.msra.mxu0 0
    %1150 = vmatprep.mubr.bf16.mxu0 0
    %1151 = vmatmul.mubr.bf16.gmra.mrb[0].mxu0 %v813
    %v1152 = vpop.f32.mrb[0].mxu0
    %v1153 = vadd.f32 0.0, %v1152
    %v1154 = vpop.f32.mrb[0].mxu0
    %v1155 = vpop.f32.mrb[0].mxu0
    %v1156 = vpop.f32.mrb[0].mxu0
    %1157 = vdwg.mxu0
    %v1174 = vunpack.c.l.b16 %v1086
    %v1175 = vunpack.c.l.b16 %v1087
    %v1176 = vunpack.c.l.b16 %v1088
    %v1177 = vunpack.c.l.b16 %v1089
    %v1178 = vunpack.c.l.b16 %v1090
    %v1179 = vunpack.c.l.b16 %v1091
    %v1180 = vunpack.c.l.b16 %v1092
    %v1181 = vunpack.c.l.b16 %v1093
    %v1182 = vunpack.c.l.b16 %v1094
    %v1183 = vunpack.c.l.b16 %v1095
    %v1184 = vunpack.c.l.b16 %v1096
    %v1185 = vunpack.c.l.b16 %v1097
    %v1186 = vunpack.c.l.b16 %v1098
    %v1187 = vunpack.c.l.b16 %v1099
    %v1188 = vunpack.c.l.b16 %v1100
    %v1189 = vunpack.c.l.b16 %v1101
    %v1190 = vpack.c.b16 %v1175, %v1174
    %v1191 = vpack.c.b16 %v1177, %v1176
    %v1192 = vpack.c.b16 %v1179, %v1178
    %v1193 = vpack.c.b16 %v1181, %v1180
    %v1194 = vpack.c.b16 %v1183, %v1182
    %v1195 = vpack.c.b16 %v1185, %v1184
    %v1196 = vpack.c.b16 %v1187, %v1186
    %v1197 = vpack.c.b16 %v1189, %v1188
    %1206 = vmatprep.subr.bf16.mxu0 0
    %1207 = vmatpush1.bf16.msra.mxu0 %v1190
    %1208 = vmatprep.subr.bf16.mxu0 0
    %1209 = vmatpush1.bf16.msra.mxu0 %v1191
    %1210 = vmatprep.subr.bf16.mxu0 0
    %1211 = vmatpush1.bf16.msra.mxu0 %v1192
    %1212 = vmatprep.subr.bf16.mxu0 0
    %1213 = vmatpush1.bf16.msra.mxu0 %v1193
    %1214 = vmatprep.subr.bf16.mxu0 0
    %1215 = vmatpush1.bf16.msra.mxu0 %v1194
    %1216 = vmatprep.subr.bf16.mxu0 0
    %1217 = vmatpush1.bf16.msra.mxu0 %v1195
    %1218 = vmatprep.subr.bf16.mxu0 0
    %1219 = vmatpush1.bf16.msra.mxu0 %v1196
    %1220 = vmatprep.subr.bf16.mxu0 0
    %1221 = vmatpush1.bf16.msra.mxu0 %v1197
    %1222 = vmatprep.subr.bf16.mxu0 0
    %1223 = vmatpush1.bf16.msra.mxu0 0
    %1224 = vmatprep.subr.bf16.mxu0 0
    %1225 = vmatpush1.bf16.msra.mxu0 0
    %1226 = vmatprep.subr.bf16.mxu0 0
    %1227 = vmatpush1.bf16.msra.mxu0 0
    %1228 = vmatprep.subr.bf16.mxu0 0
    %1229 = vmatpush1.bf16.msra.mxu0 0
    %1230 = vmatprep.subr.bf16.mxu0 0
    %1231 = vmatpush1.bf16.msra.mxu0 0
    %1232 = vmatprep.subr.bf16.mxu0 0
    %1233 = vmatpush1.bf16.msra.mxu0 0
    %1234 = vmatprep.subr.bf16.mxu0 0
    %1235 = vmatpush1.bf16.msra.mxu0 0
    %1236 = vmatprep.subr.bf16.mxu0 0
    %1237 = vmatpush1.bf16.msra.mxu0 0
    %1238 = vmatprep.mubr.bf16.mxu0 0
    %1239 = vmatmul.mubr.bf16.gmra.mrb[0].mxu0 %v1085
    %v1240 = vpop.f32.mrb[0].mxu0
    %v1241 = vadd.f32 %v1153, %v1240
    %v1242 = vpop.f32.mrb[0].mxu0
    %v1243 = vpop.f32.mrb[0].mxu0
    %v1244 = vpop.f32.mrb[0].mxu0
    %1245 = vdwg.mxu0
    %v1246 = vld [vmem:[%s10] sm:$0x1]
    %v1248 = vlaneseq
    %v1249 = vshrl.u32 %v1248, 7
    %v1250 = vsub.s32 0, %v1249
    %v1251 = vrot.slane %v1246, %v1250
    %v1253 = vadd.f32 %v1241, %v1251
    %s1254 = scalar_lea.vmem %s8, 64
    %v1255 = vld [vmem:[%s1254] sm:$0xf]
    %v1256 = vld [vmem:[%s1254 + $0x4] sm:$0xf]
    %v1257 = vld [vmem:[%s1254 + $0x8] sm:$0xf]
    %v1258 = vld [vmem:[%s1254 + $0xc] sm:$0xf]
    %v1259 = vld [vmem:[%s1254 + $0x10] sm:$0xf]
    %v1260 = vld [vmem:[%s1254 + $0x14] sm:$0xf]
    %v1261 = vld [vmem:[%s1254 + $0x18] sm:$0xf]
    %v1262 = vld [vmem:[%s1254 + $0x1c] sm:$0xf]
    %v1263 = vld [vmem:[%s1254 + $0x20] sm:$0xf]
    %v1264 = vld [vmem:[%s1254 + $0x24] sm:$0xf]
    %v1265 = vld [vmem:[%s1254 + $0x28] sm:$0xf]
    %v1266 = vld [vmem:[%s1254 + $0x2c] sm:$0xf]
    %v1267 = vld [vmem:[%s1254 + $0x30] sm:$0xf]
    %v1268 = vld [vmem:[%s1254 + $0x34] sm:$0xf]
    %v1269 = vld [vmem:[%s1254 + $0x38] sm:$0xf]
    %v1270 = vld [vmem:[%s1254 + $0x3c] sm:$0xf]
    %s1271 = scalar_lea.vmem %s9, 16
    %v1272 = vld [vmem:[%s1271] sm:$0xf]
    %v1273 = vld [vmem:[%s1271 + $0x4] sm:$0xf]
    %v1274 = vld [vmem:[%s1271 + $0x8] sm:$0xf]
    %v1275 = vld [vmem:[%s1271 + $0xc] sm:$0xf]
    %v1280 = vunpack.c.l.b16 %v1272
    %v1281 = vunpack.c.l.b16 %v1273
    %v1282 = vunpack.c.l.b16 %v1274
    %v1283 = vunpack.c.l.b16 %v1275
    %v1284 = vpack.c.b16 %v1281, %v1280
    %v1285 = vpack.c.b16 %v1283, %v1282
    %1288 = vmatprep.subr.bf16.mxu0 0
    %1289 = vmatpush1.bf16.msra.mxu0 %v1284
    %1290 = vmatprep.subr.bf16.mxu0 0
    %1291 = vmatpush1.bf16.msra.mxu0 %v1285
    %1292 = vmatprep.subr.bf16.mxu0 0
    %1293 = vmatpush1.bf16.msra.mxu0 0
    %1294 = vmatprep.subr.bf16.mxu0 0
    %1295 = vmatpush1.bf16.msra.mxu0 0
    %1296 = vmatprep.subr.bf16.mxu0 0
    %1297 = vmatpush1.bf16.msra.mxu0 0
    %1298 = vmatprep.subr.bf16.mxu0 0
    %1299 = vmatpush1.bf16.msra.mxu0 0
    %1300 = vmatprep.subr.bf16.mxu0 0
    %1301 = vmatpush1.bf16.msra.mxu0 0
    %1302 = vmatprep.subr.bf16.mxu0 0
    %1303 = vmatpush1.bf16.msra.mxu0 0
    %1304 = vmatprep.subr.bf16.mxu0 0
    %1305 = vmatpush1.bf16.msra.mxu0 0
    %1306 = vmatprep.subr.bf16.mxu0 0
    %1307 = vmatpush1.bf16.msra.mxu0 0
    %1308 = vmatprep.subr.bf16.mxu0 0
    %1309 = vmatpush1.bf16.msra.mxu0 0
    %1310 = vmatprep.subr.bf16.mxu0 0
    %1311 = vmatpush1.bf16.msra.mxu0 0
    %1312 = vmatprep.subr.bf16.mxu0 0
    %1313 = vmatpush1.bf16.msra.mxu0 0
    %1314 = vmatprep.subr.bf16.mxu0 0
    %1315 = vmatpush1.bf16.msra.mxu0 0
    %1316 = vmatprep.subr.bf16.mxu0 0
    %1317 = vmatpush1.bf16.msra.mxu0 0
    %1318 = vmatprep.subr.bf16.mxu0 0
    %1319 = vmatpush1.bf16.msra.mxu0 0
    %1320 = vmatprep.mubr.bf16.mxu0 0
    %1321 = vmatmul.mubr.bf16.gmra.mrb[0].mxu0 %v813
    %v1322 = vpop.f32.mrb[0].mxu0
    %v1323 = vadd.f32 0.0, %v1322
    %v1324 = vpop.f32.mrb[0].mxu0
    %v1325 = vpop.f32.mrb[0].mxu0
    %v1326 = vpop.f32.mrb[0].mxu0
    %1327 = vdwg.mxu0
    %v1344 = vunpack.c.l.b16 %v1255
    %v1345 = vunpack.c.l.b16 %v1256
    %v1346 = vunpack.c.l.b16 %v1257
    %v1347 = vunpack.c.l.b16 %v1258
    %v1348 = vunpack.c.l.b16 %v1259
    %v1349 = vunpack.c.l.b16 %v1260
    %v1350 = vunpack.c.l.b16 %v1261
    %v1351 = vunpack.c.l.b16 %v1262
    %v1352 = vunpack.c.l.b16 %v1263
    %v1353 = vunpack.c.l.b16 %v1264
    %v1354 = vunpack.c.l.b16 %v1265
    %v1355 = vunpack.c.l.b16 %v1266
    %v1356 = vunpack.c.l.b16 %v1267
    %v1357 = vunpack.c.l.b16 %v1268
    %v1358 = vunpack.c.l.b16 %v1269
    %v1359 = vunpack.c.l.b16 %v1270
    %v1360 = vpack.c.b16 %v1345, %v1344
    %v1361 = vpack.c.b16 %v1347, %v1346
    %v1362 = vpack.c.b16 %v1349, %v1348
    %v1363 = vpack.c.b16 %v1351, %v1350
    %v1364 = vpack.c.b16 %v1353, %v1352
    %v1365 = vpack.c.b16 %v1355, %v1354
    %v1366 = vpack.c.b16 %v1357, %v1356
    %v1367 = vpack.c.b16 %v1359, %v1358
    %1376 = vmatprep.subr.bf16.mxu0 0
    %1377 = vmatpush1.bf16.msra.mxu0 %v1360
    %1378 = vmatprep.subr.bf16.mxu0 0
    %1379 = vmatpush1.bf16.msra.mxu0 %v1361
    %1380 = vmatprep.subr.bf16.mxu0 0
    %1381 = vmatpush1.bf16.msra.mxu0 %v1362
    %1382 = vmatprep.subr.bf16.mxu0 0
    %1383 = vmatpush1.bf16.msra.mxu0 %v1363
    %1384 = vmatprep.subr.bf16.mxu0 0
    %1385 = vmatpush1.bf16.msra.mxu0 %v1364
    %1386 = vmatprep.subr.bf16.mxu0 0
    %1387 = vmatpush1.bf16.msra.mxu0 %v1365
    %1388 = vmatprep.subr.bf16.mxu0 0
    %1389 = vmatpush1.bf16.msra.mxu0 %v1366
    %1390 = vmatprep.subr.bf16.mxu0 0
    %1391 = vmatpush1.bf16.msra.mxu0 %v1367
    %1392 = vmatprep.subr.bf16.mxu0 0
    %1393 = vmatpush1.bf16.msra.mxu0 0
    %1394 = vmatprep.subr.bf16.mxu0 0
    %1395 = vmatpush1.bf16.msra.mxu0 0
    %1396 = vmatprep.subr.bf16.mxu0 0
    %1397 = vmatpush1.bf16.msra.mxu0 0
    %1398 = vmatprep.subr.bf16.mxu0 0
    %1399 = vmatpush1.bf16.msra.mxu0 0
    %1400 = vmatprep.subr.bf16.mxu0 0
    %1401 = vmatpush1.bf16.msra.mxu0 0
    %1402 = vmatprep.subr.bf16.mxu0 0
    %1403 = vmatpush1.bf16.msra.mxu0 0
    %1404 = vmatprep.subr.bf16.mxu0 0
    %1405 = vmatpush1.bf16.msra.mxu0 0
    %1406 = vmatprep.subr.bf16.mxu0 0
    %1407 = vmatpush1.bf16.msra.mxu0 0
    %1408 = vmatprep.mubr.bf16.mxu0 0
    %1409 = vmatmul.mubr.bf16.gmra.mrb[0].mxu0 %v1085
    %v1410 = vpop.f32.mrb[0].mxu0
    %v1411 = vadd.f32 %v1323, %v1410
    %v1412 = vpop.f32.mrb[0].mxu0
    %v1413 = vpop.f32.mrb[0].mxu0
    %v1414 = vpop.f32.mrb[0].mxu0
    %1415 = vdwg.mxu0
    %s1416 = scalar_lea.vmem %s10, 1
    %v1417 = vld [vmem:[%s1416] sm:$0x1]
    %v1419 = vlaneseq
    %v1420 = vshrl.u32 %v1419, 7
    %v1421 = vsub.s32 0, %v1420
    %v1422 = vrot.slane %v1417, %v1421
    %v1424 = vadd.f32 %v1411, %v1422
    %v1425 = vtanh.pop %v1424
    %v1426 = vmul.f32 %v1425, 5.0
    %v1427 = vmul.f32 %v1426, 1.442695
    %v1428 = vpow.pop %v1427
    %v1429 = vld [vmem:[%s1] sm:$0x3]
    %v1430 = vmul.f32 %v1428, %v1429
    %v1431 = vadd.f32 %v1253, %v1430
    %v1432 = vmul.f32 %v1253, %v1253
    %v1433 = vmul.f32 %v1428, %v1428
    %v1434 = vadd.f32 %v1432, %v1433
    %v1435 = vmul.f32 %v1426, 2.0
    %v1436 = vsub.f32 %v1434, %v1435
    %v1437 = vsub.f32 %v1436, 1.0
    %vm1438 = vcmask 254976
    %v1439 = vsel %vm1438, %v1437, 0.0
    %1440 = vadd.xlane.f32.xlu0 %v1439
    %v1441 = vpop.xlane.xlu0 %1440
    %v1442 = vmul.f32 %v1441, 0.5
    %v1443 = vld [vmem:[%s5] sm:$0xf]
    %v1444 = vld [vmem:[%s5 + $0x4] sm:$0xf]
    %v1445 = vld [vmem:[%s5 + $0x8] sm:$0xf]
    %v1446 = vld [vmem:[%s5 + $0xc] sm:$0xf]
    %s1447 = scalar_lea.vmem %s7, 3
    %v1448 = vld [vmem:[%s1447] sm:$0x1]
    %v1449 = vpack.c.bf16 %v1431, %v1431
    %v1451 = vlaneseq
    %v1452 = vshrl.u32 %v1451, 7
    %v1453 = vsub.s32 0, %v1452
    %v1454 = vrot.slane %v1448, %v1453
    %v1460 = vunpack.c.l.b16 %v1443
    %v1461 = vunpack.c.l.b16 %v1444
    %v1462 = vunpack.c.l.b16 %v1445
    %v1463 = vunpack.c.l.b16 %v1446
    %v1464 = vpack.c.b16 %v1461, %v1460
    %v1465 = vpack.c.b16 %v1463, %v1462
    %v1469 = vsel %vm811, %v1449, 0
    %1471 = vmatprep.subr.bf16.mxu0 0
    %1472 = vmatpush1.bf16.msra.mxu0 %v1464
    %1473 = vmatprep.subr.bf16.mxu0 0
    %1474 = vmatpush1.bf16.msra.mxu0 %v1465
    %1475 = vmatprep.subr.bf16.mxu0 0
    %1476 = vmatpush1.bf16.msra.mxu0 0
    %1477 = vmatprep.subr.bf16.mxu0 0
    %1478 = vmatpush1.bf16.msra.mxu0 0
    %1479 = vmatprep.subr.bf16.mxu0 0
    %1480 = vmatpush1.bf16.msra.mxu0 0
    %1481 = vmatprep.subr.bf16.mxu0 0
    %1482 = vmatpush1.bf16.msra.mxu0 0
    %1483 = vmatprep.subr.bf16.mxu0 0
    %1484 = vmatpush1.bf16.msra.mxu0 0
    %1485 = vmatprep.subr.bf16.mxu0 0
    %1486 = vmatpush1.bf16.msra.mxu0 0
    %1487 = vmatprep.subr.bf16.mxu0 0
    %1488 = vmatpush1.bf16.msra.mxu0 0
    %1489 = vmatprep.subr.bf16.mxu0 0
    %1490 = vmatpush1.bf16.msra.mxu0 0
    %1491 = vmatprep.subr.bf16.mxu0 0
    %1492 = vmatpush1.bf16.msra.mxu0 0
    %1493 = vmatprep.subr.bf16.mxu0 0
    %1494 = vmatpush1.bf16.msra.mxu0 0
    %1495 = vmatprep.subr.bf16.mxu0 0
    %1496 = vmatpush1.bf16.msra.mxu0 0
    %1497 = vmatprep.subr.bf16.mxu0 0
    %1498 = vmatpush1.bf16.msra.mxu0 0
    %1499 = vmatprep.subr.bf16.mxu0 0
    %1500 = vmatpush1.bf16.msra.mxu0 0
    %1501 = vmatprep.subr.bf16.mxu0 0
    %1502 = vmatpush1.bf16.msra.mxu0 0
    %1503 = vmatprep.mubr.bf16.mxu0 0
    %1504 = vmatmul.mubr.bf16.gmra.mrb[0].mxu0 %v1469
    %v1505 = vpop.f32.mrb[0].mxu0
    %v1506 = vadd.f32 %v1454, %v1505
    %v1507 = vpop.f32.mrb[0].mxu0
    %v1508 = vpop.f32.mrb[0].mxu0
    %v1509 = vpop.f32.mrb[0].mxu0
    %1510 = vdwg.mxu0
    %v1511 = vmax.f32 %v1506, 0.0
    %s1512 = scalar_lea.vmem %s6, 128
    %v1513 = vld [vmem:[%s1512] sm:$0xf]
    %v1514 = vld [vmem:[%s1512 + $0x4] sm:$0xf]
    %v1515 = vld [vmem:[%s1512 + $0x8] sm:$0xf]
    %v1516 = vld [vmem:[%s1512 + $0xc] sm:$0xf]
    %v1517 = vld [vmem:[%s1512 + $0x10] sm:$0xf]
    %v1518 = vld [vmem:[%s1512 + $0x14] sm:$0xf]
    %v1519 = vld [vmem:[%s1512 + $0x18] sm:$0xf]
    %v1520 = vld [vmem:[%s1512 + $0x1c] sm:$0xf]
    %v1521 = vld [vmem:[%s1512 + $0x20] sm:$0xf]
    %v1522 = vld [vmem:[%s1512 + $0x24] sm:$0xf]
    %v1523 = vld [vmem:[%s1512 + $0x28] sm:$0xf]
    %v1524 = vld [vmem:[%s1512 + $0x2c] sm:$0xf]
    %v1525 = vld [vmem:[%s1512 + $0x30] sm:$0xf]
    %v1526 = vld [vmem:[%s1512 + $0x34] sm:$0xf]
    %v1527 = vld [vmem:[%s1512 + $0x38] sm:$0xf]
    %v1528 = vld [vmem:[%s1512 + $0x3c] sm:$0xf]
    %s1529 = scalar_lea.vmem %s7, 4
    %v1530 = vld [vmem:[%s1529] sm:$0x1]
    %v1531 = vpack.c.bf16 %v1511, %v1511
    %v1533 = vlaneseq
    %v1534 = vshrl.u32 %v1533, 7
    %v1535 = vsub.s32 0, %v1534
    %v1536 = vrot.slane %v1530, %v1535
    %v1554 = vunpack.c.l.b16 %v1513
    %v1555 = vunpack.c.l.b16 %v1514
    %v1556 = vunpack.c.l.b16 %v1515
    %v1557 = vunpack.c.l.b16 %v1516
    %v1558 = vunpack.c.l.b16 %v1517
    %v1559 = vunpack.c.l.b16 %v1518
    %v1560 = vunpack.c.l.b16 %v1519
    %v1561 = vunpack.c.l.b16 %v1520
    %v1562 = vunpack.c.l.b16 %v1521
    %v1563 = vunpack.c.l.b16 %v1522
    %v1564 = vunpack.c.l.b16 %v1523
    %v1565 = vunpack.c.l.b16 %v1524
    %v1566 = vunpack.c.l.b16 %v1525
    %v1567 = vunpack.c.l.b16 %v1526
    %v1568 = vunpack.c.l.b16 %v1527
    %v1569 = vunpack.c.l.b16 %v1528
    %v1570 = vpack.c.b16 %v1555, %v1554
    %v1571 = vpack.c.b16 %v1557, %v1556
    %v1572 = vpack.c.b16 %v1559, %v1558
    %v1573 = vpack.c.b16 %v1561, %v1560
    %v1574 = vpack.c.b16 %v1563, %v1562
    %v1575 = vpack.c.b16 %v1565, %v1564
    %v1576 = vpack.c.b16 %v1567, %v1566
    %v1577 = vpack.c.b16 %v1569, %v1568
    %1586 = vmatprep.subr.bf16.mxu0 0
    %1587 = vmatpush1.bf16.msra.mxu0 %v1570
    %1588 = vmatprep.subr.bf16.mxu0 0
    %1589 = vmatpush1.bf16.msra.mxu0 %v1571
    %1590 = vmatprep.subr.bf16.mxu0 0
    %1591 = vmatpush1.bf16.msra.mxu0 %v1572
    %1592 = vmatprep.subr.bf16.mxu0 0
    %1593 = vmatpush1.bf16.msra.mxu0 %v1573
    %1594 = vmatprep.subr.bf16.mxu0 0
    %1595 = vmatpush1.bf16.msra.mxu0 %v1574
    %1596 = vmatprep.subr.bf16.mxu0 0
    %1597 = vmatpush1.bf16.msra.mxu0 %v1575
    %1598 = vmatprep.subr.bf16.mxu0 0
    %1599 = vmatpush1.bf16.msra.mxu0 %v1576
    %1600 = vmatprep.subr.bf16.mxu0 0
    %1601 = vmatpush1.bf16.msra.mxu0 %v1577
    %1602 = vmatprep.subr.bf16.mxu0 0
    %1603 = vmatpush1.bf16.msra.mxu0 0
    %1604 = vmatprep.subr.bf16.mxu0 0
    %1605 = vmatpush1.bf16.msra.mxu0 0
    %1606 = vmatprep.subr.bf16.mxu0 0
    %1607 = vmatpush1.bf16.msra.mxu0 0
    %1608 = vmatprep.subr.bf16.mxu0 0
    %1609 = vmatpush1.bf16.msra.mxu0 0
    %1610 = vmatprep.subr.bf16.mxu0 0
    %1611 = vmatpush1.bf16.msra.mxu0 0
    %1612 = vmatprep.subr.bf16.mxu0 0
    %1613 = vmatpush1.bf16.msra.mxu0 0
    %1614 = vmatprep.subr.bf16.mxu0 0
    %1615 = vmatpush1.bf16.msra.mxu0 0
    %1616 = vmatprep.subr.bf16.mxu0 0
    %1617 = vmatpush1.bf16.msra.mxu0 0
    %1618 = vmatprep.mubr.bf16.mxu0 0
    %1619 = vmatmul.mubr.bf16.gmra.mrb[0].mxu0 %v1531
    %v1620 = vpop.f32.mrb[0].mxu0
    %v1621 = vadd.f32 %v1536, %v1620
    %v1622 = vpop.f32.mrb[0].mxu0
    %v1623 = vpop.f32.mrb[0].mxu0
    %v1624 = vpop.f32.mrb[0].mxu0
    %1625 = vdwg.mxu0
    %v1626 = vmax.f32 %v1621, 0.0
    %s1627 = scalar_lea.vmem %s6, 192
    %v1628 = vld [vmem:[%s1627] sm:$0xf]
    %v1629 = vld [vmem:[%s1627 + $0x4] sm:$0xf]
    %v1630 = vld [vmem:[%s1627 + $0x8] sm:$0xf]
    %v1631 = vld [vmem:[%s1627 + $0xc] sm:$0xf]
    %v1632 = vld [vmem:[%s1627 + $0x10] sm:$0xf]
    %v1633 = vld [vmem:[%s1627 + $0x14] sm:$0xf]
    %v1634 = vld [vmem:[%s1627 + $0x18] sm:$0xf]
    %v1635 = vld [vmem:[%s1627 + $0x1c] sm:$0xf]
    %v1636 = vld [vmem:[%s1627 + $0x20] sm:$0xf]
    %v1637 = vld [vmem:[%s1627 + $0x24] sm:$0xf]
    %v1638 = vld [vmem:[%s1627 + $0x28] sm:$0xf]
    %v1639 = vld [vmem:[%s1627 + $0x2c] sm:$0xf]
    %v1640 = vld [vmem:[%s1627 + $0x30] sm:$0xf]
    %v1641 = vld [vmem:[%s1627 + $0x34] sm:$0xf]
    %v1642 = vld [vmem:[%s1627 + $0x38] sm:$0xf]
    %v1643 = vld [vmem:[%s1627 + $0x3c] sm:$0xf]
    %s1644 = scalar_lea.vmem %s7, 5
    %v1645 = vld [vmem:[%s1644] sm:$0x1]
    %v1646 = vpack.c.bf16 %v1626, %v1626
    %v1648 = vlaneseq
    %v1649 = vshrl.u32 %v1648, 7
    %v1650 = vsub.s32 0, %v1649
    %v1651 = vrot.slane %v1645, %v1650
    %v1669 = vunpack.c.l.b16 %v1628
    %v1670 = vunpack.c.l.b16 %v1629
    %v1671 = vunpack.c.l.b16 %v1630
    %v1672 = vunpack.c.l.b16 %v1631
    %v1673 = vunpack.c.l.b16 %v1632
    %v1674 = vunpack.c.l.b16 %v1633
    %v1675 = vunpack.c.l.b16 %v1634
    %v1676 = vunpack.c.l.b16 %v1635
    %v1677 = vunpack.c.l.b16 %v1636
    %v1678 = vunpack.c.l.b16 %v1637
    %v1679 = vunpack.c.l.b16 %v1638
    %v1680 = vunpack.c.l.b16 %v1639
    %v1681 = vunpack.c.l.b16 %v1640
    %v1682 = vunpack.c.l.b16 %v1641
    %v1683 = vunpack.c.l.b16 %v1642
    %v1684 = vunpack.c.l.b16 %v1643
    %v1685 = vpack.c.b16 %v1670, %v1669
    %v1686 = vpack.c.b16 %v1672, %v1671
    %v1687 = vpack.c.b16 %v1674, %v1673
    %v1688 = vpack.c.b16 %v1676, %v1675
    %v1689 = vpack.c.b16 %v1678, %v1677
    %v1690 = vpack.c.b16 %v1680, %v1679
    %v1691 = vpack.c.b16 %v1682, %v1681
    %v1692 = vpack.c.b16 %v1684, %v1683
    %1701 = vmatprep.subr.bf16.mxu0 0
    %1702 = vmatpush1.bf16.msra.mxu0 %v1685
    %1703 = vmatprep.subr.bf16.mxu0 0
    %1704 = vmatpush1.bf16.msra.mxu0 %v1686
    %1705 = vmatprep.subr.bf16.mxu0 0
    %1706 = vmatpush1.bf16.msra.mxu0 %v1687
    %1707 = vmatprep.subr.bf16.mxu0 0
    %1708 = vmatpush1.bf16.msra.mxu0 %v1688
    %1709 = vmatprep.subr.bf16.mxu0 0
    %1710 = vmatpush1.bf16.msra.mxu0 %v1689
    %1711 = vmatprep.subr.bf16.mxu0 0
    %1712 = vmatpush1.bf16.msra.mxu0 %v1690
    %1713 = vmatprep.subr.bf16.mxu0 0
    %1714 = vmatpush1.bf16.msra.mxu0 %v1691
    %1715 = vmatprep.subr.bf16.mxu0 0
    %1716 = vmatpush1.bf16.msra.mxu0 %v1692
    %1717 = vmatprep.subr.bf16.mxu0 0
    %1718 = vmatpush1.bf16.msra.mxu0 0
    %1719 = vmatprep.subr.bf16.mxu0 0
    %1720 = vmatpush1.bf16.msra.mxu0 0
    %1721 = vmatprep.subr.bf16.mxu0 0
    %1722 = vmatpush1.bf16.msra.mxu0 0
    %1723 = vmatprep.subr.bf16.mxu0 0
    %1724 = vmatpush1.bf16.msra.mxu0 0
    %1725 = vmatprep.subr.bf16.mxu0 0
    %1726 = vmatpush1.bf16.msra.mxu0 0
    %1727 = vmatprep.subr.bf16.mxu0 0
    %1728 = vmatpush1.bf16.msra.mxu0 0
    %1729 = vmatprep.subr.bf16.mxu0 0
    %1730 = vmatpush1.bf16.msra.mxu0 0
    %1731 = vmatprep.subr.bf16.mxu0 0
    %1732 = vmatpush1.bf16.msra.mxu0 0
    %1733 = vmatprep.mubr.bf16.mxu0 0
    %1734 = vmatmul.mubr.bf16.gmra.mrb[0].mxu0 %v1646
    %v1735 = vpop.f32.mrb[0].mxu0
    %v1736 = vadd.f32 %v1651, %v1735
    %v1737 = vpop.f32.mrb[0].mxu0
    %v1738 = vpop.f32.mrb[0].mxu0
    %v1739 = vpop.f32.mrb[0].mxu0
    %1740 = vdwg.mxu0
    %v1741 = vmax.f32 %v1736, 0.0
    %v1742 = vpack.c.bf16 %v1741, %v1741
    %v1743 = vld [vmem:[%s11] sm:$0xf]
    %v1744 = vld [vmem:[%s11 + $0x4] sm:$0xf]
    %v1745 = vld [vmem:[%s11 + $0x8] sm:$0xf]
    %v1746 = vld [vmem:[%s11 + $0xc] sm:$0xf]
    %v1747 = vld [vmem:[%s11 + $0x10] sm:$0xf]
    %v1748 = vld [vmem:[%s11 + $0x14] sm:$0xf]
    %v1749 = vld [vmem:[%s11 + $0x18] sm:$0xf]
    %v1750 = vld [vmem:[%s11 + $0x1c] sm:$0xf]
    %v1751 = vld [vmem:[%s11 + $0x20] sm:$0xf]
    %v1752 = vld [vmem:[%s11 + $0x24] sm:$0xf]
    %v1753 = vld [vmem:[%s11 + $0x28] sm:$0xf]
    %v1754 = vld [vmem:[%s11 + $0x2c] sm:$0xf]
    %v1755 = vld [vmem:[%s11 + $0x30] sm:$0xf]
    %v1756 = vld [vmem:[%s11 + $0x34] sm:$0xf]
    %v1757 = vld [vmem:[%s11 + $0x38] sm:$0xf]
    %v1758 = vld [vmem:[%s11 + $0x3c] sm:$0xf]
    %v1759 = vld [vmem:[%s12] sm:$0xf]
    %v1760 = vld [vmem:[%s12 + $0x4] sm:$0xf]
    %v1761 = vld [vmem:[%s12 + $0x8] sm:$0xf]
    %v1762 = vld [vmem:[%s12 + $0xc] sm:$0xf]
    %v1767 = vunpack.c.l.b16 %v1759
    %v1768 = vunpack.c.l.b16 %v1760
    %v1769 = vunpack.c.l.b16 %v1761
    %v1770 = vunpack.c.l.b16 %v1762
    %v1771 = vpack.c.b16 %v1768, %v1767
    %v1772 = vpack.c.b16 %v1770, %v1769
    %1775 = vmatprep.subr.bf16.mxu0 0
    %1776 = vmatpush1.bf16.msra.mxu0 %v1771
    %1777 = vmatprep.subr.bf16.mxu0 0
    %1778 = vmatpush1.bf16.msra.mxu0 %v1772
    %1779 = vmatprep.subr.bf16.mxu0 0
    %1780 = vmatpush1.bf16.msra.mxu0 0
    %1781 = vmatprep.subr.bf16.mxu0 0
    %1782 = vmatpush1.bf16.msra.mxu0 0
    %1783 = vmatprep.subr.bf16.mxu0 0
    %1784 = vmatpush1.bf16.msra.mxu0 0
    %1785 = vmatprep.subr.bf16.mxu0 0
    %1786 = vmatpush1.bf16.msra.mxu0 0
    %1787 = vmatprep.subr.bf16.mxu0 0
    %1788 = vmatpush1.bf16.msra.mxu0 0
    %1789 = vmatprep.subr.bf16.mxu0 0
    %1790 = vmatpush1.bf16.msra.mxu0 0
    %1791 = vmatprep.subr.bf16.mxu0 0
    %1792 = vmatpush1.bf16.msra.mxu0 0
    %1793 = vmatprep.subr.bf16.mxu0 0
    %1794 = vmatpush1.bf16.msra.mxu0 0
    %1795 = vmatprep.subr.bf16.mxu0 0
    %1796 = vmatpush1.bf16.msra.mxu0 0
    %1797 = vmatprep.subr.bf16.mxu0 0
    %1798 = vmatpush1.bf16.msra.mxu0 0
    %1799 = vmatprep.subr.bf16.mxu0 0
    %1800 = vmatpush1.bf16.msra.mxu0 0
    %1801 = vmatprep.subr.bf16.mxu0 0
    %1802 = vmatpush1.bf16.msra.mxu0 0
    %1803 = vmatprep.subr.bf16.mxu0 0
    %1804 = vmatpush1.bf16.msra.mxu0 0
    %1805 = vmatprep.subr.bf16.mxu0 0
    %1806 = vmatpush1.bf16.msra.mxu0 0
    %1807 = vmatprep.mubr.bf16.mxu0 0
    %1808 = vmatmul.mubr.bf16.gmra.mrb[0].mxu0 %v1469
    %v1809 = vpop.f32.mrb[0].mxu0
    %v1810 = vadd.f32 0.0, %v1809
    %v1811 = vpop.f32.mrb[0].mxu0
    %v1812 = vpop.f32.mrb[0].mxu0
    %v1813 = vpop.f32.mrb[0].mxu0
    %1814 = vdwg.mxu0
    %v1831 = vunpack.c.l.b16 %v1743
    %v1832 = vunpack.c.l.b16 %v1744
    %v1833 = vunpack.c.l.b16 %v1745
    %v1834 = vunpack.c.l.b16 %v1746
    %v1835 = vunpack.c.l.b16 %v1747
    %v1836 = vunpack.c.l.b16 %v1748
    %v1837 = vunpack.c.l.b16 %v1749
    %v1838 = vunpack.c.l.b16 %v1750
    %v1839 = vunpack.c.l.b16 %v1751
    %v1840 = vunpack.c.l.b16 %v1752
    %v1841 = vunpack.c.l.b16 %v1753
    %v1842 = vunpack.c.l.b16 %v1754
    %v1843 = vunpack.c.l.b16 %v1755
    %v1844 = vunpack.c.l.b16 %v1756
    %v1845 = vunpack.c.l.b16 %v1757
    %v1846 = vunpack.c.l.b16 %v1758
    %v1847 = vpack.c.b16 %v1832, %v1831
    %v1848 = vpack.c.b16 %v1834, %v1833
    %v1849 = vpack.c.b16 %v1836, %v1835
    %v1850 = vpack.c.b16 %v1838, %v1837
    %v1851 = vpack.c.b16 %v1840, %v1839
    %v1852 = vpack.c.b16 %v1842, %v1841
    %v1853 = vpack.c.b16 %v1844, %v1843
    %v1854 = vpack.c.b16 %v1846, %v1845
    %1863 = vmatprep.subr.bf16.mxu0 0
    %1864 = vmatpush1.bf16.msra.mxu0 %v1847
    %1865 = vmatprep.subr.bf16.mxu0 0
    %1866 = vmatpush1.bf16.msra.mxu0 %v1848
    %1867 = vmatprep.subr.bf16.mxu0 0
    %1868 = vmatpush1.bf16.msra.mxu0 %v1849
    %1869 = vmatprep.subr.bf16.mxu0 0
    %1870 = vmatpush1.bf16.msra.mxu0 %v1850
    %1871 = vmatprep.subr.bf16.mxu0 0
    %1872 = vmatpush1.bf16.msra.mxu0 %v1851
    %1873 = vmatprep.subr.bf16.mxu0 0
    %1874 = vmatpush1.bf16.msra.mxu0 %v1852
    %1875 = vmatprep.subr.bf16.mxu0 0
    %1876 = vmatpush1.bf16.msra.mxu0 %v1853
    %1877 = vmatprep.subr.bf16.mxu0 0
    %1878 = vmatpush1.bf16.msra.mxu0 %v1854
    %1879 = vmatprep.subr.bf16.mxu0 0
    %1880 = vmatpush1.bf16.msra.mxu0 0
    %1881 = vmatprep.subr.bf16.mxu0 0
    %1882 = vmatpush1.bf16.msra.mxu0 0
    %1883 = vmatprep.subr.bf16.mxu0 0
    %1884 = vmatpush1.bf16.msra.mxu0 0
    %1885 = vmatprep.subr.bf16.mxu0 0
    %1886 = vmatpush1.bf16.msra.mxu0 0
    %1887 = vmatprep.subr.bf16.mxu0 0
    %1888 = vmatpush1.bf16.msra.mxu0 0
    %1889 = vmatprep.subr.bf16.mxu0 0
    %1890 = vmatpush1.bf16.msra.mxu0 0
    %1891 = vmatprep.subr.bf16.mxu0 0
    %1892 = vmatpush1.bf16.msra.mxu0 0
    %1893 = vmatprep.subr.bf16.mxu0 0
    %1894 = vmatpush1.bf16.msra.mxu0 0
    %1895 = vmatprep.mubr.bf16.mxu0 0
    %1896 = vmatmul.mubr.bf16.gmra.mrb[0].mxu0 %v1742
    %v1897 = vpop.f32.mrb[0].mxu0
    %v1898 = vadd.f32 %v1810, %v1897
    %v1899 = vpop.f32.mrb[0].mxu0
    %v1900 = vpop.f32.mrb[0].mxu0
    %v1901 = vpop.f32.mrb[0].mxu0
    %1902 = vdwg.mxu0
    %v1903 = vld [vmem:[%s13] sm:$0x1]
    %v1905 = vlaneseq
    %v1906 = vshrl.u32 %v1905, 7
    %v1907 = vsub.s32 0, %v1906
    %v1908 = vrot.slane %v1903, %v1907
    %v1910 = vadd.f32 %v1898, %v1908
    %s1911 = scalar_lea.vmem %s4, 16
    %v1912 = vld [vmem:[%s1911] sm:$0xf]
    %v1913 = vld [vmem:[%s1911 + $0x4] sm:$0xf]
    %v1914 = vld [vmem:[%s1911 + $0x8] sm:$0xf]
    %v1915 = vld [vmem:[%s1911 + $0xc] sm:$0xf]
    %s1916 = scalar_lea.vmem %s7, 6
    %v1917 = vld [vmem:[%s1916] sm:$0x1]
    %v1919 = vlaneseq
    %v1920 = vshrl.u32 %v1919, 7
    %v1921 = vsub.s32 0, %v1920
    %v1922 = vrot.slane %v1917, %v1921
    %1925 = vrot.lane.b32.xlu0 %v792, 96
    %v1926 = vpop.permute.xlu0 %1925
    %v1931 = vunpack.c.l.b16 %v1912
    %v1932 = vunpack.c.l.b16 %v1913
    %v1933 = vunpack.c.l.b16 %v1914
    %v1934 = vunpack.c.l.b16 %v1915
    %v1935 = vpack.c.b16 %v1932, %v1931
    %v1936 = vpack.c.b16 %v1934, %v1933
    %v1940 = vsel %vm811, %v1926, 0
    %1942 = vmatprep.subr.bf16.mxu0 0
    %1943 = vmatpush1.bf16.msra.mxu0 %v1935
    %1944 = vmatprep.subr.bf16.mxu0 0
    %1945 = vmatpush1.bf16.msra.mxu0 %v1936
    %1946 = vmatprep.subr.bf16.mxu0 0
    %1947 = vmatpush1.bf16.msra.mxu0 0
    %1948 = vmatprep.subr.bf16.mxu0 0
    %1949 = vmatpush1.bf16.msra.mxu0 0
    %1950 = vmatprep.subr.bf16.mxu0 0
    %1951 = vmatpush1.bf16.msra.mxu0 0
    %1952 = vmatprep.subr.bf16.mxu0 0
    %1953 = vmatpush1.bf16.msra.mxu0 0
    %1954 = vmatprep.subr.bf16.mxu0 0
    %1955 = vmatpush1.bf16.msra.mxu0 0
    %1956 = vmatprep.subr.bf16.mxu0 0
    %1957 = vmatpush1.bf16.msra.mxu0 0
    %1958 = vmatprep.subr.bf16.mxu0 0
    %1959 = vmatpush1.bf16.msra.mxu0 0
    %1960 = vmatprep.subr.bf16.mxu0 0
    %1961 = vmatpush1.bf16.msra.mxu0 0
    %1962 = vmatprep.subr.bf16.mxu0 0
    %1963 = vmatpush1.bf16.msra.mxu0 0
    %1964 = vmatprep.subr.bf16.mxu0 0
    %1965 = vmatpush1.bf16.msra.mxu0 0
    %1966 = vmatprep.subr.bf16.mxu0 0
    %1967 = vmatpush1.bf16.msra.mxu0 0
    %1968 = vmatprep.subr.bf16.mxu0 0
    %1969 = vmatpush1.bf16.msra.mxu0 0
    %1970 = vmatprep.subr.bf16.mxu0 0
    %1971 = vmatpush1.bf16.msra.mxu0 0
    %1972 = vmatprep.subr.bf16.mxu0 0
    %1973 = vmatpush1.bf16.msra.mxu0 0
    %1974 = vmatprep.mubr.bf16.mxu0 0
    %1975 = vmatmul.mubr.bf16.gmra.mrb[0].mxu0 %v1940
    %v1976 = vpop.f32.mrb[0].mxu0
    %v1977 = vadd.f32 %v1922, %v1976
    %v1978 = vpop.f32.mrb[0].mxu0
    %v1979 = vpop.f32.mrb[0].mxu0
    %v1980 = vpop.f32.mrb[0].mxu0
    %1981 = vdwg.mxu0
    %v1982 = vmax.f32 %v1977, 0.0
    %s1983 = scalar_lea.vmem %s6, 256
    %v1984 = vld [vmem:[%s1983] sm:$0xf]
    %v1985 = vld [vmem:[%s1983 + $0x4] sm:$0xf]
    %v1986 = vld [vmem:[%s1983 + $0x8] sm:$0xf]
    %v1987 = vld [vmem:[%s1983 + $0xc] sm:$0xf]
    %v1988 = vld [vmem:[%s1983 + $0x10] sm:$0xf]
    %v1989 = vld [vmem:[%s1983 + $0x14] sm:$0xf]
    %v1990 = vld [vmem:[%s1983 + $0x18] sm:$0xf]
    %v1991 = vld [vmem:[%s1983 + $0x1c] sm:$0xf]
    %v1992 = vld [vmem:[%s1983 + $0x20] sm:$0xf]
    %v1993 = vld [vmem:[%s1983 + $0x24] sm:$0xf]
    %v1994 = vld [vmem:[%s1983 + $0x28] sm:$0xf]
    %v1995 = vld [vmem:[%s1983 + $0x2c] sm:$0xf]
    %v1996 = vld [vmem:[%s1983 + $0x30] sm:$0xf]
    %v1997 = vld [vmem:[%s1983 + $0x34] sm:$0xf]
    %v1998 = vld [vmem:[%s1983 + $0x38] sm:$0xf]
    %v1999 = vld [vmem:[%s1983 + $0x3c] sm:$0xf]
    %s2000 = scalar_lea.vmem %s7, 7
    %v2001 = vld [vmem:[%s2000] sm:$0x1]
    %v2002 = vpack.c.bf16 %v1982, %v1982
    %v2004 = vlaneseq
    %v2005 = vshrl.u32 %v2004, 7
    %v2006 = vsub.s32 0, %v2005
    %v2007 = vrot.slane %v2001, %v2006
    %v2025 = vunpack.c.l.b16 %v1984
    %v2026 = vunpack.c.l.b16 %v1985
    %v2027 = vunpack.c.l.b16 %v1986
    %v2028 = vunpack.c.l.b16 %v1987
    %v2029 = vunpack.c.l.b16 %v1988
    %v2030 = vunpack.c.l.b16 %v1989
    %v2031 = vunpack.c.l.b16 %v1990
    %v2032 = vunpack.c.l.b16 %v1991
    %v2033 = vunpack.c.l.b16 %v1992
    %v2034 = vunpack.c.l.b16 %v1993
    %v2035 = vunpack.c.l.b16 %v1994
    %v2036 = vunpack.c.l.b16 %v1995
    %v2037 = vunpack.c.l.b16 %v1996
    %v2038 = vunpack.c.l.b16 %v1997
    %v2039 = vunpack.c.l.b16 %v1998
    %v2040 = vunpack.c.l.b16 %v1999
    %v2041 = vpack.c.b16 %v2026, %v2025
    %v2042 = vpack.c.b16 %v2028, %v2027
    %v2043 = vpack.c.b16 %v2030, %v2029
    %v2044 = vpack.c.b16 %v2032, %v2031
    %v2045 = vpack.c.b16 %v2034, %v2033
    %v2046 = vpack.c.b16 %v2036, %v2035
    %v2047 = vpack.c.b16 %v2038, %v2037
    %v2048 = vpack.c.b16 %v2040, %v2039
    %2057 = vmatprep.subr.bf16.mxu0 0
    %2058 = vmatpush1.bf16.msra.mxu0 %v2041
    %2059 = vmatprep.subr.bf16.mxu0 0
    %2060 = vmatpush1.bf16.msra.mxu0 %v2042
    %2061 = vmatprep.subr.bf16.mxu0 0
    %2062 = vmatpush1.bf16.msra.mxu0 %v2043
    %2063 = vmatprep.subr.bf16.mxu0 0
    %2064 = vmatpush1.bf16.msra.mxu0 %v2044
    %2065 = vmatprep.subr.bf16.mxu0 0
    %2066 = vmatpush1.bf16.msra.mxu0 %v2045
    %2067 = vmatprep.subr.bf16.mxu0 0
    %2068 = vmatpush1.bf16.msra.mxu0 %v2046
    %2069 = vmatprep.subr.bf16.mxu0 0
    %2070 = vmatpush1.bf16.msra.mxu0 %v2047
    %2071 = vmatprep.subr.bf16.mxu0 0
    %2072 = vmatpush1.bf16.msra.mxu0 %v2048
    %2073 = vmatprep.subr.bf16.mxu0 0
    %2074 = vmatpush1.bf16.msra.mxu0 0
    %2075 = vmatprep.subr.bf16.mxu0 0
    %2076 = vmatpush1.bf16.msra.mxu0 0
    %2077 = vmatprep.subr.bf16.mxu0 0
    %2078 = vmatpush1.bf16.msra.mxu0 0
    %2079 = vmatprep.subr.bf16.mxu0 0
    %2080 = vmatpush1.bf16.msra.mxu0 0
    %2081 = vmatprep.subr.bf16.mxu0 0
    %2082 = vmatpush1.bf16.msra.mxu0 0
    %2083 = vmatprep.subr.bf16.mxu0 0
    %2084 = vmatpush1.bf16.msra.mxu0 0
    %2085 = vmatprep.subr.bf16.mxu0 0
    %2086 = vmatpush1.bf16.msra.mxu0 0
    %2087 = vmatprep.subr.bf16.mxu0 0
    %2088 = vmatpush1.bf16.msra.mxu0 0
    %2089 = vmatprep.mubr.bf16.mxu0 0
    %2090 = vmatmul.mubr.bf16.gmra.mrb[0].mxu0 %v2002
    %v2091 = vpop.f32.mrb[0].mxu0
    %v2092 = vadd.f32 %v2007, %v2091
    %v2093 = vpop.f32.mrb[0].mxu0
    %v2094 = vpop.f32.mrb[0].mxu0
    %v2095 = vpop.f32.mrb[0].mxu0
    %2096 = vdwg.mxu0
    %v2097 = vmax.f32 %v2092, 0.0
    %s2098 = scalar_lea.vmem %s6, 320
    %v2099 = vld [vmem:[%s2098] sm:$0xf]
    %v2100 = vld [vmem:[%s2098 + $0x4] sm:$0xf]
    %v2101 = vld [vmem:[%s2098 + $0x8] sm:$0xf]
    %v2102 = vld [vmem:[%s2098 + $0xc] sm:$0xf]
    %v2103 = vld [vmem:[%s2098 + $0x10] sm:$0xf]
    %v2104 = vld [vmem:[%s2098 + $0x14] sm:$0xf]
    %v2105 = vld [vmem:[%s2098 + $0x18] sm:$0xf]
    %v2106 = vld [vmem:[%s2098 + $0x1c] sm:$0xf]
    %v2107 = vld [vmem:[%s2098 + $0x20] sm:$0xf]
    %v2108 = vld [vmem:[%s2098 + $0x24] sm:$0xf]
    %v2109 = vld [vmem:[%s2098 + $0x28] sm:$0xf]
    %v2110 = vld [vmem:[%s2098 + $0x2c] sm:$0xf]
    %v2111 = vld [vmem:[%s2098 + $0x30] sm:$0xf]
    %v2112 = vld [vmem:[%s2098 + $0x34] sm:$0xf]
    %v2113 = vld [vmem:[%s2098 + $0x38] sm:$0xf]
    %v2114 = vld [vmem:[%s2098 + $0x3c] sm:$0xf]
    %s2115 = scalar_lea.vmem %s7, 8
    %v2116 = vld [vmem:[%s2115] sm:$0x1]
    %v2117 = vpack.c.bf16 %v2097, %v2097
    %v2119 = vlaneseq
    %v2120 = vshrl.u32 %v2119, 7
    %v2121 = vsub.s32 0, %v2120
    %v2122 = vrot.slane %v2116, %v2121
    %v2140 = vunpack.c.l.b16 %v2099
    %v2141 = vunpack.c.l.b16 %v2100
    %v2142 = vunpack.c.l.b16 %v2101
    %v2143 = vunpack.c.l.b16 %v2102
    %v2144 = vunpack.c.l.b16 %v2103
    %v2145 = vunpack.c.l.b16 %v2104
    %v2146 = vunpack.c.l.b16 %v2105
    %v2147 = vunpack.c.l.b16 %v2106
    %v2148 = vunpack.c.l.b16 %v2107
    %v2149 = vunpack.c.l.b16 %v2108
    %v2150 = vunpack.c.l.b16 %v2109
    %v2151 = vunpack.c.l.b16 %v2110
    %v2152 = vunpack.c.l.b16 %v2111
    %v2153 = vunpack.c.l.b16 %v2112
    %v2154 = vunpack.c.l.b16 %v2113
    %v2155 = vunpack.c.l.b16 %v2114
    %v2156 = vpack.c.b16 %v2141, %v2140
    %v2157 = vpack.c.b16 %v2143, %v2142
    %v2158 = vpack.c.b16 %v2145, %v2144
    %v2159 = vpack.c.b16 %v2147, %v2146
    %v2160 = vpack.c.b16 %v2149, %v2148
    %v2161 = vpack.c.b16 %v2151, %v2150
    %v2162 = vpack.c.b16 %v2153, %v2152
    %v2163 = vpack.c.b16 %v2155, %v2154
    %2172 = vmatprep.subr.bf16.mxu0 0
    %2173 = vmatpush1.bf16.msra.mxu0 %v2156
    %2174 = vmatprep.subr.bf16.mxu0 0
    %2175 = vmatpush1.bf16.msra.mxu0 %v2157
    %2176 = vmatprep.subr.bf16.mxu0 0
    %2177 = vmatpush1.bf16.msra.mxu0 %v2158
    %2178 = vmatprep.subr.bf16.mxu0 0
    %2179 = vmatpush1.bf16.msra.mxu0 %v2159
    %2180 = vmatprep.subr.bf16.mxu0 0
    %2181 = vmatpush1.bf16.msra.mxu0 %v2160
    %2182 = vmatprep.subr.bf16.mxu0 0
    %2183 = vmatpush1.bf16.msra.mxu0 %v2161
    %2184 = vmatprep.subr.bf16.mxu0 0
    %2185 = vmatpush1.bf16.msra.mxu0 %v2162
    %2186 = vmatprep.subr.bf16.mxu0 0
    %2187 = vmatpush1.bf16.msra.mxu0 %v2163
    %2188 = vmatprep.subr.bf16.mxu0 0
    %2189 = vmatpush1.bf16.msra.mxu0 0
    %2190 = vmatprep.subr.bf16.mxu0 0
    %2191 = vmatpush1.bf16.msra.mxu0 0
    %2192 = vmatprep.subr.bf16.mxu0 0
    %2193 = vmatpush1.bf16.msra.mxu0 0
    %2194 = vmatprep.subr.bf16.mxu0 0
    %2195 = vmatpush1.bf16.msra.mxu0 0
    %2196 = vmatprep.subr.bf16.mxu0 0
    %2197 = vmatpush1.bf16.msra.mxu0 0
    %2198 = vmatprep.subr.bf16.mxu0 0
    %2199 = vmatpush1.bf16.msra.mxu0 0
    %2200 = vmatprep.subr.bf16.mxu0 0
    %2201 = vmatpush1.bf16.msra.mxu0 0
    %2202 = vmatprep.subr.bf16.mxu0 0
    %2203 = vmatpush1.bf16.msra.mxu0 0
    %2204 = vmatprep.mubr.bf16.mxu0 0
    %2205 = vmatmul.mubr.bf16.gmra.mrb[0].mxu0 %v2117
    %v2206 = vpop.f32.mrb[0].mxu0
    %v2207 = vadd.f32 %v2122, %v2206
    %v2208 = vpop.f32.mrb[0].mxu0
    %v2209 = vpop.f32.mrb[0].mxu0
    %v2210 = vpop.f32.mrb[0].mxu0
    %2211 = vdwg.mxu0
    %v2212 = vmax.f32 %v2207, 0.0
    %v2213 = vpack.c.bf16 %v2212, %v2212
    %s2214 = scalar_lea.vmem %s8, 128
    %v2215 = vld [vmem:[%s2214] sm:$0xf]
    %v2216 = vld [vmem:[%s2214 + $0x4] sm:$0xf]
    %v2217 = vld [vmem:[%s2214 + $0x8] sm:$0xf]
    %v2218 = vld [vmem:[%s2214 + $0xc] sm:$0xf]
    %v2219 = vld [vmem:[%s2214 + $0x10] sm:$0xf]
    %v2220 = vld [vmem:[%s2214 + $0x14] sm:$0xf]
    %v2221 = vld [vmem:[%s2214 + $0x18] sm:$0xf]
    %v2222 = vld [vmem:[%s2214 + $0x1c] sm:$0xf]
    %v2223 = vld [vmem:[%s2214 + $0x20] sm:$0xf]
    %v2224 = vld [vmem:[%s2214 + $0x24] sm:$0xf]
    %v2225 = vld [vmem:[%s2214 + $0x28] sm:$0xf]
    %v2226 = vld [vmem:[%s2214 + $0x2c] sm:$0xf]
    %v2227 = vld [vmem:[%s2214 + $0x30] sm:$0xf]
    %v2228 = vld [vmem:[%s2214 + $0x34] sm:$0xf]
    %v2229 = vld [vmem:[%s2214 + $0x38] sm:$0xf]
    %v2230 = vld [vmem:[%s2214 + $0x3c] sm:$0xf]
    %s2231 = scalar_lea.vmem %s9, 32
    %v2232 = vld [vmem:[%s2231] sm:$0xf]
    %v2233 = vld [vmem:[%s2231 + $0x4] sm:$0xf]
    %v2234 = vld [vmem:[%s2231 + $0x8] sm:$0xf]
    %v2235 = vld [vmem:[%s2231 + $0xc] sm:$0xf]
    %v2240 = vunpack.c.l.b16 %v2232
    %v2241 = vunpack.c.l.b16 %v2233
    %v2242 = vunpack.c.l.b16 %v2234
    %v2243 = vunpack.c.l.b16 %v2235
    %v2244 = vpack.c.b16 %v2241, %v2240
    %v2245 = vpack.c.b16 %v2243, %v2242
    %2248 = vmatprep.subr.bf16.mxu0 0
    %2249 = vmatpush1.bf16.msra.mxu0 %v2244
    %2250 = vmatprep.subr.bf16.mxu0 0
    %2251 = vmatpush1.bf16.msra.mxu0 %v2245
    %2252 = vmatprep.subr.bf16.mxu0 0
    %2253 = vmatpush1.bf16.msra.mxu0 0
    %2254 = vmatprep.subr.bf16.mxu0 0
    %2255 = vmatpush1.bf16.msra.mxu0 0
    %2256 = vmatprep.subr.bf16.mxu0 0
    %2257 = vmatpush1.bf16.msra.mxu0 0
    %2258 = vmatprep.subr.bf16.mxu0 0
    %2259 = vmatpush1.bf16.msra.mxu0 0
    %2260 = vmatprep.subr.bf16.mxu0 0
    %2261 = vmatpush1.bf16.msra.mxu0 0
    %2262 = vmatprep.subr.bf16.mxu0 0
    %2263 = vmatpush1.bf16.msra.mxu0 0
    %2264 = vmatprep.subr.bf16.mxu0 0
    %2265 = vmatpush1.bf16.msra.mxu0 0
    %2266 = vmatprep.subr.bf16.mxu0 0
    %2267 = vmatpush1.bf16.msra.mxu0 0
    %2268 = vmatprep.subr.bf16.mxu0 0
    %2269 = vmatpush1.bf16.msra.mxu0 0
    %2270 = vmatprep.subr.bf16.mxu0 0
    %2271 = vmatpush1.bf16.msra.mxu0 0
    %2272 = vmatprep.subr.bf16.mxu0 0
    %2273 = vmatpush1.bf16.msra.mxu0 0
    %2274 = vmatprep.subr.bf16.mxu0 0
    %2275 = vmatpush1.bf16.msra.mxu0 0
    %2276 = vmatprep.subr.bf16.mxu0 0
    %2277 = vmatpush1.bf16.msra.mxu0 0
    %2278 = vmatprep.subr.bf16.mxu0 0
    %2279 = vmatpush1.bf16.msra.mxu0 0
    %2280 = vmatprep.mubr.bf16.mxu0 0
    %2281 = vmatmul.mubr.bf16.gmra.mrb[0].mxu0 %v1940
    %v2282 = vpop.f32.mrb[0].mxu0
    %v2283 = vadd.f32 0.0, %v2282
    %v2284 = vpop.f32.mrb[0].mxu0
    %v2285 = vpop.f32.mrb[0].mxu0
    %v2286 = vpop.f32.mrb[0].mxu0
    %2287 = vdwg.mxu0
    %v2304 = vunpack.c.l.b16 %v2215
    %v2305 = vunpack.c.l.b16 %v2216
    %v2306 = vunpack.c.l.b16 %v2217
    %v2307 = vunpack.c.l.b16 %v2218
    %v2308 = vunpack.c.l.b16 %v2219
    %v2309 = vunpack.c.l.b16 %v2220
    %v2310 = vunpack.c.l.b16 %v2221
    %v2311 = vunpack.c.l.b16 %v2222
    %v2312 = vunpack.c.l.b16 %v2223
    %v2313 = vunpack.c.l.b16 %v2224
    %v2314 = vunpack.c.l.b16 %v2225
    %v2315 = vunpack.c.l.b16 %v2226
    %v2316 = vunpack.c.l.b16 %v2227
    %v2317 = vunpack.c.l.b16 %v2228
    %v2318 = vunpack.c.l.b16 %v2229
    %v2319 = vunpack.c.l.b16 %v2230
    %v2320 = vpack.c.b16 %v2305, %v2304
    %v2321 = vpack.c.b16 %v2307, %v2306
    %v2322 = vpack.c.b16 %v2309, %v2308
    %v2323 = vpack.c.b16 %v2311, %v2310
    %v2324 = vpack.c.b16 %v2313, %v2312
    %v2325 = vpack.c.b16 %v2315, %v2314
    %v2326 = vpack.c.b16 %v2317, %v2316
    %v2327 = vpack.c.b16 %v2319, %v2318
    %2336 = vmatprep.subr.bf16.mxu0 0
    %2337 = vmatpush1.bf16.msra.mxu0 %v2320
    %2338 = vmatprep.subr.bf16.mxu0 0
    %2339 = vmatpush1.bf16.msra.mxu0 %v2321
    %2340 = vmatprep.subr.bf16.mxu0 0
    %2341 = vmatpush1.bf16.msra.mxu0 %v2322
    %2342 = vmatprep.subr.bf16.mxu0 0
    %2343 = vmatpush1.bf16.msra.mxu0 %v2323
    %2344 = vmatprep.subr.bf16.mxu0 0
    %2345 = vmatpush1.bf16.msra.mxu0 %v2324
    %2346 = vmatprep.subr.bf16.mxu0 0
    %2347 = vmatpush1.bf16.msra.mxu0 %v2325
    %2348 = vmatprep.subr.bf16.mxu0 0
    %2349 = vmatpush1.bf16.msra.mxu0 %v2326
    %2350 = vmatprep.subr.bf16.mxu0 0
    %2351 = vmatpush1.bf16.msra.mxu0 %v2327
    %2352 = vmatprep.subr.bf16.mxu0 0
    %2353 = vmatpush1.bf16.msra.mxu0 0
    %2354 = vmatprep.subr.bf16.mxu0 0
    %2355 = vmatpush1.bf16.msra.mxu0 0
    %2356 = vmatprep.subr.bf16.mxu0 0
    %2357 = vmatpush1.bf16.msra.mxu0 0
    %2358 = vmatprep.subr.bf16.mxu0 0
    %2359 = vmatpush1.bf16.msra.mxu0 0
    %2360 = vmatprep.subr.bf16.mxu0 0
    %2361 = vmatpush1.bf16.msra.mxu0 0
    %2362 = vmatprep.subr.bf16.mxu0 0
    %2363 = vmatpush1.bf16.msra.mxu0 0
    %2364 = vmatprep.subr.bf16.mxu0 0
    %2365 = vmatpush1.bf16.msra.mxu0 0
    %2366 = vmatprep.subr.bf16.mxu0 0
    %2367 = vmatpush1.bf16.msra.mxu0 0
    %2368 = vmatprep.mubr.bf16.mxu0 0
    %2369 = vmatmul.mubr.bf16.gmra.mrb[0].mxu0 %v2213
    %v2370 = vpop.f32.mrb[0].mxu0
    %v2371 = vadd.f32 %v2283, %v2370
    %v2372 = vpop.f32.mrb[0].mxu0
    %v2373 = vpop.f32.mrb[0].mxu0
    %v2374 = vpop.f32.mrb[0].mxu0
    %2375 = vdwg.mxu0
    %s2376 = scalar_lea.vmem %s10, 2
    %v2377 = vld [vmem:[%s2376] sm:$0x1]
    %v2379 = vlaneseq
    %v2380 = vshrl.u32 %v2379, 7
    %v2381 = vsub.s32 0, %v2380
    %v2382 = vrot.slane %v2377, %v2381
    %v2384 = vadd.f32 %v2371, %v2382
    %s2385 = scalar_lea.vmem %s8, 192
    %v2386 = vld [vmem:[%s2385] sm:$0xf]
    %v2387 = vld [vmem:[%s2385 + $0x4] sm:$0xf]
    %v2388 = vld [vmem:[%s2385 + $0x8] sm:$0xf]
    %v2389 = vld [vmem:[%s2385 + $0xc] sm:$0xf]
    %v2390 = vld [vmem:[%s2385 + $0x10] sm:$0xf]
    %v2391 = vld [vmem:[%s2385 + $0x14] sm:$0xf]
    %v2392 = vld [vmem:[%s2385 + $0x18] sm:$0xf]
    %v2393 = vld [vmem:[%s2385 + $0x1c] sm:$0xf]
    %v2394 = vld [vmem:[%s2385 + $0x20] sm:$0xf]
    %v2395 = vld [vmem:[%s2385 + $0x24] sm:$0xf]
    %v2396 = vld [vmem:[%s2385 + $0x28] sm:$0xf]
    %v2397 = vld [vmem:[%s2385 + $0x2c] sm:$0xf]
    %v2398 = vld [vmem:[%s2385 + $0x30] sm:$0xf]
    %v2399 = vld [vmem:[%s2385 + $0x34] sm:$0xf]
    %v2400 = vld [vmem:[%s2385 + $0x38] sm:$0xf]
    %v2401 = vld [vmem:[%s2385 + $0x3c] sm:$0xf]
    %s2402 = scalar_lea.vmem %s9, 48
    %v2403 = vld [vmem:[%s2402] sm:$0xf]
    %v2404 = vld [vmem:[%s2402 + $0x4] sm:$0xf]
    %v2405 = vld [vmem:[%s2402 + $0x8] sm:$0xf]
    %v2406 = vld [vmem:[%s2402 + $0xc] sm:$0xf]
    %v2411 = vunpack.c.l.b16 %v2403
    %v2412 = vunpack.c.l.b16 %v2404
    %v2413 = vunpack.c.l.b16 %v2405
    %v2414 = vunpack.c.l.b16 %v2406
    %v2415 = vpack.c.b16 %v2412, %v2411
    %v2416 = vpack.c.b16 %v2414, %v2413
    %2419 = vmatprep.subr.bf16.mxu0 0
    %2420 = vmatpush1.bf16.msra.mxu0 %v2415
    %2421 = vmatprep.subr.bf16.mxu0 0
    %2422 = vmatpush1.bf16.msra.mxu0 %v2416
    %2423 = vmatprep.subr.bf16.mxu0 0
    %2424 = vmatpush1.bf16.msra.mxu0 0
    %2425 = vmatprep.subr.bf16.mxu0 0
    %2426 = vmatpush1.bf16.msra.mxu0 0
    %2427 = vmatprep.subr.bf16.mxu0 0
    %2428 = vmatpush1.bf16.msra.mxu0 0
    %2429 = vmatprep.subr.bf16.mxu0 0
    %2430 = vmatpush1.bf16.msra.mxu0 0
    %2431 = vmatprep.subr.bf16.mxu0 0
    %2432 = vmatpush1.bf16.msra.mxu0 0
    %2433 = vmatprep.subr.bf16.mxu0 0
    %2434 = vmatpush1.bf16.msra.mxu0 0
    %2435 = vmatprep.subr.bf16.mxu0 0
    %2436 = vmatpush1.bf16.msra.mxu0 0
    %2437 = vmatprep.subr.bf16.mxu0 0
    %2438 = vmatpush1.bf16.msra.mxu0 0
    %2439 = vmatprep.subr.bf16.mxu0 0
    %2440 = vmatpush1.bf16.msra.mxu0 0
    %2441 = vmatprep.subr.bf16.mxu0 0
    %2442 = vmatpush1.bf16.msra.mxu0 0
    %2443 = vmatprep.subr.bf16.mxu0 0
    %2444 = vmatpush1.bf16.msra.mxu0 0
    %2445 = vmatprep.subr.bf16.mxu0 0
    %2446 = vmatpush1.bf16.msra.mxu0 0
    %2447 = vmatprep.subr.bf16.mxu0 0
    %2448 = vmatpush1.bf16.msra.mxu0 0
    %2449 = vmatprep.subr.bf16.mxu0 0
    %2450 = vmatpush1.bf16.msra.mxu0 0
    %2451 = vmatprep.mubr.bf16.mxu0 0
    %2452 = vmatmul.mubr.bf16.gmra.mrb[0].mxu0 %v1940
    %v2453 = vpop.f32.mrb[0].mxu0
    %v2454 = vadd.f32 0.0, %v2453
    %v2455 = vpop.f32.mrb[0].mxu0
    %v2456 = vpop.f32.mrb[0].mxu0
    %v2457 = vpop.f32.mrb[0].mxu0
    %2458 = vdwg.mxu0
    %v2475 = vunpack.c.l.b16 %v2386
    %v2476 = vunpack.c.l.b16 %v2387
    %v2477 = vunpack.c.l.b16 %v2388
    %v2478 = vunpack.c.l.b16 %v2389
    %v2479 = vunpack.c.l.b16 %v2390
    %v2480 = vunpack.c.l.b16 %v2391
    %v2481 = vunpack.c.l.b16 %v2392
    %v2482 = vunpack.c.l.b16 %v2393
    %v2483 = vunpack.c.l.b16 %v2394
    %v2484 = vunpack.c.l.b16 %v2395
    %v2485 = vunpack.c.l.b16 %v2396
    %v2486 = vunpack.c.l.b16 %v2397
    %v2487 = vunpack.c.l.b16 %v2398
    %v2488 = vunpack.c.l.b16 %v2399
    %v2489 = vunpack.c.l.b16 %v2400
    %v2490 = vunpack.c.l.b16 %v2401
    %v2491 = vpack.c.b16 %v2476, %v2475
    %v2492 = vpack.c.b16 %v2478, %v2477
    %v2493 = vpack.c.b16 %v2480, %v2479
    %v2494 = vpack.c.b16 %v2482, %v2481
    %v2495 = vpack.c.b16 %v2484, %v2483
    %v2496 = vpack.c.b16 %v2486, %v2485
    %v2497 = vpack.c.b16 %v2488, %v2487
    %v2498 = vpack.c.b16 %v2490, %v2489
    %2507 = vmatprep.subr.bf16.mxu0 0
    %2508 = vmatpush1.bf16.msra.mxu0 %v2491
    %2509 = vmatprep.subr.bf16.mxu0 0
    %2510 = vmatpush1.bf16.msra.mxu0 %v2492
    %2511 = vmatprep.subr.bf16.mxu0 0
    %2512 = vmatpush1.bf16.msra.mxu0 %v2493
    %2513 = vmatprep.subr.bf16.mxu0 0
    %2514 = vmatpush1.bf16.msra.mxu0 %v2494
    %2515 = vmatprep.subr.bf16.mxu0 0
    %2516 = vmatpush1.bf16.msra.mxu0 %v2495
    %2517 = vmatprep.subr.bf16.mxu0 0
    %2518 = vmatpush1.bf16.msra.mxu0 %v2496
    %2519 = vmatprep.subr.bf16.mxu0 0
    %2520 = vmatpush1.bf16.msra.mxu0 %v2497
    %2521 = vmatprep.subr.bf16.mxu0 0
    %2522 = vmatpush1.bf16.msra.mxu0 %v2498
    %2523 = vmatprep.subr.bf16.mxu0 0
    %2524 = vmatpush1.bf16.msra.mxu0 0
    %2525 = vmatprep.subr.bf16.mxu0 0
    %2526 = vmatpush1.bf16.msra.mxu0 0
    %2527 = vmatprep.subr.bf16.mxu0 0
    %2528 = vmatpush1.bf16.msra.mxu0 0
    %2529 = vmatprep.subr.bf16.mxu0 0
    %2530 = vmatpush1.bf16.msra.mxu0 0
    %2531 = vmatprep.subr.bf16.mxu0 0
    %2532 = vmatpush1.bf16.msra.mxu0 0
    %2533 = vmatprep.subr.bf16.mxu0 0
    %2534 = vmatpush1.bf16.msra.mxu0 0
    %2535 = vmatprep.subr.bf16.mxu0 0
    %2536 = vmatpush1.bf16.msra.mxu0 0
    %2537 = vmatprep.subr.bf16.mxu0 0
    %2538 = vmatpush1.bf16.msra.mxu0 0
    %2539 = vmatprep.mubr.bf16.mxu0 0
    %2540 = vmatmul.mubr.bf16.gmra.mrb[0].mxu0 %v2213
    %v2541 = vpop.f32.mrb[0].mxu0
    %v2542 = vadd.f32 %v2454, %v2541
    %v2543 = vpop.f32.mrb[0].mxu0
    %v2544 = vpop.f32.mrb[0].mxu0
    %v2545 = vpop.f32.mrb[0].mxu0
    %2546 = vdwg.mxu0
    %s2547 = scalar_lea.vmem %s10, 3
    %v2548 = vld [vmem:[%s2547] sm:$0x1]
    %v2550 = vlaneseq
    %v2551 = vshrl.u32 %v2550, 7
    %v2552 = vsub.s32 0, %v2551
    %v2553 = vrot.slane %v2548, %v2552
    %v2555 = vadd.f32 %v2542, %v2553
    %v2556 = vtanh.pop %v2555
    %v2557 = vmul.f32 %v2556, 5.0
    %v2558 = vmul.f32 %v2557, 1.442695
    %v2559 = vpow.pop %v2558
    %s2560 = scalar_lea.vmem %s1, 2
    %v2561 = vld [vmem:[%s2560] sm:$0x3]
    %v2562 = vmul.f32 %v2559, %v2561
    %v2563 = vadd.f32 %v2384, %v2562
    %v2564 = vmul.f32 %v2384, %v2384
    %v2565 = vmul.f32 %v2559, %v2559
    %v2566 = vadd.f32 %v2564, %v2565
    %v2567 = vmul.f32 %v2557, 2.0
    %v2568 = vsub.f32 %v2566, %v2567
    %v2569 = vsub.f32 %v2568, 1.0
    %v2570 = vsel %vm1438, %v2569, 0.0
    %2571 = vadd.xlane.f32.xlu0 %v2570
    %v2572 = vpop.xlane.xlu0 %2571
    %v2573 = vmul.f32 %v2572, 0.5
    %s2574 = scalar_lea.vmem %s5, 16
    %v2575 = vld [vmem:[%s2574] sm:$0xf]
    %v2576 = vld [vmem:[%s2574 + $0x4] sm:$0xf]
    %v2577 = vld [vmem:[%s2574 + $0x8] sm:$0xf]
    %v2578 = vld [vmem:[%s2574 + $0xc] sm:$0xf]
    %s2579 = scalar_lea.vmem %s7, 9
    %v2580 = vld [vmem:[%s2579] sm:$0x1]
    %v2581 = vpack.c.bf16 %v2563, %v2563
    %v2583 = vlaneseq
    %v2584 = vshrl.u32 %v2583, 7
    %v2585 = vsub.s32 0, %v2584
    %v2586 = vrot.slane %v2580, %v2585
    %v2592 = vunpack.c.l.b16 %v2575
    %v2593 = vunpack.c.l.b16 %v2576
    %v2594 = vunpack.c.l.b16 %v2577
    %v2595 = vunpack.c.l.b16 %v2578
    %v2596 = vpack.c.b16 %v2593, %v2592
    %v2597 = vpack.c.b16 %v2595, %v2594
    %v2601 = vsel %vm811, %v2581, 0
    %2603 = vmatprep.subr.bf16.mxu0 0
    %2604 = vmatpush1.bf16.msra.mxu0 %v2596
    %2605 = vmatprep.subr.bf16.mxu0 0
    %2606 = vmatpush1.bf16.msra.mxu0 %v2597
    %2607 = vmatprep.subr.bf16.mxu0 0
    %2608 = vmatpush1.bf16.msra.mxu0 0
    %2609 = vmatprep.subr.bf16.mxu0 0
    %2610 = vmatpush1.bf16.msra.mxu0 0
    %2611 = vmatprep.subr.bf16.mxu0 0
    %2612 = vmatpush1.bf16.msra.mxu0 0
    %2613 = vmatprep.subr.bf16.mxu0 0
    %2614 = vmatpush1.bf16.msra.mxu0 0
    %2615 = vmatprep.subr.bf16.mxu0 0
    %2616 = vmatpush1.bf16.msra.mxu0 0
    %2617 = vmatprep.subr.bf16.mxu0 0
    %2618 = vmatpush1.bf16.msra.mxu0 0
    %2619 = vmatprep.subr.bf16.mxu0 0
    %2620 = vmatpush1.bf16.msra.mxu0 0
    %2621 = vmatprep.subr.bf16.mxu0 0
    %2622 = vmatpush1.bf16.msra.mxu0 0
    %2623 = vmatprep.subr.bf16.mxu0 0
    %2624 = vmatpush1.bf16.msra.mxu0 0
    %2625 = vmatprep.subr.bf16.mxu0 0
    %2626 = vmatpush1.bf16.msra.mxu0 0
    %2627 = vmatprep.subr.bf16.mxu0 0
    %2628 = vmatpush1.bf16.msra.mxu0 0
    %2629 = vmatprep.subr.bf16.mxu0 0
    %2630 = vmatpush1.bf16.msra.mxu0 0
    %2631 = vmatprep.subr.bf16.mxu0 0
    %2632 = vmatpush1.bf16.msra.mxu0 0
    %2633 = vmatprep.subr.bf16.mxu0 0
    %2634 = vmatpush1.bf16.msra.mxu0 0
    %2635 = vmatprep.mubr.bf16.mxu0 0
    %2636 = vmatmul.mubr.bf16.gmra.mrb[0].mxu0 %v2601
    %v2637 = vpop.f32.mrb[0].mxu0
    %v2638 = vadd.f32 %v2586, %v2637
    %v2639 = vpop.f32.mrb[0].mxu0
    %v2640 = vpop.f32.mrb[0].mxu0
    %v2641 = vpop.f32.mrb[0].mxu0
    %2642 = vdwg.mxu0
    %v2643 = vmax.f32 %v2638, 0.0
    %s2644 = scalar_lea.vmem %s6, 384
    %v2645 = vld [vmem:[%s2644] sm:$0xf]
    %v2646 = vld [vmem:[%s2644 + $0x4] sm:$0xf]
    %v2647 = vld [vmem:[%s2644 + $0x8] sm:$0xf]
    %v2648 = vld [vmem:[%s2644 + $0xc] sm:$0xf]
    %v2649 = vld [vmem:[%s2644 + $0x10] sm:$0xf]
    %v2650 = vld [vmem:[%s2644 + $0x14] sm:$0xf]
    %v2651 = vld [vmem:[%s2644 + $0x18] sm:$0xf]
    %v2652 = vld [vmem:[%s2644 + $0x1c] sm:$0xf]
    %v2653 = vld [vmem:[%s2644 + $0x20] sm:$0xf]
    %v2654 = vld [vmem:[%s2644 + $0x24] sm:$0xf]
    %v2655 = vld [vmem:[%s2644 + $0x28] sm:$0xf]
    %v2656 = vld [vmem:[%s2644 + $0x2c] sm:$0xf]
    %v2657 = vld [vmem:[%s2644 + $0x30] sm:$0xf]
    %v2658 = vld [vmem:[%s2644 + $0x34] sm:$0xf]
    %v2659 = vld [vmem:[%s2644 + $0x38] sm:$0xf]
    %v2660 = vld [vmem:[%s2644 + $0x3c] sm:$0xf]
    %s2661 = scalar_lea.vmem %s7, 10
    %v2662 = vld [vmem:[%s2661] sm:$0x1]
    %v2663 = vpack.c.bf16 %v2643, %v2643
    %v2665 = vlaneseq
    %v2666 = vshrl.u32 %v2665, 7
    %v2667 = vsub.s32 0, %v2666
    %v2668 = vrot.slane %v2662, %v2667
    %v2686 = vunpack.c.l.b16 %v2645
    %v2687 = vunpack.c.l.b16 %v2646
    %v2688 = vunpack.c.l.b16 %v2647
    %v2689 = vunpack.c.l.b16 %v2648
    %v2690 = vunpack.c.l.b16 %v2649
    %v2691 = vunpack.c.l.b16 %v2650
    %v2692 = vunpack.c.l.b16 %v2651
    %v2693 = vunpack.c.l.b16 %v2652
    %v2694 = vunpack.c.l.b16 %v2653
    %v2695 = vunpack.c.l.b16 %v2654
    %v2696 = vunpack.c.l.b16 %v2655
    %v2697 = vunpack.c.l.b16 %v2656
    %v2698 = vunpack.c.l.b16 %v2657
    %v2699 = vunpack.c.l.b16 %v2658
    %v2700 = vunpack.c.l.b16 %v2659
    %v2701 = vunpack.c.l.b16 %v2660
    %v2702 = vpack.c.b16 %v2687, %v2686
    %v2703 = vpack.c.b16 %v2689, %v2688
    %v2704 = vpack.c.b16 %v2691, %v2690
    %v2705 = vpack.c.b16 %v2693, %v2692
    %v2706 = vpack.c.b16 %v2695, %v2694
    %v2707 = vpack.c.b16 %v2697, %v2696
    %v2708 = vpack.c.b16 %v2699, %v2698
    %v2709 = vpack.c.b16 %v2701, %v2700
    %2718 = vmatprep.subr.bf16.mxu0 0
    %2719 = vmatpush1.bf16.msra.mxu0 %v2702
    %2720 = vmatprep.subr.bf16.mxu0 0
    %2721 = vmatpush1.bf16.msra.mxu0 %v2703
    %2722 = vmatprep.subr.bf16.mxu0 0
    %2723 = vmatpush1.bf16.msra.mxu0 %v2704
    %2724 = vmatprep.subr.bf16.mxu0 0
    %2725 = vmatpush1.bf16.msra.mxu0 %v2705
    %2726 = vmatprep.subr.bf16.mxu0 0
    %2727 = vmatpush1.bf16.msra.mxu0 %v2706
    %2728 = vmatprep.subr.bf16.mxu0 0
    %2729 = vmatpush1.bf16.msra.mxu0 %v2707
    %2730 = vmatprep.subr.bf16.mxu0 0
    %2731 = vmatpush1.bf16.msra.mxu0 %v2708
    %2732 = vmatprep.subr.bf16.mxu0 0
    %2733 = vmatpush1.bf16.msra.mxu0 %v2709
    %2734 = vmatprep.subr.bf16.mxu0 0
    %2735 = vmatpush1.bf16.msra.mxu0 0
    %2736 = vmatprep.subr.bf16.mxu0 0
    %2737 = vmatpush1.bf16.msra.mxu0 0
    %2738 = vmatprep.subr.bf16.mxu0 0
    %2739 = vmatpush1.bf16.msra.mxu0 0
    %2740 = vmatprep.subr.bf16.mxu0 0
    %2741 = vmatpush1.bf16.msra.mxu0 0
    %2742 = vmatprep.subr.bf16.mxu0 0
    %2743 = vmatpush1.bf16.msra.mxu0 0
    %2744 = vmatprep.subr.bf16.mxu0 0
    %2745 = vmatpush1.bf16.msra.mxu0 0
    %2746 = vmatprep.subr.bf16.mxu0 0
    %2747 = vmatpush1.bf16.msra.mxu0 0
    %2748 = vmatprep.subr.bf16.mxu0 0
    %2749 = vmatpush1.bf16.msra.mxu0 0
    %2750 = vmatprep.mubr.bf16.mxu0 0
    %2751 = vmatmul.mubr.bf16.gmra.mrb[0].mxu0 %v2663
    %v2752 = vpop.f32.mrb[0].mxu0
    %v2753 = vadd.f32 %v2668, %v2752
    %v2754 = vpop.f32.mrb[0].mxu0
    %v2755 = vpop.f32.mrb[0].mxu0
    %v2756 = vpop.f32.mrb[0].mxu0
    %2757 = vdwg.mxu0
    %v2758 = vmax.f32 %v2753, 0.0
    %s2759 = scalar_lea.vmem %s6, 448
    %v2760 = vld [vmem:[%s2759] sm:$0xf]
    %v2761 = vld [vmem:[%s2759 + $0x4] sm:$0xf]
    %v2762 = vld [vmem:[%s2759 + $0x8] sm:$0xf]
    %v2763 = vld [vmem:[%s2759 + $0xc] sm:$0xf]
    %v2764 = vld [vmem:[%s2759 + $0x10] sm:$0xf]
    %v2765 = vld [vmem:[%s2759 + $0x14] sm:$0xf]
    %v2766 = vld [vmem:[%s2759 + $0x18] sm:$0xf]
    %v2767 = vld [vmem:[%s2759 + $0x1c] sm:$0xf]
    %v2768 = vld [vmem:[%s2759 + $0x20] sm:$0xf]
    %v2769 = vld [vmem:[%s2759 + $0x24] sm:$0xf]
    %v2770 = vld [vmem:[%s2759 + $0x28] sm:$0xf]
    %v2771 = vld [vmem:[%s2759 + $0x2c] sm:$0xf]
    %v2772 = vld [vmem:[%s2759 + $0x30] sm:$0xf]
    %v2773 = vld [vmem:[%s2759 + $0x34] sm:$0xf]
    %v2774 = vld [vmem:[%s2759 + $0x38] sm:$0xf]
    %v2775 = vld [vmem:[%s2759 + $0x3c] sm:$0xf]
    %s2776 = scalar_lea.vmem %s7, 11
    %v2777 = vld [vmem:[%s2776] sm:$0x1]
    %v2778 = vpack.c.bf16 %v2758, %v2758
    %v2780 = vlaneseq
    %v2781 = vshrl.u32 %v2780, 7
    %v2782 = vsub.s32 0, %v2781
    %v2783 = vrot.slane %v2777, %v2782
    %v2801 = vunpack.c.l.b16 %v2760
    %v2802 = vunpack.c.l.b16 %v2761
    %v2803 = vunpack.c.l.b16 %v2762
    %v2804 = vunpack.c.l.b16 %v2763
    %v2805 = vunpack.c.l.b16 %v2764
    %v2806 = vunpack.c.l.b16 %v2765
    %v2807 = vunpack.c.l.b16 %v2766
    %v2808 = vunpack.c.l.b16 %v2767
    %v2809 = vunpack.c.l.b16 %v2768
    %v2810 = vunpack.c.l.b16 %v2769
    %v2811 = vunpack.c.l.b16 %v2770
    %v2812 = vunpack.c.l.b16 %v2771
    %v2813 = vunpack.c.l.b16 %v2772
    %v2814 = vunpack.c.l.b16 %v2773
    %v2815 = vunpack.c.l.b16 %v2774
    %v2816 = vunpack.c.l.b16 %v2775
    %v2817 = vpack.c.b16 %v2802, %v2801
    %v2818 = vpack.c.b16 %v2804, %v2803
    %v2819 = vpack.c.b16 %v2806, %v2805
    %v2820 = vpack.c.b16 %v2808, %v2807
    %v2821 = vpack.c.b16 %v2810, %v2809
    %v2822 = vpack.c.b16 %v2812, %v2811
    %v2823 = vpack.c.b16 %v2814, %v2813
    %v2824 = vpack.c.b16 %v2816, %v2815
    %2833 = vmatprep.subr.bf16.mxu0 0
    %2834 = vmatpush1.bf16.msra.mxu0 %v2817
    %2835 = vmatprep.subr.bf16.mxu0 0
    %2836 = vmatpush1.bf16.msra.mxu0 %v2818
    %2837 = vmatprep.subr.bf16.mxu0 0
    %2838 = vmatpush1.bf16.msra.mxu0 %v2819
    %2839 = vmatprep.subr.bf16.mxu0 0
    %2840 = vmatpush1.bf16.msra.mxu0 %v2820
    %2841 = vmatprep.subr.bf16.mxu0 0
    %2842 = vmatpush1.bf16.msra.mxu0 %v2821
    %2843 = vmatprep.subr.bf16.mxu0 0
    %2844 = vmatpush1.bf16.msra.mxu0 %v2822
    %2845 = vmatprep.subr.bf16.mxu0 0
    %2846 = vmatpush1.bf16.msra.mxu0 %v2823
    %2847 = vmatprep.subr.bf16.mxu0 0
    %2848 = vmatpush1.bf16.msra.mxu0 %v2824
    %2849 = vmatprep.subr.bf16.mxu0 0
    %2850 = vmatpush1.bf16.msra.mxu0 0
    %2851 = vmatprep.subr.bf16.mxu0 0
    %2852 = vmatpush1.bf16.msra.mxu0 0
    %2853 = vmatprep.subr.bf16.mxu0 0
    %2854 = vmatpush1.bf16.msra.mxu0 0
    %2855 = vmatprep.subr.bf16.mxu0 0
    %2856 = vmatpush1.bf16.msra.mxu0 0
    %2857 = vmatprep.subr.bf16.mxu0 0
    %2858 = vmatpush1.bf16.msra.mxu0 0
    %2859 = vmatprep.subr.bf16.mxu0 0
    %2860 = vmatpush1.bf16.msra.mxu0 0
    %2861 = vmatprep.subr.bf16.mxu0 0
    %2862 = vmatpush1.bf16.msra.mxu0 0
    %2863 = vmatprep.subr.bf16.mxu0 0
    %2864 = vmatpush1.bf16.msra.mxu0 0
    %2865 = vmatprep.mubr.bf16.mxu0 0
    %2866 = vmatmul.mubr.bf16.gmra.mrb[0].mxu0 %v2778
    %v2867 = vpop.f32.mrb[0].mxu0
    %v2868 = vadd.f32 %v2783, %v2867
    %v2869 = vpop.f32.mrb[0].mxu0
    %v2870 = vpop.f32.mrb[0].mxu0
    %v2871 = vpop.f32.mrb[0].mxu0
    %2872 = vdwg.mxu0
    %v2873 = vmax.f32 %v2868, 0.0
    %v2874 = vpack.c.bf16 %v2873, %v2873
    %s2875 = scalar_lea.vmem %s11, 64
    %v2876 = vld [vmem:[%s2875] sm:$0xf]
    %v2877 = vld [vmem:[%s2875 + $0x4] sm:$0xf]
    %v2878 = vld [vmem:[%s2875 + $0x8] sm:$0xf]
    %v2879 = vld [vmem:[%s2875 + $0xc] sm:$0xf]
    %v2880 = vld [vmem:[%s2875 + $0x10] sm:$0xf]
    %v2881 = vld [vmem:[%s2875 + $0x14] sm:$0xf]
    %v2882 = vld [vmem:[%s2875 + $0x18] sm:$0xf]
    %v2883 = vld [vmem:[%s2875 + $0x1c] sm:$0xf]
    %v2884 = vld [vmem:[%s2875 + $0x20] sm:$0xf]
    %v2885 = vld [vmem:[%s2875 + $0x24] sm:$0xf]
    %v2886 = vld [vmem:[%s2875 + $0x28] sm:$0xf]
    %v2887 = vld [vmem:[%s2875 + $0x2c] sm:$0xf]
    %v2888 = vld [vmem:[%s2875 + $0x30] sm:$0xf]
    %v2889 = vld [vmem:[%s2875 + $0x34] sm:$0xf]
    %v2890 = vld [vmem:[%s2875 + $0x38] sm:$0xf]
    %v2891 = vld [vmem:[%s2875 + $0x3c] sm:$0xf]
    %s2892 = scalar_lea.vmem %s12, 16
    %v2893 = vld [vmem:[%s2892] sm:$0xf]
    %v2894 = vld [vmem:[%s2892 + $0x4] sm:$0xf]
    %v2895 = vld [vmem:[%s2892 + $0x8] sm:$0xf]
    %v2896 = vld [vmem:[%s2892 + $0xc] sm:$0xf]
    %v2901 = vunpack.c.l.b16 %v2893
    %v2902 = vunpack.c.l.b16 %v2894
    %v2903 = vunpack.c.l.b16 %v2895
    %v2904 = vunpack.c.l.b16 %v2896
    %v2905 = vpack.c.b16 %v2902, %v2901
    %v2906 = vpack.c.b16 %v2904, %v2903
    %2909 = vmatprep.subr.bf16.mxu0 0
    %2910 = vmatpush1.bf16.msra.mxu0 %v2905
    %2911 = vmatprep.subr.bf16.mxu0 0
    %2912 = vmatpush1.bf16.msra.mxu0 %v2906
    %2913 = vmatprep.subr.bf16.mxu0 0
    %2914 = vmatpush1.bf16.msra.mxu0 0
    %2915 = vmatprep.subr.bf16.mxu0 0
    %2916 = vmatpush1.bf16.msra.mxu0 0
    %2917 = vmatprep.subr.bf16.mxu0 0
    %2918 = vmatpush1.bf16.msra.mxu0 0
    %2919 = vmatprep.subr.bf16.mxu0 0
    %2920 = vmatpush1.bf16.msra.mxu0 0
    %2921 = vmatprep.subr.bf16.mxu0 0
    %2922 = vmatpush1.bf16.msra.mxu0 0
    %2923 = vmatprep.subr.bf16.mxu0 0
    %2924 = vmatpush1.bf16.msra.mxu0 0
    %2925 = vmatprep.subr.bf16.mxu0 0
    %2926 = vmatpush1.bf16.msra.mxu0 0
    %2927 = vmatprep.subr.bf16.mxu0 0
    %2928 = vmatpush1.bf16.msra.mxu0 0
    %2929 = vmatprep.subr.bf16.mxu0 0
    %2930 = vmatpush1.bf16.msra.mxu0 0
    %2931 = vmatprep.subr.bf16.mxu0 0
    %2932 = vmatpush1.bf16.msra.mxu0 0
    %2933 = vmatprep.subr.bf16.mxu0 0
    %2934 = vmatpush1.bf16.msra.mxu0 0
    %2935 = vmatprep.subr.bf16.mxu0 0
    %2936 = vmatpush1.bf16.msra.mxu0 0
    %2937 = vmatprep.subr.bf16.mxu0 0
    %2938 = vmatpush1.bf16.msra.mxu0 0
    %2939 = vmatprep.subr.bf16.mxu0 0
    %2940 = vmatpush1.bf16.msra.mxu0 0
    %2941 = vmatprep.mubr.bf16.mxu0 0
    %2942 = vmatmul.mubr.bf16.gmra.mrb[0].mxu0 %v2601
    %v2943 = vpop.f32.mrb[0].mxu0
    %v2944 = vadd.f32 0.0, %v2943
    %v2945 = vpop.f32.mrb[0].mxu0
    %v2946 = vpop.f32.mrb[0].mxu0
    %v2947 = vpop.f32.mrb[0].mxu0
    %2948 = vdwg.mxu0
    %v2965 = vunpack.c.l.b16 %v2876
    %v2966 = vunpack.c.l.b16 %v2877
    %v2967 = vunpack.c.l.b16 %v2878
    %v2968 = vunpack.c.l.b16 %v2879
    %v2969 = vunpack.c.l.b16 %v2880
    %v2970 = vunpack.c.l.b16 %v2881
    %v2971 = vunpack.c.l.b16 %v2882
    %v2972 = vunpack.c.l.b16 %v2883
    %v2973 = vunpack.c.l.b16 %v2884
    %v2974 = vunpack.c.l.b16 %v2885
    %v2975 = vunpack.c.l.b16 %v2886
    %v2976 = vunpack.c.l.b16 %v2887
    %v2977 = vunpack.c.l.b16 %v2888
    %v2978 = vunpack.c.l.b16 %v2889
    %v2979 = vunpack.c.l.b16 %v2890
    %v2980 = vunpack.c.l.b16 %v2891
    %v2981 = vpack.c.b16 %v2966, %v2965
    %v2982 = vpack.c.b16 %v2968, %v2967
    %v2983 = vpack.c.b16 %v2970, %v2969
    %v2984 = vpack.c.b16 %v2972, %v2971
    %v2985 = vpack.c.b16 %v2974, %v2973
    %v2986 = vpack.c.b16 %v2976, %v2975
    %v2987 = vpack.c.b16 %v2978, %v2977
    %v2988 = vpack.c.b16 %v2980, %v2979
    %2997 = vmatprep.subr.bf16.mxu0 0
    %2998 = vmatpush1.bf16.msra.mxu0 %v2981
    %2999 = vmatprep.subr.bf16.mxu0 0
    %3000 = vmatpush1.bf16.msra.mxu0 %v2982
    %3001 = vmatprep.subr.bf16.mxu0 0
    %3002 = vmatpush1.bf16.msra.mxu0 %v2983
    %3003 = vmatprep.subr.bf16.mxu0 0
    %3004 = vmatpush1.bf16.msra.mxu0 %v2984
    %3005 = vmatprep.subr.bf16.mxu0 0
    %3006 = vmatpush1.bf16.msra.mxu0 %v2985
    %3007 = vmatprep.subr.bf16.mxu0 0
    %3008 = vmatpush1.bf16.msra.mxu0 %v2986
    %3009 = vmatprep.subr.bf16.mxu0 0
    %3010 = vmatpush1.bf16.msra.mxu0 %v2987
    %3011 = vmatprep.subr.bf16.mxu0 0
    %3012 = vmatpush1.bf16.msra.mxu0 %v2988
    %3013 = vmatprep.subr.bf16.mxu0 0
    %3014 = vmatpush1.bf16.msra.mxu0 0
    %3015 = vmatprep.subr.bf16.mxu0 0
    %3016 = vmatpush1.bf16.msra.mxu0 0
    %3017 = vmatprep.subr.bf16.mxu0 0
    %3018 = vmatpush1.bf16.msra.mxu0 0
    %3019 = vmatprep.subr.bf16.mxu0 0
    %3020 = vmatpush1.bf16.msra.mxu0 0
    %3021 = vmatprep.subr.bf16.mxu0 0
    %3022 = vmatpush1.bf16.msra.mxu0 0
    %3023 = vmatprep.subr.bf16.mxu0 0
    %3024 = vmatpush1.bf16.msra.mxu0 0
    %3025 = vmatprep.subr.bf16.mxu0 0
    %3026 = vmatpush1.bf16.msra.mxu0 0
    %3027 = vmatprep.subr.bf16.mxu0 0
    %3028 = vmatpush1.bf16.msra.mxu0 0
    %3029 = vmatprep.mubr.bf16.mxu0 0
    %3030 = vmatmul.mubr.bf16.gmra.mrb[0].mxu0 %v2874
    %v3031 = vpop.f32.mrb[0].mxu0
    %v3032 = vadd.f32 %v2944, %v3031
    %v3033 = vpop.f32.mrb[0].mxu0
    %v3034 = vpop.f32.mrb[0].mxu0
    %v3035 = vpop.f32.mrb[0].mxu0
    %3036 = vdwg.mxu0
    %s3037 = scalar_lea.vmem %s13, 1
    %v3038 = vld [vmem:[%s3037] sm:$0x1]
    %v3040 = vlaneseq
    %v3041 = vshrl.u32 %v3040, 7
    %v3042 = vsub.s32 0, %v3041
    %v3043 = vrot.slane %v3038, %v3042
    %v3045 = vadd.f32 %v3032, %v3043
    %3047 = vrot.lane.b32.xlu0 %v1910, 32
    %v3048 = vpop.permute.xlu0 %3047
    %3051 = vrot.lane.b32.xlu0 %v782, 96
    %v3052 = vpop.permute.xlu0 %3051
    %3055 = vrot.lane.b32.xlu0 %v3045, 32
    %v3056 = vpop.permute.xlu0 %3055
    %v3058 = vsel %vm811, %v782, %v3048
    %vm3059 = vcmask 523264
    %v3060 = vsel %vm3059, %v3058, %v1442
    %vm3061 = vcmask 531456
    %v3062 = vsel %vm3061, %v3060, 0.0
    %v3063 = vsel %vm811, %v3052, %v3056
    %v3064 = vsel %vm3059, %v3063, %v2573
    %v3065 = vsel %vm3061, %v3064, 0.0
    %v3068 = vcombine.low %v3062, %v3065
    %v3070 = vunpack.c.l.s4 1983009808
    %v3071 = vunpack.c.0.s8 %v3070
    %v3072 = vlaneseq
    %v3073 = vshrl.u32 %v3072, 7
    %v3074 = vsub.s32 %v3071, %v3073
    %v3075 = vrot.slane %v3068, %v3074
    %3077 = vst [vmem:[#allocation2] sm:$0xf] %v3075
    // Predicated region
    $region58: #{tpu_custom_call.1} parent=1 // pred_check
      _
    $region59: #{tpu_custom_call.1} parent=1 // pred_check_branch
      %3079 = sbr.rel (0) target = $region61
    $region60: #{tpu_custom_call.1} parent=1 // pred_region
      %s3081 = ssub.s32 64, 64
      %3082 = vsyncadd [#allocation3], %s3081
      %s3084 = sshll.u32 [#allocation2], 4
      %s3085 = int_to_ptr.vmem [resolvable:$true] %s3084
      %3087 = dma.vmem_to_hbm [thread:$0]  %s3085, 64, %s14, [#allocation3]
    $region61: #{tpu_custom_call.1} parent=1 // pred_fallthru
      _
    // Predicated region
    $region62: #{tpu_custom_call.1} parent=1 // pred_check
      _
    $region63: #{tpu_custom_call.1} parent=1 // pred_check_branch
      %3089 = sbr.rel (0) target = $region65
    $region64: #{tpu_custom_call.1} parent=1 // pred_region
      %3090 = dma.done [#allocation3], 64
    $region65: #{tpu_custom_call.1} parent=1 // pred_fallthru
      _
    %3091 = vsyncpa [#allocation3], 1

</llo_original>
